<compile_context>
chip_gen: v5e
topology: v5e:2x2
jax: 0.10.0
libtpu: 0.0.40
codegen_flags: <defaults>
</compile_context>

<pallas_src>
import functools

import jax
import jax.numpy as jnp
from jax.experimental import pallas as pl
from jax.experimental.pallas import tpu as pltpu

LEAK = 0.2
EPS = 1e-5
TILE_M_MAX = 1024


def _round_up(x, m):
    return (x + m - 1) // m * m


def _rows_and_tile(m):
    """(padded row count, row-tile size) for the fused layer kernel."""
    if m <= 16:
        return 16, 16                      # too small to split
    if m <= 2 * TILE_M_MAX:
        m_pad = _round_up(m, 32)
        return m_pad, m_pad // 2           # 2 parallel steps (v7x: both TCs busy)
    m_pad = _round_up(m, TILE_M_MAX)
    return m_pad, TILE_M_MAX


def _vmem_limit_bytes():
    # Generation-aware: ~48 MiB on v7x (64 MiB physical), up to 96 MiB on v5e/v6e.
    try:
        cap = int(pltpu.get_tpu_info().vmem_capacity_bytes)
    except Exception:
        cap = 64 * 1024 * 1024
    return max(32 * 1024 * 1024, min(cap * 3 // 4, 96 * 1024 * 1024))


VMEM_LIMIT = _vmem_limit_bytes()


# ----------------------------------------------------------------------------
# Fused kernel: (patches @ weight) + bias + LeakyReLU + BN partial sums
# ----------------------------------------------------------------------------
def _fused_layer_kernel(a_ref, w_ref, b_ref, o_ref, stats_ref, *,
                        m_true, tile_m, need_mask):
    # a_ref: (tile_m, K) bf16   w_ref: (K, C) bf16   b_ref: (1, C) f32
    # o_ref: (tile_m, C) bf16/f32   stats_ref: (1, 2, C) f32  [sum ; sum-sq]
    z = jnp.dot(a_ref[...], w_ref[...], preferred_element_type=jnp.float32)
    z = z + b_ref[...]
    z = jnp.maximum(z, LEAK * z)                       # LeakyReLU(0.2)
    o_ref[...] = z.astype(o_ref.dtype)

    # Per-tile BN partials in f32; rows padded past m_true are masked out.
    if need_mask:
        row = (jax.lax.broadcasted_iota(jnp.int32, (tile_m, 1), 0)
               + pl.program_id(0) * tile_m)
        z = jnp.where(row < m_true, z, 0.0)
    s1 = jnp.sum(z, axis=0, keepdims=True)
    s2 = jnp.sum(z * z, axis=0, keepdims=True)
    stats_ref[...] = jnp.concatenate([s1, s2], axis=0)[None]


def fused_layer(a, w_bf16, bias, m_true, tile_m, out_dtype):
    """z = LeakyReLU(a @ w + bias); returns (z, per-tile [sum, sumsq] stats)."""
    m_pad, K = a.shape
    C = w_bf16.shape[1]
    num_tiles = m_pad // tile_m
    kernel = functools.partial(_fused_layer_kernel, m_true=m_true,
                               tile_m=tile_m, need_mask=(m_pad != m_true))
    z, stats = pl.pallas_call(
        kernel,
        grid=(num_tiles,),
        in_specs=[
            pl.BlockSpec((tile_m, K), lambda i: (i, 0)),
            pl.BlockSpec((K, C), lambda i: (0, 0)),
            pl.BlockSpec((1, C), lambda i: (0, 0)),
        ],
        out_specs=(
            pl.BlockSpec((tile_m, C), lambda i: (i, 0)),
            pl.BlockSpec((1, 2, C), lambda i: (i, 0, 0)),
        ),
        out_shape=(
            jax.ShapeDtypeStruct((m_pad, C), out_dtype),
            jax.ShapeDtypeStruct((num_tiles, 2, C), jnp.float32),
        ),
        compiler_params=pltpu.CompilerParams(
            dimension_semantics=("parallel",),
            vmem_limit_bytes=VMEM_LIMIT),
    )(a, w_bf16, bias.reshape(1, C).astype(jnp.float32))
    return z, stats


# ----------------------------------------------------------------------------
# BatchNorm folding helpers
# ----------------------------------------------------------------------------
def _bn_fold_from_stats(stats, count, gamma, beta, lane_groups=1):
    """Exact train-mode BN (biased variance) from per-tile partial sums."""
    s = jnp.sum(stats, axis=0)                              # (2, C)
    if lane_groups > 1:                                     # packed parity groups
        s = s.reshape(2, lane_groups, -1).sum(axis=1)
    mean = s[0] / count
    var = jnp.maximum(s[1] / count - mean * mean, 0.0)
    scale = gamma * jax.lax.rsqrt(var + EPS)
    shift = beta - mean * scale
    # TODO(synk): PyTorch running_mean/running_var momentum updates (training
    # side effect) are not modeled; normalization matches train-mode forward.
    return scale, shift


def _fold_bn_into_layer(w_packed, bias, fold, n_taps):
    """Fold the previous BN (y = z*scale + shift) into this layer's matmul."""
    if fold is None:
        return w_packed, bias, None
    scale, shift = fold
    w_eff = w_packed * jnp.tile(scale, n_taps)[:, None]
    b_eff = bias + jnp.tile(shift, n_taps) @ w_packed
    # Spatial padding of the *raw* activation must normalize to 0.
    safe = jnp.where(scale != 0, scale, 1.0)
    pad_val = jnp.where(scale != 0, -shift / safe, 0.0)
    return w_eff, b_eff, pad_val


def _pad_hw(y, pad_val):
    """Pad H and W by 1 with zeros (pad_val=None) or a per-channel constant."""
    if pad_val is None:
        return jnp.pad(y, ((0, 0), (1, 1), (1, 1), (0, 0)))
    n, h, w, c = y.shape
    full = jnp.broadcast_to(pad_val.astype(y.dtype), (n, h + 2, w + 2, c))
    return full.at[:, 1:-1, 1:-1, :].set(y)


# ----------------------------------------------------------------------------
# Layer wrappers (NHWC activations, bf16; BN of the previous layer folded in)
# ----------------------------------------------------------------------------
def conv2d_block(y, layer, fold):
    """nn.Conv2d(4,2,1) + LeakyReLU(0.2).  Returns raw z (bf16) + its BN fold."""
    n, h, w_, cin = y.shape
    hout, wout = h // 2, w_ // 2
    m = n * hout * wout
    m_pad, tile_m = _rows_and_tile(m)
    cout = layer["w_packed"].shape[1]

    w_eff, b_eff, pad_val = _fold_bn_into_layer(layer["w_packed"], layer["b"],
                                                fold, 16)
    xp = _pad_hw(y, pad_val)
    # TODO(synk): the 16-tap im2col still materializes ~4x the input activation
    # in HBM; removing it needs in-kernel windowed DMA (pl.ANY + make_async_copy).
    taps = [xp[:, kh:kh + 2 * hout:2, kw:kw + 2 * wout:2, :]
            for kh in range(4) for kw in range(4)]
    a = jnp.stack(taps, axis=3).reshape(m, 16 * cin)
    a = jnp.pad(a, ((0, m_pad - m), (0, 0)))

    z, stats = fused_layer(a, w_eff.astype(jnp.bfloat16), b_eff, m, tile_m,
                           jnp.bfloat16)
    z = z[:m].reshape(n, hout, wout, cout)
    new_fold = _bn_fold_from_stats(stats, float(m), layer["gamma"], layer["beta"])
    return z, new_fold


def conv_transpose2d_block(y, layer, fold, use_bn, out_dtype):
    """nn.ConvTranspose2d(4,2,1) + LeakyReLU(0.2).

    The four output-parity groups share one 9-tap patch matrix and are packed
    along lanes: a single (M, 9*Cin) @ (9*Cin, 4*Cout) matmul per layer.
    """
    n, h, w_, cin = y.shape
    m = n * h * w_
    m_pad, tile_m = _rows_and_tile(m)
    cout = layer["w_packed"].shape[1] // 4

    w_eff, b_eff, pad_val = _fold_bn_into_layer(layer["w_packed"],
                                                layer["b_packed"], fold, 9)
    xp = _pad_hw(y, pad_val)
    taps = [xp[:, oh:oh + h, ow:ow + w_, :] for oh in range(3) for ow in range(3)]
    a = jnp.stack(taps, axis=3).reshape(m, 9 * cin)
    a = jnp.pad(a, ((0, m_pad - m), (0, 0)))

    z, stats = fused_layer(a, w_eff.astype(jnp.bfloat16), b_eff, m, tile_m,
                           out_dtype)
    z = z[:m].reshape(n, h, w_, 2, 2, cout)             # (ph, pw) lane groups
    z = z.transpose(0, 1, 3, 2, 4, 5).reshape(n, 2 * h, 2 * w_, cout)
    if not use_bn:
        return z, None
    new_fold = _bn_fold_from_stats(stats, float(4 * m), layer["gamma"],
                                   layer["beta"], lane_groups=4)
    return z, new_fold


# ----------------------------------------------------------------------------
# Parameters: PyTorch layouts + one-time matmul repacking
# ----------------------------------------------------------------------------
def init_params(key, dim):
    down_ch = [(1, dim), (dim, 2 * dim), (2 * dim, 4 * dim), (4 * dim, 8 * dim)]
    up_ch = [(8 * dim, 4 * dim), (4 * dim, 2 * dim), (2 * dim, dim), (dim, 1)]
    params = {"down": [], "up": []}
    for cin, cout in down_ch:
        key, k1, k2 = jax.random.split(key, 3)
        params["down"].append(dict(
            w=jax.random.normal(k1, (cout, cin, 4, 4), jnp.float32) * 0.1,
            b=jax.random.normal(k2, (cout,), jnp.float32) * 0.1,
            gamma=jnp.ones((cout,), jnp.float32),
            beta=jnp.zeros((cout,), jnp.float32)))
    for cin, cout in up_ch:
        key, k1, k2 = jax.random.split(key, 3)
        params["up"].append(dict(
            w=jax.random.normal(k1, (cin, cout, 4, 4), jnp.float32) * 0.1,
            b=jax.random.normal(k2, (cout,), jnp.float32) * 0.1,
            gamma=jnp.ones((cout,), jnp.float32),
            beta=jnp.zeros((cout,), jnp.float32)))
    return params


def _pack_conv_weight(w):
    # (Cout, Cin, 4, 4) -> (16*Cin, Cout): rows tap-major (kh, kw), cin-minor.
    cout, cin = w.shape[0], w.shape[1]
    return w.transpose(2, 3, 1, 0).reshape(16 * cin, cout)


def _pack_convt_weight(w):
    # (Cin, Cout, 4, 4) -> (9*Cin, 4*Cout): shared 9-tap frame over the 1-padded
    # input; the four output-parity groups (ph, pw) are packed along lanes.
    # Tap (oh, ow) feeds output parity (ph, pw) through kernel index
    # (kh, kw) = (2*(1-oh)+1+ph, 2*(1-ow)+1+pw) when that index is in [0, 4).
    cin, cout = w.shape[0], w.shape[1]
    zeros = jnp.zeros((cin, cout), w.dtype)
    rows = []
    for oh in range(3):
        for ow in range(3):
            cols = []
            for ph in range(2):
                kh = 2 * (1 - oh) + 1 + ph
                for pw in range(2):
                    kw = 2 * (1 - ow) + 1 + pw
                    ok = (0 <= kh <= 3) and (0 <= kw <= 3)
                    cols.append(w[:, :, kh, kw] if ok else zeros)
            rows.append(jnp.concatenate(cols, axis=1))       # (Cin, 4*Cout)
    return jnp.concatenate(rows, axis=0)                      # (9*Cin, 4*Cout)


def preprocess_params(params):
    """One-time weight repacking, hoisted out of the per-forward path."""
    pre = {"down": [], "up": []}
    for p in params["down"]:
        pre["down"].append(dict(w_packed=_pack_conv_weight(p["w"]), b=p["b"],
                                gamma=p["gamma"], beta=p["beta"]))
    for p in params["up"]:
        pre["up"].append(dict(w_packed=_pack_convt_weight(p["w"]),
                              b_packed=jnp.tile(p["b"], 4),
                              gamma=p["gamma"], beta=p["beta"]))
    return pre


# ----------------------------------------------------------------------------
# FCN model
# ----------------------------------------------------------------------------
@jax.jit
def fcn_forward(pre_params, x):
    # NCHW (PyTorch) -> NHWC once; back to NCHW once at exit.
    y = x.transpose(0, 2, 3, 1).astype(jnp.bfloat16)
    fold = None
    # down_scale: 4x [Conv2d -> LeakyReLU -> BatchNorm2d] (BN folded forward)
    for layer in pre_params["down"]:
        y, fold = conv2d_block(y, layer, fold)
    # up_scale: 3x [ConvTranspose2d -> LeakyReLU -> BatchNorm2d] + 1x without BN
    n_up = len(pre_params["up"])
    for i, layer in enumerate(pre_params["up"]):
        last = i == n_up - 1
        y, fold = conv_transpose2d_block(
            y, layer, fold, use_bn=not last,
            out_dtype=jnp.float32 if last else jnp.bfloat16)
    return y.transpose(0, 3, 1, 2)


if __name__ == "__main__":
    dim = 4
    key = jax.random.PRNGKey(0)
    kx, kp = jax.random.split(key)
    x = jax.random.normal(kx, (2, 1, 16, 16), jnp.float32)   # NCHW, like PyTorch
    params = init_params(kp, dim)
    pre = preprocess_params(params)                          # one-time repacking

    out = jax.block_until_ready(fcn_forward(pre, x))
    assert out.shape == (2, 1, 16, 16), out.shape
    assert bool(jnp.all(jnp.isfinite(out)))
    print("KERNEL_OK")
</pallas_src>

<mosaic_0001>
module attributes {stable_mosaic.version = 11 : i64} {
  func.func @_fused_layer_kernel(%arg0: i32, %arg1: memref<64x16xbf16, #tpu.memory_space<vmem>>, %arg2: memref<16x4xbf16, #tpu.memory_space<vmem>>, %arg3: memref<1x4xf32, #tpu.memory_space<vmem>>, %arg4: memref<64x4xbf16, #tpu.memory_space<vmem>>, %arg5: memref<1x2x4xf32, #tpu.memory_space<vmem>>) attributes {dimension_semantics = [#tpu.dimension_semantics<parallel>], iteration_bounds = array<i64: 2>, scalar_prefetch = 0 : i64, scratch_operands = 0 : i64, tpu.core_type = #tpu.core_type<tc>, window_params = [{transform_indices = @transform_0, window_bounds = array<i64: 64, 16>}, {pipeline_mode = #tpu.pipeline_mode<synchronous>, transform_indices = @transform_1, window_bounds = array<i64: 16, 4>}, {pipeline_mode = #tpu.pipeline_mode<synchronous>, transform_indices = @transform_2, window_bounds = array<i64: 1, 4>}, {transform_indices = @transform_3, window_bounds = array<i64: 64, 4>}, {transform_indices = @transform_4, window_bounds = array<i64: 1, 2, 4>}]} {
    %c0 = arith.constant 0 : index
    %c0_0 = arith.constant 0 : index
    %0 = vector.load %arg1[%c0, %c0_0] : memref<64x16xbf16, #tpu.memory_space<vmem>>, vector<64x16xbf16>
    %c0_1 = arith.constant 0 : index
    %c0_2 = arith.constant 0 : index
    %1 = vector.load %arg2[%c0_1, %c0_2] : memref<16x4xbf16, #tpu.memory_space<vmem>>, vector<16x4xbf16>
    %cst = arith.constant dense<0.000000e+00> : vector<64x4xf32>
    %2 = tpu.matmul %0, %1, %cst {dimension_numbers = #tpu.dot_dimension_numbers<[1], [0], [0], [1], [0, 0, 1, 1], [], []>} : vector<64x16xbf16>, vector<16x4xbf16>, vector<64x4xf32> -> vector<64x4xf32>
    %c0_3 = arith.constant 0 : index
    %c0_4 = arith.constant 0 : index
    %3 = vector.load %arg3[%c0_3, %c0_4] : memref<1x4xf32, #tpu.memory_space<vmem>>, vector<1x4xf32>
    %4 = vector.broadcast %3 : vector<1x4xf32> to vector<64x4xf32>
    %5 = arith.addf %2, %4 : vector<64x4xf32>
    %cst_5 = arith.constant 2.000000e-01 : f32
    %6 = vector.broadcast %cst_5 : f32 to vector<64x4xf32>
    %7 = arith.mulf %6, %5 : vector<64x4xf32>
    %8 = arith.maximumf %5, %7 : vector<64x4xf32>
    %9 = arith.truncf %8 : vector<64x4xf32> to vector<64x4xbf16>
    %c0_6 = arith.constant 0 : index
    %c0_7 = arith.constant 0 : index
    %10 = vector.load %arg4[%c0_6, %c0_7] : memref<64x4xbf16, #tpu.memory_space<vmem>>, vector<64x4xbf16>
    tpu.vector_store %arg4[%c0_6, %c0_7], %9 {strides = array<i32>} : memref<64x4xbf16, #tpu.memory_space<vmem>>, vector<64x4xbf16>,
    %cst_8 = arith.constant dense<0.000000e+00> : vector<4xf32>
    %11 = vector.multi_reduction <add>, %8, %cst_8 [0] : vector<64x4xf32> to vector<4xf32>
    %12 = vector.shape_cast %11 : vector<4xf32> to vector<1x4xf32>
    %13 = arith.mulf %8, %8 : vector<64x4xf32>
    %cst_9 = arith.constant dense<0.000000e+00> : vector<4xf32>
    %14 = vector.multi_reduction <add>, %13, %cst_9 [0] : vector<64x4xf32> to vector<4xf32>
    %15 = vector.shape_cast %14 : vector<4xf32> to vector<1x4xf32>
    %16 = tpu.concatenate %12, %15 in 0 : vector<1x4xf32>, vector<1x4xf32> -> vector<2x4xf32>
    %17 = vector.shape_cast %16 : vector<2x4xf32> to vector<1x2x4xf32>
    %c0_10 = arith.constant 0 : index
    %c0_11 = arith.constant 0 : index
    %c0_12 = arith.constant 0 : index
    %18 = vector.load %arg5[%c0_10, %c0_11, %c0_12] : memref<1x2x4xf32, #tpu.memory_space<vmem>>, vector<1x2x4xf32>
    tpu.vector_store %arg5[%c0_10, %c0_11, %c0_12], %17 {strides = array<i32>} : memref<1x2x4xf32, #tpu.memory_space<vmem>>, vector<1x2x4xf32>,
    return
  }
  func.func @transform_0(%arg0: i32) -> (i32, i32) {
    %c0_i32 = arith.constant 0 : i32
    %c0_i32_0 = arith.constant 0 : i32
    return %arg0, %c0_i32 : i32, i32
  }
  func.func @transform_1(%arg0: i32) -> (i32, i32) {
    %c0_i32 = arith.constant 0 : i32
    %c0_i32_0 = arith.constant 0 : i32
    %c0_i32_1 = arith.constant 0 : i32
    return %c0_i32, %c0_i32_0 : i32, i32
  }
  func.func @transform_2(%arg0: i32) -> (i32, i32) {
    %c0_i32 = arith.constant 0 : i32
    %c0_i32_0 = arith.constant 0 : i32
    %c0_i32_1 = arith.constant 0 : i32
    return %c0_i32, %c0_i32_0 : i32, i32
  }
  func.func @transform_3(%arg0: i32) -> (i32, i32) {
    %c0_i32 = arith.constant 0 : i32
    %c0_i32_0 = arith.constant 0 : i32
    return %arg0, %c0_i32 : i32, i32
  }
  func.func @transform_4(%arg0: i32) -> (i32, i32, i32) {
    %c0_i32 = arith.constant 0 : i32
    %c0_i32_0 = arith.constant 0 : i32
    %c0_i32_1 = arith.constant 0 : i32
    return %arg0, %c0_i32, %c0_i32_0 : i32, i32, i32
  }
}

module attributes {stable_mosaic.version = 11 : i64} {
  func.func @_fused_layer_kernel(%arg0: i32, %arg1: memref<16x64xbf16, #tpu.memory_space<vmem>>, %arg2: memref<64x8xbf16, #tpu.memory_space<vmem>>, %arg3: memref<1x8xf32, #tpu.memory_space<vmem>>, %arg4: memref<16x8xbf16, #tpu.memory_space<vmem>>, %arg5: memref<1x2x8xf32, #tpu.memory_space<vmem>>) attributes {dimension_semantics = [#tpu.dimension_semantics<parallel>], iteration_bounds = array<i64: 2>, scalar_prefetch = 0 : i64, scratch_operands = 0 : i64, tpu.core_type = #tpu.core_type<tc>, window_params = [{transform_indices = @transform_0, window_bounds = array<i64: 16, 64>}, {pipeline_mode = #tpu.pipeline_mode<synchronous>, transform_indices = @transform_1, window_bounds = array<i64: 64, 8>}, {pipeline_mode = #tpu.pipeline_mode<synchronous>, transform_indices = @transform_2, window_bounds = array<i64: 1, 8>}, {transform_indices = @transform_3, window_bounds = array<i64: 16, 8>}, {transform_indices = @transform_4, window_bounds = array<i64: 1, 2, 8>}]} {
    %c0 = arith.constant 0 : index
    %c0_0 = arith.constant 0 : index
    %0 = vector.load %arg1[%c0, %c0_0] : memref<16x64xbf16, #tpu.memory_space<vmem>>, vector<16x64xbf16>
    %c0_1 = arith.constant 0 : index
    %c0_2 = arith.constant 0 : index
    %1 = vector.load %arg2[%c0_1, %c0_2] : memref<64x8xbf16, #tpu.memory_space<vmem>>, vector<64x8xbf16>
    %cst = arith.constant dense<0.000000e+00> : vector<16x8xf32>
    %2 = tpu.matmul %0, %1, %cst {dimension_numbers = #tpu.dot_dimension_numbers<[1], [0], [0], [1], [0, 0, 1, 1], [], []>} : vector<16x64xbf16>, vector<64x8xbf16>, vector<16x8xf32> -> vector<16x8xf32>
    %c0_3 = arith.constant 0 : index
    %c0_4 = arith.constant 0 : index
    %3 = vector.load %arg3[%c0_3, %c0_4] : memref<1x8xf32, #tpu.memory_space<vmem>>, vector<1x8xf32>
    %4 = vector.broadcast %3 : vector<1x8xf32> to vector<16x8xf32>
    %5 = arith.addf %2, %4 : vector<16x8xf32>
    %cst_5 = arith.constant 2.000000e-01 : f32
    %6 = vector.broadcast %cst_5 : f32 to vector<16x8xf32>
    %7 = arith.mulf %6, %5 : vector<16x8xf32>
    %8 = arith.maximumf %5, %7 : vector<16x8xf32>
    %9 = arith.truncf %8 : vector<16x8xf32> to vector<16x8xbf16>
    %c0_6 = arith.constant 0 : index
    %c0_7 = arith.constant 0 : index
    %10 = vector.load %arg4[%c0_6, %c0_7] : memref<16x8xbf16, #tpu.memory_space<vmem>>, vector<16x8xbf16>
    tpu.vector_store %arg4[%c0_6, %c0_7], %9 {strides = array<i32>} : memref<16x8xbf16, #tpu.memory_space<vmem>>, vector<16x8xbf16>,
    %cst_8 = arith.constant dense<0.000000e+00> : vector<8xf32>
    %11 = vector.multi_reduction <add>, %8, %cst_8 [0] : vector<16x8xf32> to vector<8xf32>
    %12 = vector.shape_cast %11 : vector<8xf32> to vector<1x8xf32>
    %13 = arith.mulf %8, %8 : vector<16x8xf32>
    %cst_9 = arith.constant dense<0.000000e+00> : vector<8xf32>
    %14 = vector.multi_reduction <add>, %13, %cst_9 [0] : vector<16x8xf32> to vector<8xf32>
    %15 = vector.shape_cast %14 : vector<8xf32> to vector<1x8xf32>
    %16 = tpu.concatenate %12, %15 in 0 : vector<1x8xf32>, vector<1x8xf32> -> vector<2x8xf32>
    %17 = vector.shape_cast %16 : vector<2x8xf32> to vector<1x2x8xf32>
    %c0_10 = arith.constant 0 : index
    %c0_11 = arith.constant 0 : index
    %c0_12 = arith.constant 0 : index
    %18 = vector.load %arg5[%c0_10, %c0_11, %c0_12] : memref<1x2x8xf32, #tpu.memory_space<vmem>>, vector<1x2x8xf32>
    tpu.vector_store %arg5[%c0_10, %c0_11, %c0_12], %17 {strides = array<i32>} : memref<1x2x8xf32, #tpu.memory_space<vmem>>, vector<1x2x8xf32>,
    return
  }
  func.func @transform_0(%arg0: i32) -> (i32, i32) {
    %c0_i32 = arith.constant 0 : i32
    %c0_i32_0 = arith.constant 0 : i32
    return %arg0, %c0_i32 : i32, i32
  }
  func.func @transform_1(%arg0: i32) -> (i32, i32) {
    %c0_i32 = arith.constant 0 : i32
    %c0_i32_0 = arith.constant 0 : i32
    %c0_i32_1 = arith.constant 0 : i32
    return %c0_i32, %c0_i32_0 : i32, i32
  }
  func.func @transform_2(%arg0: i32) -> (i32, i32) {
    %c0_i32 = arith.constant 0 : i32
    %c0_i32_0 = arith.constant 0 : i32
    %c0_i32_1 = arith.constant 0 : i32
    return %c0_i32, %c0_i32_0 : i32, i32
  }
  func.func @transform_3(%arg0: i32) -> (i32, i32) {
    %c0_i32 = arith.constant 0 : i32
    %c0_i32_0 = arith.constant 0 : i32
    return %arg0, %c0_i32 : i32, i32
  }
  func.func @transform_4(%arg0: i32) -> (i32, i32, i32) {
    %c0_i32 = arith.constant 0 : i32
    %c0_i32_0 = arith.constant 0 : i32
    %c0_i32_1 = arith.constant 0 : i32
    return %arg0, %c0_i32, %c0_i32_0 : i32, i32, i32
  }
}

module attributes {stable_mosaic.version = 11 : i64} {
  func.func @_fused_layer_kernel(%arg0: i32, %arg1: memref<16x128xbf16, #tpu.memory_space<vmem>>, %arg2: memref<128x16xbf16, #tpu.memory_space<vmem>>, %arg3: memref<1x16xf32, #tpu.memory_space<vmem>>, %arg4: memref<16x16xbf16, #tpu.memory_space<vmem>>, %arg5: memref<1x2x16xf32, #tpu.memory_space<vmem>>) attributes {dimension_semantics = [#tpu.dimension_semantics<parallel>], iteration_bounds = array<i64: 1>, scalar_prefetch = 0 : i64, scratch_operands = 0 : i64, tpu.core_type = #tpu.core_type<tc>, window_params = [{transform_indices = @transform_0, window_bounds = array<i64: 16, 128>}, {pipeline_mode = #tpu.pipeline_mode<synchronous>, transform_indices = @transform_1, window_bounds = array<i64: 128, 16>}, {pipeline_mode = #tpu.pipeline_mode<synchronous>, transform_indices = @transform_2, window_bounds = array<i64: 1, 16>}, {transform_indices = @transform_3, window_bounds = array<i64: 16, 16>}, {transform_indices = @transform_4, window_bounds = array<i64: 1, 2, 16>}]} {
    %c0 = arith.constant 0 : index
    %c0_0 = arith.constant 0 : index
    %0 = vector.load %arg1[%c0, %c0_0] : memref<16x128xbf16, #tpu.memory_space<vmem>>, vector<16x128xbf16>
    %c0_1 = arith.constant 0 : index
    %c0_2 = arith.constant 0 : index
    %1 = vector.load %arg2[%c0_1, %c0_2] : memref<128x16xbf16, #tpu.memory_space<vmem>>, vector<128x16xbf16>
    %cst = arith.constant dense<0.000000e+00> : vector<16x16xf32>
    %2 = tpu.matmul %0, %1, %cst {dimension_numbers = #tpu.dot_dimension_numbers<[1], [0], [0], [1], [0, 0, 1, 1], [], []>} : vector<16x128xbf16>, vector<128x16xbf16>, vector<16x16xf32> -> vector<16x16xf32>
    %c0_3 = arith.constant 0 : index
    %c0_4 = arith.constant 0 : index
    %3 = vector.load %arg3[%c0_3, %c0_4] : memref<1x16xf32, #tpu.memory_space<vmem>>, vector<1x16xf32>
    %4 = vector.broadcast %3 : vector<1x16xf32> to vector<16x16xf32>
    %5 = arith.addf %2, %4 : vector<16x16xf32>
    %cst_5 = arith.constant 2.000000e-01 : f32
    %6 = vector.broadcast %cst_5 : f32 to vector<16x16xf32>
    %7 = arith.mulf %6, %5 : vector<16x16xf32>
    %8 = arith.maximumf %5, %7 : vector<16x16xf32>
    %9 = arith.truncf %8 : vector<16x16xf32> to vector<16x16xbf16>
    %c0_6 = arith.constant 0 : index
    %c0_7 = arith.constant 0 : index
    %10 = vector.load %arg4[%c0_6, %c0_7] : memref<16x16xbf16, #tpu.memory_space<vmem>>, vector<16x16xbf16>
    tpu.vector_store %arg4[%c0_6, %c0_7], %9 {strides = array<i32>} : memref<16x16xbf16, #tpu.memory_space<vmem>>, vector<16x16xbf16>,
    %11 = tpu.iota {dimensions = array<i32: 0>} : vector<16x1xi32>
    %c16_i32 = arith.constant 16 : i32
    %12 = arith.muli %arg0, %c16_i32 : i32
    %13 = vector.broadcast %12 : i32 to vector<16x1xi32>
    %14 = arith.addi %11, %13 : vector<16x1xi32>
    %c8_i32 = arith.constant 8 : i32
    %15 = vector.broadcast %c8_i32 : i32 to vector<16x1xi32>
    %16 = arith.cmpi slt, %14, %15 : vector<16x1xi32>
    %cst_8 = arith.constant 0.000000e+00 : f32
    %17 = vector.shape_cast %16 : vector<16x1xi1> to vector<16x1xi1>
    %18 = vector.broadcast %17 : vector<16x1xi1> to vector<16x16xi1>
    %19 = vector.broadcast %cst_8 : f32 to vector<16x16xf32>
    %20 = arith.select %18, %8, %19 : vector<16x16xi1>, vector<16x16xf32>
    %cst_9 = arith.constant dense<0.000000e+00> : vector<16xf32>
    %21 = vector.multi_reduction <add>, %20, %cst_9 [0] : vector<16x16xf32> to vector<16xf32>
    %22 = vector.shape_cast %21 : vector<16xf32> to vector<1x16xf32>
    %23 = arith.mulf %20, %20 : vector<16x16xf32>
    %cst_10 = arith.constant dense<0.000000e+00> : vector<16xf32>
    %24 = vector.multi_reduction <add>, %23, %cst_10 [0] : vector<16x16xf32> to vector<16xf32>
    %25 = vector.shape_cast %24 : vector<16xf32> to vector<1x16xf32>
    %26 = tpu.concatenate %22, %25 in 0 : vector<1x16xf32>, vector<1x16xf32> -> vector<2x16xf32>
    %27 = vector.shape_cast %26 : vector<2x16xf32> to vector<1x2x16xf32>
    %c0_11 = arith.constant 0 : index
    %c0_12 = arith.constant 0 : index
    %c0_13 = arith.constant 0 : index
    %28 = vector.load %arg5[%c0_11, %c0_12, %c0_13] : memref<1x2x16xf32, #tpu.memory_space<vmem>>, vector<1x2x16xf32>
    tpu.vector_store %arg5[%c0_11, %c0_12, %c0_13], %27 {strides = array<i32>} : memref<1x2x16xf32, #tpu.memory_space<vmem>>, vector<1x2x16xf32>,
    return
  }
  func.func @transform_0(%arg0: i32) -> (i32, i32) {
    %c0_i32 = arith.constant 0 : i32
    %c0_i32_0 = arith.constant 0 : i32
    return %arg0, %c0_i32 : i32, i32
  }
  func.func @transform_1(%arg0: i32) -> (i32, i32) {
    %c0_i32 = arith.constant 0 : i32
    %c0_i32_0 = arith.constant 0 : i32
    %c0_i32_1 = arith.constant 0 : i32
    return %c0_i32, %c0_i32_0 : i32, i32
  }
  func.func @transform_2(%arg0: i32) -> (i32, i32) {
    %c0_i32 = arith.constant 0 : i32
    %c0_i32_0 = arith.constant 0 : i32
    %c0_i32_1 = arith.constant 0 : i32
    return %c0_i32, %c0_i32_0 : i32, i32
  }
  func.func @transform_3(%arg0: i32) -> (i32, i32) {
    %c0_i32 = arith.constant 0 : i32
    %c0_i32_0 = arith.constant 0 : i32
    return %arg0, %c0_i32 : i32, i32
  }
  func.func @transform_4(%arg0: i32) -> (i32, i32, i32) {
    %c0_i32 = arith.constant 0 : i32
    %c0_i32_0 = arith.constant 0 : i32
    %c0_i32_1 = arith.constant 0 : i32
    return %arg0, %c0_i32, %c0_i32_0 : i32, i32, i32
  }
}

module attributes {stable_mosaic.version = 11 : i64} {
  func.func @_fused_layer_kernel(%arg0: i32, %arg1: memref<16x256xbf16, #tpu.memory_space<vmem>>, %arg2: memref<256x32xbf16, #tpu.memory_space<vmem>>, %arg3: memref<1x32xf32, #tpu.memory_space<vmem>>, %arg4: memref<16x32xbf16, #tpu.memory_space<vmem>>, %arg5: memref<1x2x32xf32, #tpu.memory_space<vmem>>) attributes {dimension_semantics = [#tpu.dimension_semantics<parallel>], iteration_bounds = array<i64: 1>, scalar_prefetch = 0 : i64, scratch_operands = 0 : i64, tpu.core_type = #tpu.core_type<tc>, window_params = [{transform_indices = @transform_0, window_bounds = array<i64: 16, 256>}, {pipeline_mode = #tpu.pipeline_mode<synchronous>, transform_indices = @transform_1, window_bounds = array<i64: 256, 32>}, {pipeline_mode = #tpu.pipeline_mode<synchronous>, transform_indices = @transform_2, window_bounds = array<i64: 1, 32>}, {transform_indices = @transform_3, window_bounds = array<i64: 16, 32>}, {transform_indices = @transform_4, window_bounds = array<i64: 1, 2, 32>}]} {
    %c0 = arith.constant 0 : index
    %c0_0 = arith.constant 0 : index
    %0 = vector.load %arg1[%c0, %c0_0] : memref<16x256xbf16, #tpu.memory_space<vmem>>, vector<16x256xbf16>
    %c0_1 = arith.constant 0 : index
    %c0_2 = arith.constant 0 : index
    %1 = vector.load %arg2[%c0_1, %c0_2] : memref<256x32xbf16, #tpu.memory_space<vmem>>, vector<256x32xbf16>
    %cst = arith.constant dense<0.000000e+00> : vector<16x32xf32>
    %2 = tpu.matmul %0, %1, %cst {dimension_numbers = #tpu.dot_dimension_numbers<[1], [0], [0], [1], [0, 0, 1, 1], [], []>} : vector<16x256xbf16>, vector<256x32xbf16>, vector<16x32xf32> -> vector<16x32xf32>
    %c0_3 = arith.constant 0 : index
    %c0_4 = arith.constant 0 : index
    %3 = vector.load %arg3[%c0_3, %c0_4] : memref<1x32xf32, #tpu.memory_space<vmem>>, vector<1x32xf32>
    %4 = vector.broadcast %3 : vector<1x32xf32> to vector<16x32xf32>
    %5 = arith.addf %2, %4 : vector<16x32xf32>
    %cst_5 = arith.constant 2.000000e-01 : f32
    %6 = vector.broadcast %cst_5 : f32 to vector<16x32xf32>
    %7 = arith.mulf %6, %5 : vector<16x32xf32>
    %8 = arith.maximumf %5, %7 : vector<16x32xf32>
    %9 = arith.truncf %8 : vector<16x32xf32> to vector<16x32xbf16>
    %c0_6 = arith.constant 0 : index
    %c0_7 = arith.constant 0 : index
    %10 = vector.load %arg4[%c0_6, %c0_7] : memref<16x32xbf16, #tpu.memory_space<vmem>>, vector<16x32xbf16>
    tpu.vector_store %arg4[%c0_6, %c0_7], %9 {strides = array<i32>} : memref<16x32xbf16, #tpu.memory_space<vmem>>, vector<16x32xbf16>,
    %11 = tpu.iota {dimensions = array<i32: 0>} : vector<16x1xi32>
    %c16_i32 = arith.constant 16 : i32
    %12 = arith.muli %arg0, %c16_i32 : i32
    %13 = vector.broadcast %12 : i32 to vector<16x1xi32>
    %14 = arith.addi %11, %13 : vector<16x1xi32>
    %c2_i32 = arith.constant 2 : i32
    %15 = vector.broadcast %c2_i32 : i32 to vector<16x1xi32>
    %16 = arith.cmpi slt, %14, %15 : vector<16x1xi32>
    %cst_8 = arith.constant 0.000000e+00 : f32
    %17 = vector.shape_cast %16 : vector<16x1xi1> to vector<16x1xi1>
    %18 = vector.broadcast %17 : vector<16x1xi1> to vector<16x32xi1>
    %19 = vector.broadcast %cst_8 : f32 to vector<16x32xf32>
    %20 = arith.select %18, %8, %19 : vector<16x32xi1>, vector<16x32xf32>
    %cst_9 = arith.constant dense<0.000000e+00> : vector<32xf32>
    %21 = vector.multi_reduction <add>, %20, %cst_9 [0] : vector<16x32xf32> to vector<32xf32>
    %22 = vector.shape_cast %21 : vector<32xf32> to vector<1x32xf32>
    %23 = arith.mulf %20, %20 : vector<16x32xf32>
    %cst_10 = arith.constant dense<0.000000e+00> : vector<32xf32>
    %24 = vector.multi_reduction <add>, %23, %cst_10 [0] : vector<16x32xf32> to vector<32xf32>
    %25 = vector.shape_cast %24 : vector<32xf32> to vector<1x32xf32>
    %26 = tpu.concatenate %22, %25 in 0 : vector<1x32xf32>, vector<1x32xf32> -> vector<2x32xf32>
    %27 = vector.shape_cast %26 : vector<2x32xf32> to vector<1x2x32xf32>
    %c0_11 = arith.constant 0 : index
    %c0_12 = arith.constant 0 : index
    %c0_13 = arith.constant 0 : index
    %28 = vector.load %arg5[%c0_11, %c0_12, %c0_13] : memref<1x2x32xf32, #tpu.memory_space<vmem>>, vector<1x2x32xf32>
    tpu.vector_store %arg5[%c0_11, %c0_12, %c0_13], %27 {strides = array<i32>} : memref<1x2x32xf32, #tpu.memory_space<vmem>>, vector<1x2x32xf32>,
    return
  }
  func.func @transform_0(%arg0: i32) -> (i32, i32) {
    %c0_i32 = arith.constant 0 : i32
    %c0_i32_0 = arith.constant 0 : i32
    return %arg0, %c0_i32 : i32, i32
  }
  func.func @transform_1(%arg0: i32) -> (i32, i32) {
    %c0_i32 = arith.constant 0 : i32
    %c0_i32_0 = arith.constant 0 : i32
    %c0_i32_1 = arith.constant 0 : i32
    return %c0_i32, %c0_i32_0 : i32, i32
  }
  func.func @transform_2(%arg0: i32) -> (i32, i32) {
    %c0_i32 = arith.constant 0 : i32
    %c0_i32_0 = arith.constant 0 : i32
    %c0_i32_1 = arith.constant 0 : i32
    return %c0_i32, %c0_i32_0 : i32, i32
  }
  func.func @transform_3(%arg0: i32) -> (i32, i32) {
    %c0_i32 = arith.constant 0 : i32
    %c0_i32_0 = arith.constant 0 : i32
    return %arg0, %c0_i32 : i32, i32
  }
  func.func @transform_4(%arg0: i32) -> (i32, i32, i32) {
    %c0_i32 = arith.constant 0 : i32
    %c0_i32_0 = arith.constant 0 : i32
    %c0_i32_1 = arith.constant 0 : i32
    return %arg0, %c0_i32, %c0_i32_0 : i32, i32, i32
  }
}

module attributes {stable_mosaic.version = 11 : i64} {
  func.func @_fused_layer_kernel(%arg0: i32, %arg1: memref<16x288xbf16, #tpu.memory_space<vmem>>, %arg2: memref<288x64xbf16, #tpu.memory_space<vmem>>, %arg3: memref<1x64xf32, #tpu.memory_space<vmem>>, %arg4: memref<16x64xbf16, #tpu.memory_space<vmem>>, %arg5: memref<1x2x64xf32, #tpu.memory_space<vmem>>) attributes {dimension_semantics = [#tpu.dimension_semantics<parallel>], iteration_bounds = array<i64: 1>, scalar_prefetch = 0 : i64, scratch_operands = 0 : i64, tpu.core_type = #tpu.core_type<tc>, window_params = [{transform_indices = @transform_0, window_bounds = array<i64: 16, 288>}, {pipeline_mode = #tpu.pipeline_mode<synchronous>, transform_indices = @transform_1, window_bounds = array<i64: 288, 64>}, {pipeline_mode = #tpu.pipeline_mode<synchronous>, transform_indices = @transform_2, window_bounds = array<i64: 1, 64>}, {transform_indices = @transform_3, window_bounds = array<i64: 16, 64>}, {transform_indices = @transform_4, window_bounds = array<i64: 1, 2, 64>}]} {
    %c0 = arith.constant 0 : index
    %c0_0 = arith.constant 0 : index
    %0 = vector.load %arg1[%c0, %c0_0] : memref<16x288xbf16, #tpu.memory_space<vmem>>, vector<16x288xbf16>
    %c0_1 = arith.constant 0 : index
    %c0_2 = arith.constant 0 : index
    %1 = vector.load %arg2[%c0_1, %c0_2] : memref<288x64xbf16, #tpu.memory_space<vmem>>, vector<288x64xbf16>
    %cst = arith.constant dense<0.000000e+00> : vector<16x64xf32>
    %2 = tpu.matmul %0, %1, %cst {dimension_numbers = #tpu.dot_dimension_numbers<[1], [0], [0], [1], [0, 0, 1, 1], [], []>} : vector<16x288xbf16>, vector<288x64xbf16>, vector<16x64xf32> -> vector<16x64xf32>
    %c0_3 = arith.constant 0 : index
    %c0_4 = arith.constant 0 : index
    %3 = vector.load %arg3[%c0_3, %c0_4] : memref<1x64xf32, #tpu.memory_space<vmem>>, vector<1x64xf32>
    %4 = vector.broadcast %3 : vector<1x64xf32> to vector<16x64xf32>
    %5 = arith.addf %2, %4 : vector<16x64xf32>
    %cst_5 = arith.constant 2.000000e-01 : f32
    %6 = vector.broadcast %cst_5 : f32 to vector<16x64xf32>
    %7 = arith.mulf %6, %5 : vector<16x64xf32>
    %8 = arith.maximumf %5, %7 : vector<16x64xf32>
    %9 = arith.truncf %8 : vector<16x64xf32> to vector<16x64xbf16>
    %c0_6 = arith.constant 0 : index
    %c0_7 = arith.constant 0 : index
    %10 = vector.load %arg4[%c0_6, %c0_7] : memref<16x64xbf16, #tpu.memory_space<vmem>>, vector<16x64xbf16>
    tpu.vector_store %arg4[%c0_6, %c0_7], %9 {strides = array<i32>} : memref<16x64xbf16, #tpu.memory_space<vmem>>, vector<16x64xbf16>,
    %11 = tpu.iota {dimensions = array<i32: 0>} : vector<16x1xi32>
    %c16_i32 = arith.constant 16 : i32
    %12 = arith.muli %arg0, %c16_i32 : i32
    %13 = vector.broadcast %12 : i32 to vector<16x1xi32>
    %14 = arith.addi %11, %13 : vector<16x1xi32>
    %c2_i32 = arith.constant 2 : i32
    %15 = vector.broadcast %c2_i32 : i32 to vector<16x1xi32>
    %16 = arith.cmpi slt, %14, %15 : vector<16x1xi32>
    %cst_8 = arith.constant 0.000000e+00 : f32
    %17 = vector.shape_cast %16 : vector<16x1xi1> to vector<16x1xi1>
    %18 = vector.broadcast %17 : vector<16x1xi1> to vector<16x64xi1>
    %19 = vector.broadcast %cst_8 : f32 to vector<16x64xf32>
    %20 = arith.select %18, %8, %19 : vector<16x64xi1>, vector<16x64xf32>
    %cst_9 = arith.constant dense<0.000000e+00> : vector<64xf32>
    %21 = vector.multi_reduction <add>, %20, %cst_9 [0] : vector<16x64xf32> to vector<64xf32>
    %22 = vector.shape_cast %21 : vector<64xf32> to vector<1x64xf32>
    %23 = arith.mulf %20, %20 : vector<16x64xf32>
    %cst_10 = arith.constant dense<0.000000e+00> : vector<64xf32>
    %24 = vector.multi_reduction <add>, %23, %cst_10 [0] : vector<16x64xf32> to vector<64xf32>
    %25 = vector.shape_cast %24 : vector<64xf32> to vector<1x64xf32>
    %26 = tpu.concatenate %22, %25 in 0 : vector<1x64xf32>, vector<1x64xf32> -> vector<2x64xf32>
    %27 = vector.shape_cast %26 : vector<2x64xf32> to vector<1x2x64xf32>
    %c0_11 = arith.constant 0 : index
    %c0_12 = arith.constant 0 : index
    %c0_13 = arith.constant 0 : index
    %28 = vector.load %arg5[%c0_11, %c0_12, %c0_13] : memref<1x2x64xf32, #tpu.memory_space<vmem>>, vector<1x2x64xf32>
    tpu.vector_store %arg5[%c0_11, %c0_12, %c0_13], %27 {strides = array<i32>} : memref<1x2x64xf32, #tpu.memory_space<vmem>>, vector<1x2x64xf32>,
    return
  }
  func.func @transform_0(%arg0: i32) -> (i32, i32) {
    %c0_i32 = arith.constant 0 : i32
    %c0_i32_0 = arith.constant 0 : i32
    return %arg0, %c0_i32 : i32, i32
  }
  func.func @transform_1(%arg0: i32) -> (i32, i32) {
    %c0_i32 = arith.constant 0 : i32
    %c0_i32_0 = arith.constant 0 : i32
    %c0_i32_1 = arith.constant 0 : i32
    return %c0_i32, %c0_i32_0 : i32, i32
  }
  func.func @transform_2(%arg0: i32) -> (i32, i32) {
    %c0_i32 = arith.constant 0 : i32
    %c0_i32_0 = arith.constant 0 : i32
    %c0_i32_1 = arith.constant 0 : i32
    return %c0_i32, %c0_i32_0 : i32, i32
  }
  func.func @transform_3(%arg0: i32) -> (i32, i32) {
    %c0_i32 = arith.constant 0 : i32
    %c0_i32_0 = arith.constant 0 : i32
    return %arg0, %c0_i32 : i32, i32
  }
  func.func @transform_4(%arg0: i32) -> (i32, i32, i32) {
    %c0_i32 = arith.constant 0 : i32
    %c0_i32_0 = arith.constant 0 : i32
    %c0_i32_1 = arith.constant 0 : i32
    return %arg0, %c0_i32, %c0_i32_0 : i32, i32, i32
  }
}

module attributes {stable_mosaic.version = 11 : i64} {
  func.func @_fused_layer_kernel(%arg0: i32, %arg1: memref<16x144xbf16, #tpu.memory_space<vmem>>, %arg2: memref<144x32xbf16, #tpu.memory_space<vmem>>, %arg3: memref<1x32xf32, #tpu.memory_space<vmem>>, %arg4: memref<16x32xbf16, #tpu.memory_space<vmem>>, %arg5: memref<1x2x32xf32, #tpu.memory_space<vmem>>) attributes {dimension_semantics = [#tpu.dimension_semantics<parallel>], iteration_bounds = array<i64: 1>, scalar_prefetch = 0 : i64, scratch_operands = 0 : i64, tpu.core_type = #tpu.core_type<tc>, window_params = [{transform_indices = @transform_0, window_bounds = array<i64: 16, 144>}, {pipeline_mode = #tpu.pipeline_mode<synchronous>, transform_indices = @transform_1, window_bounds = array<i64: 144, 32>}, {pipeline_mode = #tpu.pipeline_mode<synchronous>, transform_indices = @transform_2, window_bounds = array<i64: 1, 32>}, {transform_indices = @transform_3, window_bounds = array<i64: 16, 32>}, {transform_indices = @transform_4, window_bounds = array<i64: 1, 2, 32>}]} {
    %c0 = arith.constant 0 : index
    %c0_0 = arith.constant 0 : index
    %0 = vector.load %arg1[%c0, %c0_0] : memref<16x144xbf16, #tpu.memory_space<vmem>>, vector<16x144xbf16>
    %c0_1 = arith.constant 0 : index
    %c0_2 = arith.constant 0 : index
    %1 = vector.load %arg2[%c0_1, %c0_2] : memref<144x32xbf16, #tpu.memory_space<vmem>>, vector<144x32xbf16>
    %cst = arith.constant dense<0.000000e+00> : vector<16x32xf32>
    %2 = tpu.matmul %0, %1, %cst {dimension_numbers = #tpu.dot_dimension_numbers<[1], [0], [0], [1], [0, 0, 1, 1], [], []>} : vector<16x144xbf16>, vector<144x32xbf16>, vector<16x32xf32> -> vector<16x32xf32>
    %c0_3 = arith.constant 0 : index
    %c0_4 = arith.constant 0 : index
    %3 = vector.load %arg3[%c0_3, %c0_4] : memref<1x32xf32, #tpu.memory_space<vmem>>, vector<1x32xf32>
    %4 = vector.broadcast %3 : vector<1x32xf32> to vector<16x32xf32>
    %5 = arith.addf %2, %4 : vector<16x32xf32>
    %cst_5 = arith.constant 2.000000e-01 : f32
    %6 = vector.broadcast %cst_5 : f32 to vector<16x32xf32>
    %7 = arith.mulf %6, %5 : vector<16x32xf32>
    %8 = arith.maximumf %5, %7 : vector<16x32xf32>
    %9 = arith.truncf %8 : vector<16x32xf32> to vector<16x32xbf16>
    %c0_6 = arith.constant 0 : index
    %c0_7 = arith.constant 0 : index
    %10 = vector.load %arg4[%c0_6, %c0_7] : memref<16x32xbf16, #tpu.memory_space<vmem>>, vector<16x32xbf16>
    tpu.vector_store %arg4[%c0_6, %c0_7], %9 {strides = array<i32>} : memref<16x32xbf16, #tpu.memory_space<vmem>>, vector<16x32xbf16>,
    %11 = tpu.iota {dimensions = array<i32: 0>} : vector<16x1xi32>
    %c16_i32 = arith.constant 16 : i32
    %12 = arith.muli %arg0, %c16_i32 : i32
    %13 = vector.broadcast %12 : i32 to vector<16x1xi32>
    %14 = arith.addi %11, %13 : vector<16x1xi32>
    %c8_i32 = arith.constant 8 : i32
    %15 = vector.broadcast %c8_i32 : i32 to vector<16x1xi32>
    %16 = arith.cmpi slt, %14, %15 : vector<16x1xi32>
    %cst_8 = arith.constant 0.000000e+00 : f32
    %17 = vector.shape_cast %16 : vector<16x1xi1> to vector<16x1xi1>
    %18 = vector.broadcast %17 : vector<16x1xi1> to vector<16x32xi1>
    %19 = vector.broadcast %cst_8 : f32 to vector<16x32xf32>
    %20 = arith.select %18, %8, %19 : vector<16x32xi1>, vector<16x32xf32>
    %cst_9 = arith.constant dense<0.000000e+00> : vector<32xf32>
    %21 = vector.multi_reduction <add>, %20, %cst_9 [0] : vector<16x32xf32> to vector<32xf32>
    %22 = vector.shape_cast %21 : vector<32xf32> to vector<1x32xf32>
    %23 = arith.mulf %20, %20 : vector<16x32xf32>
    %cst_10 = arith.constant dense<0.000000e+00> : vector<32xf32>
    %24 = vector.multi_reduction <add>, %23, %cst_10 [0] : vector<16x32xf32> to vector<32xf32>
    %25 = vector.shape_cast %24 : vector<32xf32> to vector<1x32xf32>
    %26 = tpu.concatenate %22, %25 in 0 : vector<1x32xf32>, vector<1x32xf32> -> vector<2x32xf32>
    %27 = vector.shape_cast %26 : vector<2x32xf32> to vector<1x2x32xf32>
    %c0_11 = arith.constant 0 : index
    %c0_12 = arith.constant 0 : index
    %c0_13 = arith.constant 0 : index
    %28 = vector.load %arg5[%c0_11, %c0_12, %c0_13] : memref<1x2x32xf32, #tpu.memory_space<vmem>>, vector<1x2x32xf32>
    tpu.vector_store %arg5[%c0_11, %c0_12, %c0_13], %27 {strides = array<i32>} : memref<1x2x32xf32, #tpu.memory_space<vmem>>, vector<1x2x32xf32>,
    return
  }
  func.func @transform_0(%arg0: i32) -> (i32, i32) {
    %c0_i32 = arith.constant 0 : i32
    %c0_i32_0 = arith.constant 0 : i32
    return %arg0, %c0_i32 : i32, i32
  }
  func.func @transform_1(%arg0: i32) -> (i32, i32) {
    %c0_i32 = arith.constant 0 : i32
    %c0_i32_0 = arith.constant 0 : i32
    %c0_i32_1 = arith.constant 0 : i32
    return %c0_i32, %c0_i32_0 : i32, i32
  }
  func.func @transform_2(%arg0: i32) -> (i32, i32) {
    %c0_i32 = arith.constant 0 : i32
    %c0_i32_0 = arith.constant 0 : i32
    %c0_i32_1 = arith.constant 0 : i32
    return %c0_i32, %c0_i32_0 : i32, i32
  }
  func.func @transform_3(%arg0: i32) -> (i32, i32) {
    %c0_i32 = arith.constant 0 : i32
    %c0_i32_0 = arith.constant 0 : i32
    return %arg0, %c0_i32 : i32, i32
  }
  func.func @transform_4(%arg0: i32) -> (i32, i32, i32) {
    %c0_i32 = arith.constant 0 : i32
    %c0_i32_0 = arith.constant 0 : i32
    %c0_i32_1 = arith.constant 0 : i32
    return %arg0, %c0_i32, %c0_i32_0 : i32, i32, i32
  }
}

module attributes {stable_mosaic.version = 11 : i64} {
  func.func @_fused_layer_kernel(%arg0: i32, %arg1: memref<16x72xbf16, #tpu.memory_space<vmem>>, %arg2: memref<72x16xbf16, #tpu.memory_space<vmem>>, %arg3: memref<1x16xf32, #tpu.memory_space<vmem>>, %arg4: memref<16x16xbf16, #tpu.memory_space<vmem>>, %arg5: memref<1x2x16xf32, #tpu.memory_space<vmem>>) attributes {dimension_semantics = [#tpu.dimension_semantics<parallel>], iteration_bounds = array<i64: 2>, scalar_prefetch = 0 : i64, scratch_operands = 0 : i64, tpu.core_type = #tpu.core_type<tc>, window_params = [{transform_indices = @transform_0, window_bounds = array<i64: 16, 72>}, {pipeline_mode = #tpu.pipeline_mode<synchronous>, transform_indices = @transform_1, window_bounds = array<i64: 72, 16>}, {pipeline_mode = #tpu.pipeline_mode<synchronous>, transform_indices = @transform_2, window_bounds = array<i64: 1, 16>}, {transform_indices = @transform_3, window_bounds = array<i64: 16, 16>}, {transform_indices = @transform_4, window_bounds = array<i64: 1, 2, 16>}]} {
    %c0 = arith.constant 0 : index
    %c0_0 = arith.constant 0 : index
    %0 = vector.load %arg1[%c0, %c0_0] : memref<16x72xbf16, #tpu.memory_space<vmem>>, vector<16x72xbf16>
    %c0_1 = arith.constant 0 : index
    %c0_2 = arith.constant 0 : index
    %1 = vector.load %arg2[%c0_1, %c0_2] : memref<72x16xbf16, #tpu.memory_space<vmem>>, vector<72x16xbf16>
    %cst = arith.constant dense<0.000000e+00> : vector<16x16xf32>
    %2 = tpu.matmul %0, %1, %cst {dimension_numbers = #tpu.dot_dimension_numbers<[1], [0], [0], [1], [0, 0, 1, 1], [], []>} : vector<16x72xbf16>, vector<72x16xbf16>, vector<16x16xf32> -> vector<16x16xf32>
    %c0_3 = arith.constant 0 : index
    %c0_4 = arith.constant 0 : index
    %3 = vector.load %arg3[%c0_3, %c0_4] : memref<1x16xf32, #tpu.memory_space<vmem>>, vector<1x16xf32>
    %4 = vector.broadcast %3 : vector<1x16xf32> to vector<16x16xf32>
    %5 = arith.addf %2, %4 : vector<16x16xf32>
    %cst_5 = arith.constant 2.000000e-01 : f32
    %6 = vector.broadcast %cst_5 : f32 to vector<16x16xf32>
    %7 = arith.mulf %6, %5 : vector<16x16xf32>
    %8 = arith.maximumf %5, %7 : vector<16x16xf32>
    %9 = arith.truncf %8 : vector<16x16xf32> to vector<16x16xbf16>
    %c0_6 = arith.constant 0 : index
    %c0_7 = arith.constant 0 : index
    %10 = vector.load %arg4[%c0_6, %c0_7] : memref<16x16xbf16, #tpu.memory_space<vmem>>, vector<16x16xbf16>
    tpu.vector_store %arg4[%c0_6, %c0_7], %9 {strides = array<i32>} : memref<16x16xbf16, #tpu.memory_space<vmem>>, vector<16x16xbf16>,
    %cst_8 = arith.constant dense<0.000000e+00> : vector<16xf32>
    %11 = vector.multi_reduction <add>, %8, %cst_8 [0] : vector<16x16xf32> to vector<16xf32>
    %12 = vector.shape_cast %11 : vector<16xf32> to vector<1x16xf32>
    %13 = arith.mulf %8, %8 : vector<16x16xf32>
    %cst_9 = arith.constant dense<0.000000e+00> : vector<16xf32>
    %14 = vector.multi_reduction <add>, %13, %cst_9 [0] : vector<16x16xf32> to vector<16xf32>
    %15 = vector.shape_cast %14 : vector<16xf32> to vector<1x16xf32>
    %16 = tpu.concatenate %12, %15 in 0 : vector<1x16xf32>, vector<1x16xf32> -> vector<2x16xf32>
    %17 = vector.shape_cast %16 : vector<2x16xf32> to vector<1x2x16xf32>
    %c0_10 = arith.constant 0 : index
    %c0_11 = arith.constant 0 : index
    %c0_12 = arith.constant 0 : index
    %18 = vector.load %arg5[%c0_10, %c0_11, %c0_12] : memref<1x2x16xf32, #tpu.memory_space<vmem>>, vector<1x2x16xf32>
    tpu.vector_store %arg5[%c0_10, %c0_11, %c0_12], %17 {strides = array<i32>} : memref<1x2x16xf32, #tpu.memory_space<vmem>>, vector<1x2x16xf32>,
    return
  }
  func.func @transform_0(%arg0: i32) -> (i32, i32) {
    %c0_i32 = arith.constant 0 : i32
    %c0_i32_0 = arith.constant 0 : i32
    return %arg0, %c0_i32 : i32, i32
  }
  func.func @transform_1(%arg0: i32) -> (i32, i32) {
    %c0_i32 = arith.constant 0 : i32
    %c0_i32_0 = arith.constant 0 : i32
    %c0_i32_1 = arith.constant 0 : i32
    return %c0_i32, %c0_i32_0 : i32, i32
  }
  func.func @transform_2(%arg0: i32) -> (i32, i32) {
    %c0_i32 = arith.constant 0 : i32
    %c0_i32_0 = arith.constant 0 : i32
    %c0_i32_1 = arith.constant 0 : i32
    return %c0_i32, %c0_i32_0 : i32, i32
  }
  func.func @transform_3(%arg0: i32) -> (i32, i32) {
    %c0_i32 = arith.constant 0 : i32
    %c0_i32_0 = arith.constant 0 : i32
    return %arg0, %c0_i32 : i32, i32
  }
  func.func @transform_4(%arg0: i32) -> (i32, i32, i32) {
    %c0_i32 = arith.constant 0 : i32
    %c0_i32_0 = arith.constant 0 : i32
    %c0_i32_1 = arith.constant 0 : i32
    return %arg0, %c0_i32, %c0_i32_0 : i32, i32, i32
  }
}

module attributes {stable_mosaic.version = 11 : i64} {
  func.func @_fused_layer_kernel(%arg0: i32, %arg1: memref<64x36xbf16, #tpu.memory_space<vmem>>, %arg2: memref<36x4xbf16, #tpu.memory_space<vmem>>, %arg3: memref<1x4xf32, #tpu.memory_space<vmem>>, %arg4: memref<64x4xf32, #tpu.memory_space<vmem>>, %arg5: memref<1x2x4xf32, #tpu.memory_space<vmem>>) attributes {dimension_semantics = [#tpu.dimension_semantics<parallel>], iteration_bounds = array<i64: 2>, scalar_prefetch = 0 : i64, scratch_operands = 0 : i64, tpu.core_type = #tpu.core_type<tc>, window_params = [{transform_indices = @transform_0, window_bounds = array<i64: 64, 36>}, {pipeline_mode = #tpu.pipeline_mode<synchronous>, transform_indices = @transform_1, window_bounds = array<i64: 36, 4>}, {pipeline_mode = #tpu.pipeline_mode<synchronous>, transform_indices = @transform_2, window_bounds = array<i64: 1, 4>}, {transform_indices = @transform_3, window_bounds = array<i64: 64, 4>}, {transform_indices = @transform_4, window_bounds = array<i64: 1, 2, 4>}]} {
    %c0 = arith.constant 0 : index
    %c0_0 = arith.constant 0 : index
    %0 = vector.load %arg1[%c0, %c0_0] : memref<64x36xbf16, #tpu.memory_space<vmem>>, vector<64x36xbf16>
    %c0_1 = arith.constant 0 : index
    %c0_2 = arith.constant 0 : index
    %1 = vector.load %arg2[%c0_1, %c0_2] : memref<36x4xbf16, #tpu.memory_space<vmem>>, vector<36x4xbf16>
    %cst = arith.constant dense<0.000000e+00> : vector<64x4xf32>
    %2 = tpu.matmul %0, %1, %cst {dimension_numbers = #tpu.dot_dimension_numbers<[1], [0], [0], [1], [0, 0, 1, 1], [], []>} : vector<64x36xbf16>, vector<36x4xbf16>, vector<64x4xf32> -> vector<64x4xf32>
    %c0_3 = arith.constant 0 : index
    %c0_4 = arith.constant 0 : index
    %3 = vector.load %arg3[%c0_3, %c0_4] : memref<1x4xf32, #tpu.memory_space<vmem>>, vector<1x4xf32>
    %4 = vector.broadcast %3 : vector<1x4xf32> to vector<64x4xf32>
    %5 = arith.addf %2, %4 : vector<64x4xf32>
    %cst_5 = arith.constant 2.000000e-01 : f32
    %6 = vector.broadcast %cst_5 : f32 to vector<64x4xf32>
    %7 = arith.mulf %6, %5 : vector<64x4xf32>
    %8 = arith.maximumf %5, %7 : vector<64x4xf32>
    %c0_6 = arith.constant 0 : index
    %c0_7 = arith.constant 0 : index
    %9 = vector.load %arg4[%c0_6, %c0_7] : memref<64x4xf32, #tpu.memory_space<vmem>>, vector<64x4xf32>
    tpu.vector_store %arg4[%c0_6, %c0_7], %8 {strides = array<i32>} : memref<64x4xf32, #tpu.memory_space<vmem>>, vector<64x4xf32>,
    %cst_8 = arith.constant dense<0.000000e+00> : vector<4xf32>
    %10 = vector.multi_reduction <add>, %8, %cst_8 [0] : vector<64x4xf32> to vector<4xf32>
    %11 = vector.shape_cast %10 : vector<4xf32> to vector<1x4xf32>
    %12 = arith.mulf %8, %8 : vector<64x4xf32>
    %cst_9 = arith.constant dense<0.000000e+00> : vector<4xf32>
    %13 = vector.multi_reduction <add>, %12, %cst_9 [0] : vector<64x4xf32> to vector<4xf32>
    %14 = vector.shape_cast %13 : vector<4xf32> to vector<1x4xf32>
    %15 = tpu.concatenate %11, %14 in 0 : vector<1x4xf32>, vector<1x4xf32> -> vector<2x4xf32>
    %16 = vector.shape_cast %15 : vector<2x4xf32> to vector<1x2x4xf32>
    %c0_10 = arith.constant 0 : index
    %c0_11 = arith.constant 0 : index
    %c0_12 = arith.constant 0 : index
    %17 = vector.load %arg5[%c0_10, %c0_11, %c0_12] : memref<1x2x4xf32, #tpu.memory_space<vmem>>, vector<1x2x4xf32>
    tpu.vector_store %arg5[%c0_10, %c0_11, %c0_12], %16 {strides = array<i32>} : memref<1x2x4xf32, #tpu.memory_space<vmem>>, vector<1x2x4xf32>,
    return
  }
  func.func @transform_0(%arg0: i32) -> (i32, i32) {
    %c0_i32 = arith.constant 0 : i32
    %c0_i32_0 = arith.constant 0 : i32
    return %arg0, %c0_i32 : i32, i32
  }
  func.func @transform_1(%arg0: i32) -> (i32, i32) {
    %c0_i32 = arith.constant 0 : i32
    %c0_i32_0 = arith.constant 0 : i32
    %c0_i32_1 = arith.constant 0 : i32
    return %c0_i32, %c0_i32_0 : i32, i32
  }
  func.func @transform_2(%arg0: i32) -> (i32, i32) {
    %c0_i32 = arith.constant 0 : i32
    %c0_i32_0 = arith.constant 0 : i32
    %c0_i32_1 = arith.constant 0 : i32
    return %c0_i32, %c0_i32_0 : i32, i32
  }
  func.func @transform_3(%arg0: i32) -> (i32, i32) {
    %c0_i32 = arith.constant 0 : i32
    %c0_i32_0 = arith.constant 0 : i32
    return %arg0, %c0_i32 : i32, i32
  }
  func.func @transform_4(%arg0: i32) -> (i32, i32, i32) {
    %c0_i32 = arith.constant 0 : i32
    %c0_i32_0 = arith.constant 0 : i32
    %c0_i32_1 = arith.constant 0 : i32
    return %arg0, %c0_i32, %c0_i32_0 : i32, i32, i32
  }
}

</mosaic_0001>

<llo_original>
// kernel: fcn_forward.8
$region0: #{fcn_forward.8}
  #allocation0 [shape = 'u32[]', space=smem, size = 0x4, offset = 0x4, fixed_abs, tag = 'smem constant byte address 0x4 - core index']
  #allocation1 [shape = 'u32[72,128]{1,0:T(1,128)}', space=vmem, size = 0x9000, scoped, tag = 'internal scratch']
  %s0 = inlined_call_operand.vmem [shape: bf16[128,16], index: 0, kind: input, shape index: {}]
  %s1 = inlined_call_operand.vmem [shape: bf16[16,4], index: 1, kind: input, shape index: {}]
  %s2 = inlined_call_operand.vmem [shape: f32[1,4], index: 2, kind: input, shape index: {}]
  %s3 = inlined_call_operand.vmem [shape: bf16[128,4], index: 3, kind: output, shape index: {0}]
  %s4 = inlined_call_operand.vmem [shape: f32[2,2,4], index: 4, kind: output, shape index: {1}]
  %5 = xla_tuple %s3, %s4
  %s6 = sld [smem:[#allocation0]]
  $region53: #{fcn_forward.8} parent=0
    _
  %s8 = ssub.s32 1, %s6
  %s9 = scalar_select 0, %s8, %s6
  loop: start=0, step=1, limit=4
  $region2: #{fcn_forward.8} parent=0 // loop_pre_header
    _
  $region3: #{fcn_forward.8} parent=0 // loop_header
    %s11 = sphi 0, %s15
    %p12 = scmp.ge.s32.totalorder %s11, 4
    %s21 = sphi 0, %s23
    %s24 = sphi 0, %s21
    %s25 = sphi 0, %s24
    %s41 = sphi 0, %s25
    %s45 = sphi 0, %s45
    %s47 = sphi 0, %s45
    %s48 = sphi 0, %s47
    %s62 = sphi 0, %s48
    %s66 = sphi 0, %s66
    %s68 = sphi 0, %s66
    %s69 = sphi 0, %s68
    %s83 = sphi 0, %s69
    %s89 = sphi 0, %s91
    %s92 = sphi 0, %s89
    %s93 = sphi 0, %s92
    %s109 = sphi 0, %s93
    %s115 = sphi 0, %s117
    %s118 = sphi 0, %s115
    %s119 = sphi 0, %s118
    %s135 = sphi 0, %s119
  $region4: #{fcn_forward.8} parent=0 // loop_header_branch
    %14 = sbr.rel (%p12) target = $region8
  $region5: #{fcn_forward.8} parent=0 // loop_body
    %s16 = ssub.s32 %s11, 1
    %s17 = ssub.s32 %s11, 2
    %s18 = sadd.s32 %s11, 1
    %s19 = ssub.s32 %s11, %s18
    %p20 = scmp.eq.s32.totalorder %s19, 0
    %s22 = sadd.s32 %s21, 1
    %s23 = scalar_select %p20, %s21, %s22
    %p26 = pneg %p20
    %p27 = scmp.eq.s32.totalorder %s11, 1
    %p28 = por %p26, %p27
    %p29 = scmp.ne.s32.totalorder %s21, %s24
    %p30 = scmp.eq.s32.totalorder %s11, 0
    %p31 = por %p29, %p30
    %p32 = scmp.ne.s32.totalorder %s21, %s24
    %p33 = scmp.eq.s32.totalorder %s16, 1
    %p34 = por %p32, %p33
    %p35 = scmp.ne.s32.totalorder %s24, %s25
    %p36 = scmp.eq.s32.totalorder %s16, 0
    %p37 = por %p35, %p36
    %p38 = scmp.ne.s32.totalorder %s24, %s25
    %p39 = scmp.eq.s32.totalorder %s17, 1
    %p40 = por %p38, %p39
    %p42 = scmp.ne.s32.totalorder %s25, %s41
    %p43 = scmp.eq.s32.totalorder %s17, 0
    %p44 = por %p42, %p43
    %s46 = sadd.s32 %s45, 1
    %p49 = scmp.eq.s32.totalorder %s11, 1
    %p50 = scmp.ne.s32.totalorder %s45, %s47
    %p51 = scmp.eq.s32.totalorder %s11, 0
    %p52 = por %p50, %p51
    %p53 = scmp.ne.s32.totalorder %s45, %s47
    %p54 = scmp.eq.s32.totalorder %s16, 1
    %p55 = por %p53, %p54
    %p56 = scmp.ne.s32.totalorder %s47, %s48
    %p57 = scmp.eq.s32.totalorder %s16, 0
    %p58 = por %p56, %p57
    %p59 = scmp.ne.s32.totalorder %s47, %s48
    %p60 = scmp.eq.s32.totalorder %s17, 1
    %p61 = por %p59, %p60
    %p63 = scmp.ne.s32.totalorder %s48, %s62
    %p64 = scmp.eq.s32.totalorder %s17, 0
    %p65 = por %p63, %p64
    %s67 = sadd.s32 %s66, 1
    %p70 = scmp.eq.s32.totalorder %s11, 1
    %p71 = scmp.ne.s32.totalorder %s66, %s68
    %p72 = scmp.eq.s32.totalorder %s11, 0
    %p73 = por %p71, %p72
    %p74 = scmp.ne.s32.totalorder %s66, %s68
    %p75 = scmp.eq.s32.totalorder %s16, 1
    %p76 = por %p74, %p75
    %p77 = scmp.ne.s32.totalorder %s68, %s69
    %p78 = scmp.eq.s32.totalorder %s16, 0
    %p79 = por %p77, %p78
    %p80 = scmp.ne.s32.totalorder %s68, %s69
    %p81 = scmp.eq.s32.totalorder %s17, 1
    %p82 = por %p80, %p81
    %p84 = scmp.ne.s32.totalorder %s69, %s83
    %p85 = scmp.eq.s32.totalorder %s17, 0
    %p86 = por %p84, %p85
    %s87 = ssub.s32 %s11, %s18
    %p88 = scmp.eq.s32.totalorder %s87, 0
    %s90 = sadd.s32 %s89, 1
    %s91 = scalar_select %p88, %s89, %s90
    %p94 = pneg %p88
    %p95 = scmp.eq.s32.totalorder %s11, 1
    %p96 = por %p94, %p95
    %p97 = scmp.ne.s32.totalorder %s89, %s92
    %p98 = scmp.eq.s32.totalorder %s11, 0
    %p99 = por %p97, %p98
    %p100 = scmp.ne.s32.totalorder %s89, %s92
    %p101 = scmp.eq.s32.totalorder %s16, 1
    %p102 = por %p100, %p101
    %p103 = scmp.ne.s32.totalorder %s92, %s93
    %p104 = scmp.eq.s32.totalorder %s16, 0
    %p105 = por %p103, %p104
    %p106 = scmp.ne.s32.totalorder %s92, %s93
    %p107 = scmp.eq.s32.totalorder %s17, 1
    %p108 = por %p106, %p107
    %p110 = scmp.ne.s32.totalorder %s93, %s109
    %p111 = scmp.eq.s32.totalorder %s17, 0
    %p112 = por %p110, %p111
    %s113 = ssub.s32 %s11, %s18
    %p114 = scmp.eq.s32.totalorder %s113, 0
    %s116 = sadd.s32 %s115, 1
    %s117 = scalar_select %p114, %s115, %s116
    %p120 = pneg %p114
    %p121 = scmp.eq.s32.totalorder %s11, 1
    %p122 = por %p120, %p121
    %p123 = scmp.ne.s32.totalorder %s115, %s118
    %p124 = scmp.eq.s32.totalorder %s11, 0
    %p125 = por %p123, %p124
    %p126 = scmp.ne.s32.totalorder %s115, %s118
    %p127 = scmp.eq.s32.totalorder %s16, 1
    %p128 = por %p126, %p127
    %p129 = scmp.ne.s32.totalorder %s118, %s119
    %p130 = scmp.eq.s32.totalorder %s16, 0
    %p131 = por %p129, %p130
    %p132 = scmp.ne.s32.totalorder %s118, %s119
    %p133 = scmp.eq.s32.totalorder %s17, 1
    %p134 = por %p132, %p133
    %p136 = scmp.ne.s32.totalorder %s119, %s135
    %p137 = scmp.eq.s32.totalorder %s17, 0
    %p138 = por %p136, %p137
    %p139 = scmp.le.s32.totalorder 1, %s11
    %p140 = scmp.lt.s32.totalorder %s11, 3
    %p141 = pnand %p139, %p140
    %p142 = pneg %p141
    // Predicated region
    $region9: #{fcn_forward.8} parent=5 // pred_check
      _
    $region10: #{fcn_forward.8} parent=5 // pred_check_branch
      %144 = sbr.rel (%p141) target = $region12
    $region11: #{fcn_forward.8} parent=5 // pred_region
      %s145 = ssub.s32 %s11, 1
      // Predicated region
      $region13: #{fcn_forward.8} parent=11 // pred_check
        %p146 = pneg %p58
      $region14: #{fcn_forward.8} parent=11 // pred_check_branch
        %148 = sbr.rel (%p146) target = $region16
      $region15: #{fcn_forward.8} parent=11 // pred_region
        _
      $region16: #{fcn_forward.8} parent=11 // pred_fallthru
        _
      // Predicated region
      $region17: #{fcn_forward.8} parent=11 // pred_check
        %p149 = pneg %p79
      $region18: #{fcn_forward.8} parent=11 // pred_check_branch
        %151 = sbr.rel (%p149) target = $region20
      $region19: #{fcn_forward.8} parent=11 // pred_region
        _
      $region20: #{fcn_forward.8} parent=11 // pred_fallthru
        _
    $region12: #{fcn_forward.8} parent=5 // pred_fallthru
      _
    %p152 = scmp.lt.s32.totalorder %s11, 2
    // Predicated region
    $region21: #{fcn_forward.8} parent=5 // pred_check
      %p153 = pneg %p152
    $region22: #{fcn_forward.8} parent=5 // pred_check_branch
      %155 = sbr.rel (%p153) target = $region24
    $region23: #{fcn_forward.8} parent=5 // pred_region
      // Predicated region
      $region25: #{fcn_forward.8} parent=23 // pred_check
        %p156 = pneg %p31
      $region26: #{fcn_forward.8} parent=23 // pred_check_branch
        %158 = sbr.rel (%p156) target = $region28
      $region27: #{fcn_forward.8} parent=23 // pred_region
        %s159 = smul.u32 8, %s11
        %p160 = scmp.lt.s32.totalorder %s159, 15
        %s161 = scalar_select %p160, %s159, 15
        %s162 = smul.addr %s161, 4
        %s163 = scalar_lea.vmem %s0, %s162
        %s164 = smul.u32 8, %s11
      $region28: #{fcn_forward.8} parent=23 // pred_fallthru
        _
    $region24: #{fcn_forward.8} parent=5 // pred_fallthru
      _
    %p165 = scmp.le.s32.totalorder 1, %s11
    %p166 = scmp.lt.s32.totalorder %s11, 3
    %p167 = pnand %p165, %p166
    %p168 = pneg %p167
    // Predicated region
    $region29: #{fcn_forward.8} parent=5 // pred_check
      _
    $region30: #{fcn_forward.8} parent=5 // pred_check_branch
      %170 = sbr.rel (%p167) target = $region32
    $region31: #{fcn_forward.8} parent=5 // pred_region
      %s171 = ssub.s32 %s11, 1
      %s172 = smul.u32 8, %s16
      %p173 = scmp.lt.s32.totalorder %s172, 15
      %s174 = scalar_select %p173, %s172, 15
      %s175 = smul.addr %s174, 4
      %s176 = scalar_lea.vmem %s0, %s175
      %p177 = pneg %p37
      %p178 = pneg %p34
      %p179 = pneg %p58
      %p180 = pneg %p55
      %p181 = pneg %p79
      %p182 = pneg %p76
      %p183 = pneg %p105
      %p184 = pneg %p102
      %s185 = smul.u32 8, %s16
      %p186 = scmp.lt.s32.totalorder %s185, 15
      %s187 = scalar_select %p186, %s185, 15
      %s188 = smul.addr %s187, 4
      %s189 = scalar_lea.vmem %s3, %s188
      %p190 = pneg %p131
      %p191 = pneg %p128
      %p192 = scmp.lt.s32.totalorder %s16, 1
      %s193 = scalar_select %p192, %s16, 1
      %s194 = smul.addr %s193, 2
      %s195 = scalar_lea.vmem %s4, %s194
      %s196 = smul.u32 8, %s16
      %p197 = scmp.lt.s32.totalorder %s196, 15
      %s198 = scalar_select %p197, %s196, 15
      %s199 = smul.addr %s198, 4
      %s200 = scalar_lea.vmem %s0, %s199
      %s201 = smul.u32 8, %s16
      %s202 = smul.u32 8, %s16
      %p203 = scmp.lt.s32.totalorder %s202, 15
      %s204 = scalar_select %p203, %s202, 15
      %s205 = smul.addr %s204, 4
      %s206 = scalar_lea.vmem %s3, %s205
      %s207 = smul.u32 8, %s16
      %p208 = scmp.lt.s32.totalorder %s16, 1
      %s209 = scalar_select %p208, %s16, 1
      %s210 = smul.addr %s209, 2
      %s211 = scalar_lea.vmem %s4, %s210
      %v213 = vld [vmem:[%s200] sm:$0xf]
      %v214 = vld [vmem:[%s200 + $0x4] sm:$0xf]
      %v215 = vld [vmem:[%s200 + $0x8] sm:$0xf]
      %v216 = vld [vmem:[%s200 + $0xc] sm:$0xf]
      %v217 = vld [vmem:[%s200 + $0x10] sm:$0xf]
      %v218 = vld [vmem:[%s200 + $0x14] sm:$0xf]
      %v219 = vld [vmem:[%s200 + $0x18] sm:$0xf]
      %v220 = vld [vmem:[%s200 + $0x1c] sm:$0xf]
      %v221 = vld [vmem:[%s1] sm:$0xf]
      %v222 = vld [vmem:[%s1 + $0x4] sm:$0xf]
      %v223 = vld [vmem:[%s2] sm:$0x1]
      %v225 = vperm.slane %v223, 0
      %v235 = vunpack.c.l.b16 %v213
      %v236 = vunpack.c.l.b16 %v214
      %v237 = vunpack.c.l.b16 %v215
      %v238 = vunpack.c.l.b16 %v216
      %v239 = vunpack.c.l.b16 %v217
      %v240 = vunpack.c.l.b16 %v218
      %v241 = vunpack.c.l.b16 %v219
      %v242 = vunpack.c.l.b16 %v220
      %v243 = vpack.c.b16 %v236, %v235
      %v244 = vpack.c.b16 %v238, %v237
      %v245 = vpack.c.b16 %v240, %v239
      %v246 = vpack.c.b16 %v242, %v241
      %v249 = vunpack.c.l.b16 %v221
      %v250 = vunpack.c.l.b16 %v222
      %v251 = vpack.c.b16 %v250, %v249
      %vm253 = vcmask 130048
      %v255 = vsel %vm253, %v243, 0
      %v258 = vsel %vm253, %v244, 0
      %v261 = vsel %vm253, %v245, 0
      %v264 = vsel %vm253, %v246, 0
      %266 = vmatpush.bf16.msra.mxu0 0
      %267 = vmatpush.bf16.msra.mxu0 0
      %268 = vmatpush.bf16.msra.mxu0 0
      %269 = vmatpush.bf16.msra.mxu0 0
      %270 = vmatpush.bf16.msra.mxu0 0
      %271 = vmatpush.bf16.msra.mxu0 0
      %272 = vmatpush.bf16.msra.mxu0 0
      %273 = vmatpush.bf16.msra.mxu0 %v251
      %274 = vmatmul.bf16.gmra.mxu0 %v255
      %v275 = vpop.f32.mrf.mxu0
      %v276 = vadd.f32 %v225, %v275
      %v277 = vpop.f32.mrf.mxu0
      %v278 = vadd.f32 %v225, %v277
      %279 = vmatmul.bf16.gmra.mxu0 %v258
      %v280 = vpop.f32.mrf.mxu0
      %v281 = vadd.f32 %v225, %v280
      %v282 = vpop.f32.mrf.mxu0
      %v283 = vadd.f32 %v225, %v282
      %284 = vmatmul.bf16.gmra.mxu0 %v261
      %v285 = vpop.f32.mrf.mxu0
      %v286 = vadd.f32 %v225, %v285
      %v287 = vpop.f32.mrf.mxu0
      %v288 = vadd.f32 %v225, %v287
      %289 = vmatmul.bf16.gmra.mxu0 %v264
      %v290 = vpop.f32.mrf.mxu0
      %v291 = vadd.f32 %v225, %v290
      %v292 = vpop.f32.mrf.mxu0
      %v293 = vadd.f32 %v225, %v292
      %294 = vdwg.mxu0
      %v295 = vmul.f32 %v276, 0.2
      %v296 = vmul.f32 %v278, 0.2
      %v297 = vmul.f32 %v281, 0.2
      %v298 = vmul.f32 %v283, 0.2
      %v299 = vmul.f32 %v286, 0.2
      %v300 = vmul.f32 %v288, 0.2
      %v301 = vmul.f32 %v291, 0.2
      %v302 = vmul.f32 %v293, 0.2
      %v303 = vmax.f32 %v276, %v295
      %v304 = vmax.f32 %v278, %v296
      %v305 = vmax.f32 %v281, %v297
      %v306 = vmax.f32 %v283, %v298
      %v307 = vmax.f32 %v286, %v299
      %v308 = vmax.f32 %v288, %v300
      %v309 = vmax.f32 %v291, %v301
      %v310 = vmax.f32 %v293, %v302
      %v311 = vpack.c.bf16 %v303, %v303
      %v312 = vpack.c.bf16 %v304, %v304
      %v313 = vpack.c.bf16 %v305, %v305
      %v314 = vpack.c.bf16 %v306, %v306
      %v315 = vpack.c.bf16 %v307, %v307
      %v316 = vpack.c.bf16 %v308, %v308
      %v317 = vpack.c.bf16 %v309, %v309
      %v318 = vpack.c.bf16 %v310, %v310
      %vm319 = vcmask 27648
      %320 = vst.msk [vmem:[%s206] sm:$0xf] %vm319, %v311
      %321 = vst.msk [vmem:[%s206 + $0x4] sm:$0xf] %vm319, %v312
      %322 = vst.msk [vmem:[%s206 + $0x8] sm:$0xf] %vm319, %v313
      %323 = vst.msk [vmem:[%s206 + $0xc] sm:$0xf] %vm319, %v314
      %324 = vst.msk [vmem:[%s206 + $0x10] sm:$0xf] %vm319, %v315
      %325 = vst.msk [vmem:[%s206 + $0x14] sm:$0xf] %vm319, %v316
      %326 = vst.msk [vmem:[%s206 + $0x18] sm:$0xf] %vm319, %v317
      %327 = vst.msk [vmem:[%s206 + $0x1c] sm:$0xf] %vm319, %v318
      %vm328 = vcmask 31744
      %v329 = vsel %vm328, %v303, 0.0
      %v330 = vsel %vm328, %v304, 0.0
      %v331 = vadd.f32 %v329, %v330
      %v332 = vsel %vm328, %v305, 0.0
      %v333 = vadd.f32 %v331, %v332
      %v334 = vsel %vm328, %v306, 0.0
      %v335 = vadd.f32 %v333, %v334
      %v336 = vsel %vm328, %v307, 0.0
      %v337 = vadd.f32 %v335, %v336
      %v338 = vsel %vm328, %v308, 0.0
      %v339 = vadd.f32 %v337, %v338
      %v340 = vsel %vm328, %v309, 0.0
      %v341 = vadd.f32 %v339, %v340
      %v342 = vsel %vm328, %v310, 0.0
      %v343 = vadd.f32 %v341, %v342
      %v344 = vrot.slane %v343, 4
      %v345 = vadd.f32 %v343, %v344
      %v346 = vrot.slane %v345, 2
      %v347 = vadd.f32 %v345, %v346
      %v348 = vrot.slane %v347, 1
      %v349 = vadd.f32 %v347, %v348
      %v350 = vmul.f32 %v303, %v303
      %v351 = vmul.f32 %v304, %v304
      %v352 = vmul.f32 %v305, %v305
      %v353 = vmul.f32 %v306, %v306
      %v354 = vmul.f32 %v307, %v307
      %v355 = vmul.f32 %v308, %v308
      %v356 = vmul.f32 %v309, %v309
      %v357 = vmul.f32 %v310, %v310
      %v358 = vsel %vm328, %v350, 0.0
      %v359 = vsel %vm328, %v351, 0.0
      %v360 = vadd.f32 %v358, %v359
      %v361 = vsel %vm328, %v352, 0.0
      %v362 = vadd.f32 %v360, %v361
      %v363 = vsel %vm328, %v353, 0.0
      %v364 = vadd.f32 %v362, %v363
      %v365 = vsel %vm328, %v354, 0.0
      %v366 = vadd.f32 %v364, %v365
      %v367 = vsel %vm328, %v355, 0.0
      %v368 = vadd.f32 %v366, %v367
      %v369 = vsel %vm328, %v356, 0.0
      %v370 = vadd.f32 %v368, %v369
      %v371 = vsel %vm328, %v357, 0.0
      %v372 = vadd.f32 %v370, %v371
      %v373 = vrot.slane %v372, 4
      %v374 = vadd.f32 %v372, %v373
      %v375 = vrot.slane %v374, 2
      %v376 = vadd.f32 %v374, %v375
      %v377 = vrot.slane %v376, 1
      %v378 = vadd.f32 %v376, %v377
      %vm379 = vcmask 1040384
      %v380 = vsel %vm379, %v349, %v378
      %vm381 = vcmask 25600
      %382 = vst.msk [vmem:[%s211] sm:$0x3] %vm381, %v380
      %s383 = smul.u32 8, %s16
      %p384 = scmp.lt.s32.totalorder %s383, 15
      %s385 = scalar_select %p384, %s383, 15
      %s386 = smul.addr %s385, 4
      %s387 = scalar_lea.vmem %s3, %s386
      %p388 = scmp.lt.s32.totalorder %s16, 1
      %s389 = scalar_select %p388, %s16, 1
      %s390 = smul.addr %s389, 2
      %s391 = scalar_lea.vmem %s4, %s390
      // Predicated region
      $region33: #{fcn_forward.8} parent=31 // pred_check
        %p392 = pneg %p102
      $region34: #{fcn_forward.8} parent=31 // pred_check_branch
        %394 = sbr.rel (%p392) target = $region36
      $region35: #{fcn_forward.8} parent=31 // pred_region
        %s395 = smul.u32 8, %s16
      $region36: #{fcn_forward.8} parent=31 // pred_fallthru
        _
      // Predicated region
      $region37: #{fcn_forward.8} parent=31 // pred_check
        %p396 = pneg %p128
      $region38: #{fcn_forward.8} parent=31 // pred_check_branch
        %398 = sbr.rel (%p396) target = $region40
      $region39: #{fcn_forward.8} parent=31 // pred_region
        _
      $region40: #{fcn_forward.8} parent=31 // pred_fallthru
        _
    $region32: #{fcn_forward.8} parent=5 // pred_fallthru
      _
    %p399 = scmp.le.s32.totalorder 2, %s11
    // Predicated region
    $region41: #{fcn_forward.8} parent=5 // pred_check
      %p400 = pneg %p399
    $region42: #{fcn_forward.8} parent=5 // pred_check_branch
      %402 = sbr.rel (%p400) target = $region44
    $region43: #{fcn_forward.8} parent=5 // pred_region
      %s403 = ssub.s32 %s11, 2
      // Predicated region
      $region45: #{fcn_forward.8} parent=43 // pred_check
        %p404 = pneg %p108
      $region46: #{fcn_forward.8} parent=43 // pred_check_branch
        %406 = sbr.rel (%p404) target = $region48
      $region47: #{fcn_forward.8} parent=43 // pred_region
        %s407 = smul.u32 8, %s17
        %p408 = scmp.lt.s32.totalorder %s407, 15
        %s409 = scalar_select %p408, %s407, 15
        %s410 = smul.addr %s409, 4
        %s411 = scalar_lea.vmem %s3, %s410
      $region48: #{fcn_forward.8} parent=43 // pred_fallthru
        _
      // Predicated region
      $region49: #{fcn_forward.8} parent=43 // pred_check
        %p412 = pneg %p134
      $region50: #{fcn_forward.8} parent=43 // pred_check_branch
        %414 = sbr.rel (%p412) target = $region52
      $region51: #{fcn_forward.8} parent=43 // pred_region
        %p415 = scmp.lt.s32.totalorder %s17, 1
        %s416 = scalar_select %p415, %s17, 1
        %s417 = smul.addr %s416, 2
        %s418 = scalar_lea.vmem %s4, %s417
      $region52: #{fcn_forward.8} parent=43 // pred_fallthru
        _
    $region44: #{fcn_forward.8} parent=5 // pred_fallthru
      _
  $region6: #{fcn_forward.8} parent=0 // loop_footer
    %s15 = sadd.s32 1, %s11
  $region7: #{fcn_forward.8} parent=0 // loop_footer_branch
    %10 = sbr.rel target = $region3
  $region8: #{fcn_forward.8} parent=0 // loop_exit
    _

// kernel: tile.73
$region0: #{tile.73}
  #allocation0 [shape = 's32[1]{0}', space=sflag, size = 0x4, scoped, tag = 'scoped memory for tile.73']
  %s0 = inlined_call_operand.vmem [shape: f32[4], index: 0, kind: input, shape index: {}]
  %s1 = inlined_call_operand.vmem [shape: f32[16,4], index: 1, kind: output, shape index: {}]
  // Predicated region
  $region2: #{tile.73} parent=0 // pred_check
    _
  $region3: #{tile.73} parent=0 // pred_check_branch
    %3 = sbr.rel (0) target = $region5
  $region4: #{tile.73} parent=0 // pred_region
    _
  $region5: #{tile.73} parent=0 // pred_fallthru
    _
  %v4 = vld [vmem:[%s0] ss:$0 sm:$0xff]
  %5 = vst [vmem:[%s1] sm:$0xff] %v4
  %s6 = scalar_lea.vmem %s1, 8
  %7 = vst [vmem:[%s6] sm:$0xff] %v4

// kernel: mul.53
$region0: #{mul.53}
  %s0 = inlined_call_operand.vmem [shape: f32[16,4], index: 0, kind: input, shape index: {}]
  %s1 = inlined_call_operand.vmem [shape: f32[64], index: 1, kind: output, shape index: {}]
  $region1: #{mul.53} parent=0
    #allocation0 [shape = 'u8[4096]{0}', space=vmem, size = 0x1000, scoped, tag = 'scoped mem for output reshape']
    %v2 = vld [vmem:[%s0] sm:$0x1]
    %vm3 = vcmask 31744
    %4 = vst.msk [vmem:[#allocation0] sm:$0x1] %vm3, %v2
    %s5 = scalar_lea.vmem %s0, 15
    %v6 = vld [vmem:[%s5] sm:$0x1]
    %7 = vrot.lane.b32.xlu0 %v6, 60
    %v8 = vpop.permute.xlu0 %7
    %vm9 = vcmask 523744
    %10 = vst.msk [vmem:[#allocation0] sm:$0x1] %vm9, %v8
    %s11 = scalar_lea.vmem %s0, 14
    %v12 = vld [vmem:[%s11] sm:$0x1]
    %13 = vrot.lane.b32.xlu0 %v12, 56
    %v14 = vpop.permute.xlu0 %13
    %vm15 = vcmask 490944
    %16 = vst.msk [vmem:[#allocation0] sm:$0x1] %vm15, %v14
    %s17 = scalar_lea.vmem %s0, 13
    %v18 = vld [vmem:[%s17] sm:$0x1]
    %19 = vrot.lane.b32.xlu0 %v18, 52
    %v20 = vpop.permute.xlu0 %19
    %vm21 = vcmask 458144
    %22 = vst.msk [vmem:[#allocation0] sm:$0x1] %vm21, %v20
    %s23 = scalar_lea.vmem %s0, 12
    %v24 = vld [vmem:[%s23] sm:$0x1]
    %25 = vrot.lane.b32.xlu0 %v24, 48
    %v26 = vpop.permute.xlu0 %25
    %vm27 = vcmask 425344
    %28 = vst.msk [vmem:[#allocation0] sm:$0x1] %vm27, %v26
    %s29 = scalar_lea.vmem %s0, 11
    %v30 = vld [vmem:[%s29] sm:$0x1]
    %31 = vrot.lane.b32.xlu0 %v30, 44
    %v32 = vpop.permute.xlu0 %31
    %vm33 = vcmask 392544
    %34 = vst.msk [vmem:[#allocation0] sm:$0x1] %vm33, %v32
    %s35 = scalar_lea.vmem %s0, 10
    %v36 = vld [vmem:[%s35] sm:$0x1]
    %37 = vrot.lane.b32.xlu0 %v36, 40
    %v38 = vpop.permute.xlu0 %37
    %vm39 = vcmask 359744
    %40 = vst.msk [vmem:[#allocation0] sm:$0x1] %vm39, %v38
    %s41 = scalar_lea.vmem %s0, 9
    %v42 = vld [vmem:[%s41] sm:$0x1]
    %43 = vrot.lane.b32.xlu0 %v42, 36
    %v44 = vpop.permute.xlu0 %43
    %vm45 = vcmask 326944
    %46 = vst.msk [vmem:[#allocation0] sm:$0x1] %vm45, %v44
    %s47 = scalar_lea.vmem %s0, 8
    %v48 = vld [vmem:[%s47] sm:$0x1]
    %49 = vrot.lane.b32.xlu0 %v48, 32
    %v50 = vpop.permute.xlu0 %49
    %vm51 = vcmask 294144
    %52 = vst.msk [vmem:[#allocation0] sm:$0x1] %vm51, %v50
    %s53 = scalar_lea.vmem %s0, 7
    %v54 = vld [vmem:[%s53] sm:$0x1]
    %55 = vrot.lane.b32.xlu0 %v54, 28
    %v56 = vpop.permute.xlu0 %55
    %vm57 = vcmask 261344
    %58 = vst.msk [vmem:[#allocation0] sm:$0x1] %vm57, %v56
    %s59 = scalar_lea.vmem %s0, 6
    %v60 = vld [vmem:[%s59] sm:$0x1]
    %61 = vrot.lane.b32.xlu0 %v60, 24
    %v62 = vpop.permute.xlu0 %61
    %vm63 = vcmask 228544
    %64 = vst.msk [vmem:[#allocation0] sm:$0x1] %vm63, %v62
    %s65 = scalar_lea.vmem %s0, 5
    %v66 = vld [vmem:[%s65] sm:$0x1]
    %67 = vrot.lane.b32.xlu0 %v66, 20
    %v68 = vpop.permute.xlu0 %67
    %vm69 = vcmask 195744
    %70 = vst.msk [vmem:[#allocation0] sm:$0x1] %vm69, %v68
    %s71 = scalar_lea.vmem %s0, 4
    %v72 = vld [vmem:[%s71] sm:$0x1]
    %73 = vrot.lane.b32.xlu0 %v72, 16
    %v74 = vpop.permute.xlu0 %73
    %vm75 = vcmask 162944
    %76 = vst.msk [vmem:[#allocation0] sm:$0x1] %vm75, %v74
    %s77 = scalar_lea.vmem %s0, 3
    %v78 = vld [vmem:[%s77] sm:$0x1]
    %79 = vrot.lane.b32.xlu0 %v78, 12
    %v80 = vpop.permute.xlu0 %79
    %vm81 = vcmask 130144
    %82 = vst.msk [vmem:[#allocation0] sm:$0x1] %vm81, %v80
    %s83 = scalar_lea.vmem %s0, 2
    %v84 = vld [vmem:[%s83] sm:$0x1]
    %85 = vrot.lane.b32.xlu0 %v84, 8
    %v86 = vpop.permute.xlu0 %85
    %vm87 = vcmask 97344
    %88 = vst.msk [vmem:[#allocation0] sm:$0x1] %vm87, %v86
    %s89 = scalar_lea.vmem %s0, 1
    %v90 = vld [vmem:[%s89] sm:$0x1]
    %91 = vrot.lane.b32.xlu0 %v90, 4
    %v92 = vpop.permute.xlu0 %91
    %vm93 = vcmask 64544
    %94 = vst.msk [vmem:[#allocation0] sm:$0x1] %vm93, %v92
    %s96 = ssub.s32 2, 1
    %v97 = vld [vmem:[#allocation0] sm:%s96]
    %s99 = ssub.s32 2, 1
    %100 = vst [vmem:[%s1] sm:%s99] %v97

// kernel: tile.83
$region0: #{tile.83}
  #allocation0 [shape = 's32[1]{0}', space=sflag, size = 0x4, scoped, tag = 'scoped memory for tile.83']
  %s0 = inlined_call_operand.vmem [shape: f32[8], index: 0, kind: input, shape index: {}]
  %s1 = inlined_call_operand.vmem [shape: f32[16,8], index: 1, kind: output, shape index: {}]
  // Predicated region
  $region2: #{tile.83} parent=0 // pred_check
    _
  $region3: #{tile.83} parent=0 // pred_check_branch
    %3 = sbr.rel (0) target = $region5
  $region4: #{tile.83} parent=0 // pred_region
    _
  $region5: #{tile.83} parent=0 // pred_fallthru
    _
  %v4 = vld [vmem:[%s0] ss:$0 sm:$0xff]
  %5 = vst [vmem:[%s1] sm:$0xff] %v4
  %s6 = scalar_lea.vmem %s1, 8
  %7 = vst [vmem:[%s6] sm:$0xff] %v4

// kernel: mul.60
$region0: #{mul.60}
  %s0 = inlined_call_operand.vmem [shape: f32[16,8], index: 0, kind: input, shape index: {}]
  %s1 = inlined_call_operand.vmem [shape: f32[128], index: 1, kind: output, shape index: {}]
  $region1: #{mul.60} parent=0
    #allocation0 [shape = 'u8[4096]{0}', space=vmem, size = 0x1000, scoped, tag = 'scoped mem for output reshape']
    %v2 = vld [vmem:[%s0] sm:$0x1]
    %vm3 = vcmask 64512
    %4 = vst.msk [vmem:[#allocation0] sm:$0x1] %vm3, %v2
    %s5 = scalar_lea.vmem %s0, 15
    %v6 = vld [vmem:[%s5] sm:$0x1]
    %7 = vrot.lane.b32.xlu0 %v6, 120
    %v8 = vpop.permute.xlu0 %7
    %vm9 = vcmask 1048512
    %10 = vst.msk [vmem:[#allocation0] sm:$0x1] %vm9, %v8
    %s11 = scalar_lea.vmem %s0, 14
    %v12 = vld [vmem:[%s11] sm:$0x1]
    %13 = vrot.lane.b32.xlu0 %v12, 112
    %v14 = vpop.permute.xlu0 %13
    %vm15 = vcmask 982912
    %16 = vst.msk [vmem:[#allocation0] sm:$0x1] %vm15, %v14
    %s17 = scalar_lea.vmem %s0, 13
    %v18 = vld [vmem:[%s17] sm:$0x1]
    %19 = vrot.lane.b32.xlu0 %v18, 104
    %v20 = vpop.permute.xlu0 %19
    %vm21 = vcmask 917312
    %22 = vst.msk [vmem:[#allocation0] sm:$0x1] %vm21, %v20
    %s23 = scalar_lea.vmem %s0, 12
    %v24 = vld [vmem:[%s23] sm:$0x1]
    %25 = vrot.lane.b32.xlu0 %v24, 96
    %v26 = vpop.permute.xlu0 %25
    %vm27 = vcmask 851712
    %28 = vst.msk [vmem:[#allocation0] sm:$0x1] %vm27, %v26
    %s29 = scalar_lea.vmem %s0, 11
    %v30 = vld [vmem:[%s29] sm:$0x1]
    %31 = vrot.lane.b32.xlu0 %v30, 88
    %v32 = vpop.permute.xlu0 %31
    %vm33 = vcmask 786112
    %34 = vst.msk [vmem:[#allocation0] sm:$0x1] %vm33, %v32
    %s35 = scalar_lea.vmem %s0, 10
    %v36 = vld [vmem:[%s35] sm:$0x1]
    %37 = vrot.lane.b32.xlu0 %v36, 80
    %v38 = vpop.permute.xlu0 %37
    %vm39 = vcmask 720512
    %40 = vst.msk [vmem:[#allocation0] sm:$0x1] %vm39, %v38
    %s41 = scalar_lea.vmem %s0, 9
    %v42 = vld [vmem:[%s41] sm:$0x1]
    %43 = vrot.lane.b32.xlu0 %v42, 72
    %v44 = vpop.permute.xlu0 %43
    %vm45 = vcmask 654912
    %46 = vst.msk [vmem:[#allocation0] sm:$0x1] %vm45, %v44
    %s47 = scalar_lea.vmem %s0, 8
    %v48 = vld [vmem:[%s47] sm:$0x1]
    %49 = vrot.lane.b32.xlu0 %v48, 64
    %v50 = vpop.permute.xlu0 %49
    %vm51 = vcmask 589312
    %52 = vst.msk [vmem:[#allocation0] sm:$0x1] %vm51, %v50
    %s53 = scalar_lea.vmem %s0, 7
    %v54 = vld [vmem:[%s53] sm:$0x1]
    %55 = vrot.lane.b32.xlu0 %v54, 56
    %v56 = vpop.permute.xlu0 %55
    %vm57 = vcmask 523712
    %58 = vst.msk [vmem:[#allocation0] sm:$0x1] %vm57, %v56
    %s59 = scalar_lea.vmem %s0, 6
    %v60 = vld [vmem:[%s59] sm:$0x1]
    %61 = vrot.lane.b32.xlu0 %v60, 48
    %v62 = vpop.permute.xlu0 %61
    %vm63 = vcmask 458112
    %64 = vst.msk [vmem:[#allocation0] sm:$0x1] %vm63, %v62
    %s65 = scalar_lea.vmem %s0, 5
    %v66 = vld [vmem:[%s65] sm:$0x1]
    %67 = vrot.lane.b32.xlu0 %v66, 40
    %v68 = vpop.permute.xlu0 %67
    %vm69 = vcmask 392512
    %70 = vst.msk [vmem:[#allocation0] sm:$0x1] %vm69, %v68
    %s71 = scalar_lea.vmem %s0, 4
    %v72 = vld [vmem:[%s71] sm:$0x1]
    %73 = vrot.lane.b32.xlu0 %v72, 32
    %v74 = vpop.permute.xlu0 %73
    %vm75 = vcmask 326912
    %76 = vst.msk [vmem:[#allocation0] sm:$0x1] %vm75, %v74
    %s77 = scalar_lea.vmem %s0, 3
    %v78 = vld [vmem:[%s77] sm:$0x1]
    %79 = vrot.lane.b32.xlu0 %v78, 24
    %v80 = vpop.permute.xlu0 %79
    %vm81 = vcmask 261312
    %82 = vst.msk [vmem:[#allocation0] sm:$0x1] %vm81, %v80
    %s83 = scalar_lea.vmem %s0, 2
    %v84 = vld [vmem:[%s83] sm:$0x1]
    %85 = vrot.lane.b32.xlu0 %v84, 16
    %v86 = vpop.permute.xlu0 %85
    %vm87 = vcmask 195712
    %88 = vst.msk [vmem:[#allocation0] sm:$0x1] %vm87, %v86
    %s89 = scalar_lea.vmem %s0, 1
    %v90 = vld [vmem:[%s89] sm:$0x1]
    %91 = vrot.lane.b32.xlu0 %v90, 8
    %v92 = vpop.permute.xlu0 %91
    %vm93 = vcmask 130112
    %94 = vst.msk [vmem:[#allocation0] sm:$0x1] %vm93, %v92
    %s96 = ssub.s32 2, 1
    %v97 = vld [vmem:[#allocation0] sm:%s96]
    %s99 = ssub.s32 2, 1
    %100 = vst [vmem:[%s1] sm:%s99] %v97

// kernel: fcn_forward.9
$region0: #{fcn_forward.9}
  #allocation0 [shape = 'u32[]', space=smem, size = 0x4, offset = 0x4, fixed_abs, tag = 'smem constant byte address 0x4 - core index']
  #allocation1 [shape = 'u32[72,128]{1,0:T(1,128)}', space=vmem, size = 0x9000, scoped, tag = 'internal scratch']
  %s0 = inlined_call_operand.vmem [shape: bf16[32,64], index: 0, kind: input, shape index: {}]
  %s1 = inlined_call_operand.vmem [shape: bf16[64,8], index: 1, kind: input, shape index: {}]
  %s2 = inlined_call_operand.vmem [shape: f32[1,8], index: 2, kind: input, shape index: {}]
  %s3 = inlined_call_operand.vmem [shape: bf16[32,8], index: 3, kind: output, shape index: {0}]
  %s4 = inlined_call_operand.vmem [shape: f32[2,2,8], index: 4, kind: output, shape index: {1}]
  %5 = xla_tuple %s3, %s4
  %s6 = sld [smem:[#allocation0]]
  $region53: #{fcn_forward.9} parent=0
    _
  %s8 = ssub.s32 1, %s6
  %s9 = scalar_select 0, %s8, %s6
  loop: start=0, step=1, limit=4
  $region2: #{fcn_forward.9} parent=0 // loop_pre_header
    _
  $region3: #{fcn_forward.9} parent=0 // loop_header
    %s11 = sphi 0, %s15
    %p12 = scmp.ge.s32.totalorder %s11, 4
    %s21 = sphi 0, %s23
    %s24 = sphi 0, %s21
    %s25 = sphi 0, %s24
    %s41 = sphi 0, %s25
    %s45 = sphi 0, %s45
    %s47 = sphi 0, %s45
    %s48 = sphi 0, %s47
    %s62 = sphi 0, %s48
    %s66 = sphi 0, %s66
    %s68 = sphi 0, %s66
    %s69 = sphi 0, %s68
    %s83 = sphi 0, %s69
    %s89 = sphi 0, %s91
    %s92 = sphi 0, %s89
    %s93 = sphi 0, %s92
    %s109 = sphi 0, %s93
    %s115 = sphi 0, %s117
    %s118 = sphi 0, %s115
    %s119 = sphi 0, %s118
    %s135 = sphi 0, %s119
  $region4: #{fcn_forward.9} parent=0 // loop_header_branch
    %14 = sbr.rel (%p12) target = $region8
  $region5: #{fcn_forward.9} parent=0 // loop_body
    %s16 = ssub.s32 %s11, 1
    %s17 = ssub.s32 %s11, 2
    %s18 = sadd.s32 %s11, 1
    %s19 = ssub.s32 %s11, %s18
    %p20 = scmp.eq.s32.totalorder %s19, 0
    %s22 = sadd.s32 %s21, 1
    %s23 = scalar_select %p20, %s21, %s22
    %p26 = pneg %p20
    %p27 = scmp.eq.s32.totalorder %s11, 1
    %p28 = por %p26, %p27
    %p29 = scmp.ne.s32.totalorder %s21, %s24
    %p30 = scmp.eq.s32.totalorder %s11, 0
    %p31 = por %p29, %p30
    %p32 = scmp.ne.s32.totalorder %s21, %s24
    %p33 = scmp.eq.s32.totalorder %s16, 1
    %p34 = por %p32, %p33
    %p35 = scmp.ne.s32.totalorder %s24, %s25
    %p36 = scmp.eq.s32.totalorder %s16, 0
    %p37 = por %p35, %p36
    %p38 = scmp.ne.s32.totalorder %s24, %s25
    %p39 = scmp.eq.s32.totalorder %s17, 1
    %p40 = por %p38, %p39
    %p42 = scmp.ne.s32.totalorder %s25, %s41
    %p43 = scmp.eq.s32.totalorder %s17, 0
    %p44 = por %p42, %p43
    %s46 = sadd.s32 %s45, 1
    %p49 = scmp.eq.s32.totalorder %s11, 1
    %p50 = scmp.ne.s32.totalorder %s45, %s47
    %p51 = scmp.eq.s32.totalorder %s11, 0
    %p52 = por %p50, %p51
    %p53 = scmp.ne.s32.totalorder %s45, %s47
    %p54 = scmp.eq.s32.totalorder %s16, 1
    %p55 = por %p53, %p54
    %p56 = scmp.ne.s32.totalorder %s47, %s48
    %p57 = scmp.eq.s32.totalorder %s16, 0
    %p58 = por %p56, %p57
    %p59 = scmp.ne.s32.totalorder %s47, %s48
    %p60 = scmp.eq.s32.totalorder %s17, 1
    %p61 = por %p59, %p60
    %p63 = scmp.ne.s32.totalorder %s48, %s62
    %p64 = scmp.eq.s32.totalorder %s17, 0
    %p65 = por %p63, %p64
    %s67 = sadd.s32 %s66, 1
    %p70 = scmp.eq.s32.totalorder %s11, 1
    %p71 = scmp.ne.s32.totalorder %s66, %s68
    %p72 = scmp.eq.s32.totalorder %s11, 0
    %p73 = por %p71, %p72
    %p74 = scmp.ne.s32.totalorder %s66, %s68
    %p75 = scmp.eq.s32.totalorder %s16, 1
    %p76 = por %p74, %p75
    %p77 = scmp.ne.s32.totalorder %s68, %s69
    %p78 = scmp.eq.s32.totalorder %s16, 0
    %p79 = por %p77, %p78
    %p80 = scmp.ne.s32.totalorder %s68, %s69
    %p81 = scmp.eq.s32.totalorder %s17, 1
    %p82 = por %p80, %p81
    %p84 = scmp.ne.s32.totalorder %s69, %s83
    %p85 = scmp.eq.s32.totalorder %s17, 0
    %p86 = por %p84, %p85
    %s87 = ssub.s32 %s11, %s18
    %p88 = scmp.eq.s32.totalorder %s87, 0
    %s90 = sadd.s32 %s89, 1
    %s91 = scalar_select %p88, %s89, %s90
    %p94 = pneg %p88
    %p95 = scmp.eq.s32.totalorder %s11, 1
    %p96 = por %p94, %p95
    %p97 = scmp.ne.s32.totalorder %s89, %s92
    %p98 = scmp.eq.s32.totalorder %s11, 0
    %p99 = por %p97, %p98
    %p100 = scmp.ne.s32.totalorder %s89, %s92
    %p101 = scmp.eq.s32.totalorder %s16, 1
    %p102 = por %p100, %p101
    %p103 = scmp.ne.s32.totalorder %s92, %s93
    %p104 = scmp.eq.s32.totalorder %s16, 0
    %p105 = por %p103, %p104
    %p106 = scmp.ne.s32.totalorder %s92, %s93
    %p107 = scmp.eq.s32.totalorder %s17, 1
    %p108 = por %p106, %p107
    %p110 = scmp.ne.s32.totalorder %s93, %s109
    %p111 = scmp.eq.s32.totalorder %s17, 0
    %p112 = por %p110, %p111
    %s113 = ssub.s32 %s11, %s18
    %p114 = scmp.eq.s32.totalorder %s113, 0
    %s116 = sadd.s32 %s115, 1
    %s117 = scalar_select %p114, %s115, %s116
    %p120 = pneg %p114
    %p121 = scmp.eq.s32.totalorder %s11, 1
    %p122 = por %p120, %p121
    %p123 = scmp.ne.s32.totalorder %s115, %s118
    %p124 = scmp.eq.s32.totalorder %s11, 0
    %p125 = por %p123, %p124
    %p126 = scmp.ne.s32.totalorder %s115, %s118
    %p127 = scmp.eq.s32.totalorder %s16, 1
    %p128 = por %p126, %p127
    %p129 = scmp.ne.s32.totalorder %s118, %s119
    %p130 = scmp.eq.s32.totalorder %s16, 0
    %p131 = por %p129, %p130
    %p132 = scmp.ne.s32.totalorder %s118, %s119
    %p133 = scmp.eq.s32.totalorder %s17, 1
    %p134 = por %p132, %p133
    %p136 = scmp.ne.s32.totalorder %s119, %s135
    %p137 = scmp.eq.s32.totalorder %s17, 0
    %p138 = por %p136, %p137
    %p139 = scmp.le.s32.totalorder 1, %s11
    %p140 = scmp.lt.s32.totalorder %s11, 3
    %p141 = pnand %p139, %p140
    %p142 = pneg %p141
    // Predicated region
    $region9: #{fcn_forward.9} parent=5 // pred_check
      _
    $region10: #{fcn_forward.9} parent=5 // pred_check_branch
      %144 = sbr.rel (%p141) target = $region12
    $region11: #{fcn_forward.9} parent=5 // pred_region
      %s145 = ssub.s32 %s11, 1
      // Predicated region
      $region13: #{fcn_forward.9} parent=11 // pred_check
        %p146 = pneg %p58
      $region14: #{fcn_forward.9} parent=11 // pred_check_branch
        %148 = sbr.rel (%p146) target = $region16
      $region15: #{fcn_forward.9} parent=11 // pred_region
        _
      $region16: #{fcn_forward.9} parent=11 // pred_fallthru
        _
      // Predicated region
      $region17: #{fcn_forward.9} parent=11 // pred_check
        %p149 = pneg %p79
      $region18: #{fcn_forward.9} parent=11 // pred_check_branch
        %151 = sbr.rel (%p149) target = $region20
      $region19: #{fcn_forward.9} parent=11 // pred_region
        _
      $region20: #{fcn_forward.9} parent=11 // pred_fallthru
        _
    $region12: #{fcn_forward.9} parent=5 // pred_fallthru
      _
    %p152 = scmp.lt.s32.totalorder %s11, 2
    // Predicated region
    $region21: #{fcn_forward.9} parent=5 // pred_check
      %p153 = pneg %p152
    $region22: #{fcn_forward.9} parent=5 // pred_check_branch
      %155 = sbr.rel (%p153) target = $region24
    $region23: #{fcn_forward.9} parent=5 // pred_region
      // Predicated region
      $region25: #{fcn_forward.9} parent=23 // pred_check
        %p156 = pneg %p31
      $region26: #{fcn_forward.9} parent=23 // pred_check_branch
        %158 = sbr.rel (%p156) target = $region28
      $region27: #{fcn_forward.9} parent=23 // pred_region
        %s159 = smul.u32 2, %s11
        %p160 = scmp.lt.s32.totalorder %s159, 3
        %s161 = scalar_select %p160, %s159, 3
        %s162 = smul.addr %s161, 4
        %s163 = scalar_lea.vmem %s0, %s162
        %s164 = smul.u32 2, %s11
      $region28: #{fcn_forward.9} parent=23 // pred_fallthru
        _
    $region24: #{fcn_forward.9} parent=5 // pred_fallthru
      _
    %p165 = scmp.le.s32.totalorder 1, %s11
    %p166 = scmp.lt.s32.totalorder %s11, 3
    %p167 = pnand %p165, %p166
    %p168 = pneg %p167
    // Predicated region
    $region29: #{fcn_forward.9} parent=5 // pred_check
      _
    $region30: #{fcn_forward.9} parent=5 // pred_check_branch
      %170 = sbr.rel (%p167) target = $region32
    $region31: #{fcn_forward.9} parent=5 // pred_region
      %s171 = ssub.s32 %s11, 1
      %s172 = smul.u32 2, %s16
      %p173 = scmp.lt.s32.totalorder %s172, 3
      %s174 = scalar_select %p173, %s172, 3
      %s175 = smul.addr %s174, 4
      %s176 = scalar_lea.vmem %s0, %s175
      %p177 = pneg %p37
      %p178 = pneg %p34
      %p179 = pneg %p58
      %p180 = pneg %p55
      %p181 = pneg %p79
      %p182 = pneg %p76
      %p183 = pneg %p105
      %p184 = pneg %p102
      %s185 = smul.u32 2, %s16
      %p186 = scmp.lt.s32.totalorder %s185, 3
      %s187 = scalar_select %p186, %s185, 3
      %s188 = smul.addr %s187, 4
      %s189 = scalar_lea.vmem %s3, %s188
      %p190 = pneg %p131
      %p191 = pneg %p128
      %p192 = scmp.lt.s32.totalorder %s16, 1
      %s193 = scalar_select %p192, %s16, 1
      %s194 = smul.addr %s193, 2
      %s195 = scalar_lea.vmem %s4, %s194
      %s196 = smul.u32 2, %s16
      %p197 = scmp.lt.s32.totalorder %s196, 3
      %s198 = scalar_select %p197, %s196, 3
      %s199 = smul.addr %s198, 4
      %s200 = scalar_lea.vmem %s0, %s199
      %s201 = smul.u32 2, %s16
      %s202 = smul.u32 2, %s16
      %p203 = scmp.lt.s32.totalorder %s202, 3
      %s204 = scalar_select %p203, %s202, 3
      %s205 = smul.addr %s204, 4
      %s206 = scalar_lea.vmem %s3, %s205
      %s207 = smul.u32 2, %s16
      %p208 = scmp.lt.s32.totalorder %s16, 1
      %s209 = scalar_select %p208, %s16, 1
      %s210 = smul.addr %s209, 2
      %s211 = scalar_lea.vmem %s4, %s210
      %v213 = vld [vmem:[%s200] sm:$0xf]
      %v214 = vld [vmem:[%s200 + $0x4] sm:$0xf]
      %v215 = vld [vmem:[%s1] sm:$0xf]
      %v216 = vld [vmem:[%s1 + $0x4] sm:$0xf]
      %v217 = vld [vmem:[%s1 + $0x8] sm:$0xf]
      %v218 = vld [vmem:[%s1 + $0xc] sm:$0xf]
      %v219 = vld [vmem:[%s1 + $0x10] sm:$0xf]
      %v220 = vld [vmem:[%s1 + $0x14] sm:$0xf]
      %v221 = vld [vmem:[%s1 + $0x18] sm:$0xf]
      %v222 = vld [vmem:[%s1 + $0x1c] sm:$0xf]
      %v223 = vld [vmem:[%s2] sm:$0x1]
      %v225 = vperm.slane %v223, 0
      %v229 = vunpack.c.l.b16 %v213
      %v230 = vunpack.c.l.b16 %v214
      %v231 = vpack.c.b16 %v230, %v229
      %v240 = vunpack.c.l.b16 %v215
      %v241 = vunpack.c.l.b16 %v216
      %v242 = vunpack.c.l.b16 %v217
      %v243 = vunpack.c.l.b16 %v218
      %v244 = vunpack.c.l.b16 %v219
      %v245 = vunpack.c.l.b16 %v220
      %v246 = vunpack.c.l.b16 %v221
      %v247 = vunpack.c.l.b16 %v222
      %v248 = vpack.c.b16 %v241, %v240
      %v249 = vpack.c.b16 %v243, %v242
      %v250 = vpack.c.b16 %v245, %v244
      %v251 = vpack.c.b16 %v247, %v246
      %vm256 = vcmask 523264
      %v258 = vsel %vm256, %v231, 0
      %260 = vmatpush.bf16.msra.mxu0 0
      %261 = vmatpush.bf16.msra.mxu0 0
      %262 = vmatpush.bf16.msra.mxu0 0
      %263 = vmatpush.bf16.msra.mxu0 0
      %264 = vmatpush.bf16.msra.mxu0 %v251
      %265 = vmatpush.bf16.msra.mxu0 %v250
      %266 = vmatpush.bf16.msra.mxu0 %v249
      %267 = vmatpush.bf16.msra.mxu0 %v248
      %268 = vmatmul.bf16.gmra.mxu0 %v258
      %v269 = vpop.f32.mrf.mxu0
      %v270 = vadd.f32 %v225, %v269
      %v271 = vpop.f32.mrf.mxu0
      %v272 = vadd.f32 %v225, %v271
      %273 = vdwg.mxu0
      %v274 = vmul.f32 %v270, 0.2
      %v275 = vmul.f32 %v272, 0.2
      %v276 = vmax.f32 %v270, %v274
      %v277 = vmax.f32 %v272, %v275
      %v278 = vpack.c.bf16 %v276, %v276
      %v279 = vpack.c.bf16 %v277, %v277
      %vm280 = vcmask 60416
      %281 = vst.msk [vmem:[%s206] sm:$0xf] %vm280, %v278
      %282 = vst.msk [vmem:[%s206 + $0x4] sm:$0xf] %vm280, %v279
      %vm283 = vcmask 64512
      %v284 = vsel %vm283, %v276, 0.0
      %v285 = vsel %vm283, %v277, 0.0
      %v286 = vadd.f32 %v284, %v285
      %v287 = vrot.slane %v286, 4
      %v288 = vadd.f32 %v286, %v287
      %v289 = vrot.slane %v288, 2
      %v290 = vadd.f32 %v288, %v289
      %v291 = vrot.slane %v290, 1
      %v292 = vadd.f32 %v290, %v291
      %v293 = vmul.f32 %v276, %v276
      %v294 = vmul.f32 %v277, %v277
      %v295 = vsel %vm283, %v293, 0.0
      %v296 = vsel %vm283, %v294, 0.0
      %v297 = vadd.f32 %v295, %v296
      %v298 = vrot.slane %v297, 4
      %v299 = vadd.f32 %v297, %v298
      %v300 = vrot.slane %v299, 2
      %v301 = vadd.f32 %v299, %v300
      %v302 = vrot.slane %v301, 1
      %v303 = vadd.f32 %v301, %v302
      %vm304 = vcmask 1040384
      %v305 = vsel %vm304, %v292, %v303
      %vm306 = vcmask 58368
      %307 = vst.msk [vmem:[%s211] sm:$0x3] %vm306, %v305
      %s308 = smul.u32 2, %s16
      %p309 = scmp.lt.s32.totalorder %s308, 3
      %s310 = scalar_select %p309, %s308, 3
      %s311 = smul.addr %s310, 4
      %s312 = scalar_lea.vmem %s3, %s311
      %p313 = scmp.lt.s32.totalorder %s16, 1
      %s314 = scalar_select %p313, %s16, 1
      %s315 = smul.addr %s314, 2
      %s316 = scalar_lea.vmem %s4, %s315
      // Predicated region
      $region33: #{fcn_forward.9} parent=31 // pred_check
        %p317 = pneg %p102
      $region34: #{fcn_forward.9} parent=31 // pred_check_branch
        %319 = sbr.rel (%p317) target = $region36
      $region35: #{fcn_forward.9} parent=31 // pred_region
        %s320 = smul.u32 2, %s16
      $region36: #{fcn_forward.9} parent=31 // pred_fallthru
        _
      // Predicated region
      $region37: #{fcn_forward.9} parent=31 // pred_check
        %p321 = pneg %p128
      $region38: #{fcn_forward.9} parent=31 // pred_check_branch
        %323 = sbr.rel (%p321) target = $region40
      $region39: #{fcn_forward.9} parent=31 // pred_region
        _
      $region40: #{fcn_forward.9} parent=31 // pred_fallthru
        _
    $region32: #{fcn_forward.9} parent=5 // pred_fallthru
      _
    %p324 = scmp.le.s32.totalorder 2, %s11
    // Predicated region
    $region41: #{fcn_forward.9} parent=5 // pred_check
      %p325 = pneg %p324
    $region42: #{fcn_forward.9} parent=5 // pred_check_branch
      %327 = sbr.rel (%p325) target = $region44
    $region43: #{fcn_forward.9} parent=5 // pred_region
      %s328 = ssub.s32 %s11, 2
      // Predicated region
      $region45: #{fcn_forward.9} parent=43 // pred_check
        %p329 = pneg %p108
      $region46: #{fcn_forward.9} parent=43 // pred_check_branch
        %331 = sbr.rel (%p329) target = $region48
      $region47: #{fcn_forward.9} parent=43 // pred_region
        %s332 = smul.u32 2, %s17
        %p333 = scmp.lt.s32.totalorder %s332, 3
        %s334 = scalar_select %p333, %s332, 3
        %s335 = smul.addr %s334, 4
        %s336 = scalar_lea.vmem %s3, %s335
      $region48: #{fcn_forward.9} parent=43 // pred_fallthru
        _
      // Predicated region
      $region49: #{fcn_forward.9} parent=43 // pred_check
        %p337 = pneg %p134
      $region50: #{fcn_forward.9} parent=43 // pred_check_branch
        %339 = sbr.rel (%p337) target = $region52
      $region51: #{fcn_forward.9} parent=43 // pred_region
        %p340 = scmp.lt.s32.totalorder %s17, 1
        %s341 = scalar_select %p340, %s17, 1
        %s342 = smul.addr %s341, 2
        %s343 = scalar_lea.vmem %s4, %s342
      $region52: #{fcn_forward.9} parent=43 // pred_fallthru
        _
    $region44: #{fcn_forward.9} parent=5 // pred_fallthru
      _
  $region6: #{fcn_forward.9} parent=0 // loop_footer
    %s15 = sadd.s32 1, %s11
  $region7: #{fcn_forward.9} parent=0 // loop_footer_branch
    %10 = sbr.rel target = $region3
  $region8: #{fcn_forward.9} parent=0 // loop_exit
    _

// kernel: tile.93
$region0: #{tile.93}
  #allocation0 [shape = 's32[1]{0}', space=sflag, size = 0x4, scoped, tag = 'scoped memory for tile.93']
  %s0 = inlined_call_operand.vmem [shape: f32[16], index: 0, kind: input, shape index: {}]
  %s1 = inlined_call_operand.vmem [shape: f32[16,16], index: 1, kind: output, shape index: {}]
  // Predicated region
  $region2: #{tile.93} parent=0 // pred_check
    _
  $region3: #{tile.93} parent=0 // pred_check_branch
    %3 = sbr.rel (0) target = $region5
  $region4: #{tile.93} parent=0 // pred_region
    _
  $region5: #{tile.93} parent=0 // pred_fallthru
    _
  %v4 = vld [vmem:[%s0] ss:$0 sm:$0xff]
  %5 = vst [vmem:[%s1] sm:$0xff] %v4
  %s6 = scalar_lea.vmem %s1, 8
  %7 = vst [vmem:[%s6] sm:$0xff] %v4

// kernel: mul.67
$region0: #{mul.67}
  %s0 = inlined_call_operand.vmem [shape: f32[16,16], index: 0, kind: input, shape index: {}]
  %s1 = inlined_call_operand.vmem [shape: f32[256], index: 1, kind: output, shape index: {}]
  $region1: #{mul.67} parent=0
    #allocation0 [shape = 'u8[4096]{0}', space=vmem, size = 0x1000, scoped, tag = 'scoped mem for output reshape']
    %s2 = smov 3
    %v3 = vld [vmem:[%s0] ss:$8 sm:%s2]
    %vm4 = vcmask 130048
    %5 = vst.msk [vmem:[#allocation0] sm:$0x3] %vm4, %v3
    %s6 = scalar_lea.vmem %s0, 7
    %s7 = smov 3
    %v8 = vld [vmem:[%s6] ss:$8 sm:%s7]
    %9 = vrot.lane.b32.xlu0 %v8, 112
    %v10 = vpop.permute.xlu0 %9
    %vm11 = vcmask 1048448
    %12 = vst.msk [vmem:[#allocation0] sm:$0x3] %vm11, %v10
    %s13 = scalar_lea.vmem %s0, 6
    %s14 = smov 3
    %v15 = vld [vmem:[%s13] ss:$8 sm:%s14]
    %16 = vrot.lane.b32.xlu0 %v15, 96
    %v17 = vpop.permute.xlu0 %16
    %vm18 = vcmask 917248
    %19 = vst.msk [vmem:[#allocation0] sm:$0x3] %vm18, %v17
    %s20 = scalar_lea.vmem %s0, 5
    %s21 = smov 3
    %v22 = vld [vmem:[%s20] ss:$8 sm:%s21]
    %23 = vrot.lane.b32.xlu0 %v22, 80
    %v24 = vpop.permute.xlu0 %23
    %vm25 = vcmask 786048
    %26 = vst.msk [vmem:[#allocation0] sm:$0x3] %vm25, %v24
    %s27 = scalar_lea.vmem %s0, 4
    %s28 = smov 3
    %v29 = vld [vmem:[%s27] ss:$8 sm:%s28]
    %30 = vrot.lane.b32.xlu0 %v29, 64
    %v31 = vpop.permute.xlu0 %30
    %vm32 = vcmask 654848
    %33 = vst.msk [vmem:[#allocation0] sm:$0x3] %vm32, %v31
    %s34 = scalar_lea.vmem %s0, 3
    %s35 = smov 3
    %v36 = vld [vmem:[%s34] ss:$8 sm:%s35]
    %37 = vrot.lane.b32.xlu0 %v36, 48
    %v38 = vpop.permute.xlu0 %37
    %vm39 = vcmask 523648
    %40 = vst.msk [vmem:[#allocation0] sm:$0x3] %vm39, %v38
    %s41 = scalar_lea.vmem %s0, 2
    %s42 = smov 3
    %v43 = vld [vmem:[%s41] ss:$8 sm:%s42]
    %44 = vrot.lane.b32.xlu0 %v43, 32
    %v45 = vpop.permute.xlu0 %44
    %vm46 = vcmask 392448
    %47 = vst.msk [vmem:[#allocation0] sm:$0x3] %vm46, %v45
    %s48 = scalar_lea.vmem %s0, 1
    %s49 = smov 3
    %v50 = vld [vmem:[%s48] ss:$8 sm:%s49]
    %51 = vrot.lane.b32.xlu0 %v50, 16
    %v52 = vpop.permute.xlu0 %51
    %vm53 = vcmask 261248
    %54 = vst.msk [vmem:[#allocation0] sm:$0x3] %vm53, %v52
    %s56 = ssub.s32 4, 1
    %v57 = vld [vmem:[#allocation0] sm:%s56]
    %s59 = ssub.s32 4, 1
    %60 = vst [vmem:[%s1] sm:%s59] %v57

// kernel: tile.103
$region0: #{tile.103}
  #allocation0 [shape = 's32[1]{0}', space=sflag, size = 0x4, scoped, tag = 'scoped memory for tile.103']
  %s0 = inlined_call_operand.vmem [shape: f32[32], index: 0, kind: input, shape index: {}]
  %s1 = inlined_call_operand.vmem [shape: f32[9,32], index: 1, kind: output, shape index: {}]
  // Predicated region
  $region2: #{tile.103} parent=0 // pred_check
    _
  $region3: #{tile.103} parent=0 // pred_check_branch
    %3 = sbr.rel (0) target = $region5
  $region4: #{tile.103} parent=0 // pred_region
    _
  $region5: #{tile.103} parent=0 // pred_fallthru
    _
  %v4 = vld [vmem:[%s0] ss:$0 sm:$0xff]
  %5 = vst [vmem:[%s1] sm:$0xff] %v4
  %s6 = scalar_lea.vmem %s1, 8
  %7 = vst [vmem:[%s6] sm:$0xff] %v4

// kernel: mul.74
$region0: #{mul.74}
  %s0 = inlined_call_operand.vmem [shape: f32[9,32], index: 0, kind: input, shape index: {}]
  %s1 = inlined_call_operand.vmem [shape: f32[288], index: 1, kind: output, shape index: {}]
  $region1: #{mul.74} parent=0
    #allocation0 [shape = 'u8[4096]{0}', space=vmem, size = 0x1000, scoped, tag = 'scoped mem for output reshape']
    %v2 = vld [vmem:[%s0] ss:$4 sm:$0x7]
    %vm3 = vcmask 261120
    %4 = vst.msk [vmem:[#allocation0] sm:$0x7] %vm3, %v2
    %s5 = scalar_lea.vmem %s0, 3
    %s6 = smov 3
    %v7 = vld [vmem:[%s5] ss:$4 sm:%s6]
    %8 = vrot.lane.b32.xlu0 %v7, 96
    %v9 = vpop.permute.xlu0 %8
    %vm10 = vcmask 1048320
    %11 = vst.msk [vmem:[#allocation0] sm:$0x3] %vm10, %v9
    %s12 = scalar_lea.vmem %s0, 2
    %s13 = smov 3
    %v14 = vld [vmem:[%s12] ss:$4 sm:%s13]
    %15 = vrot.lane.b32.xlu0 %v14, 64
    %v16 = vpop.permute.xlu0 %15
    %vm17 = vcmask 785920
    %18 = vst.msk [vmem:[#allocation0] sm:$0x3] %vm17, %v16
    %s19 = scalar_lea.vmem %s0, 1
    %s20 = smov 3
    %v21 = vld [vmem:[%s19] ss:$4 sm:%s20]
    %22 = vrot.lane.b32.xlu0 %v21, 32
    %v23 = vpop.permute.xlu0 %22
    %vm24 = vcmask 523520
    %25 = vst.msk [vmem:[#allocation0] sm:$0x3] %vm24, %v23
    %s27 = ssub.s32 16, 1
    %v28 = vld [vmem:[#allocation0] sm:%s27]
    %s30 = ssub.s32 16, 1
    %31 = vst [vmem:[%s1] sm:%s30] %v28

// kernel: fcn_forward.10
$region0: #{fcn_forward.10}
  #allocation0 [shape = 'u32[]', space=smem, size = 0x4, offset = 0x4, fixed_abs, tag = 'smem constant byte address 0x4 - core index']
  #allocation1 [shape = 'u32[72,128]{1,0:T(1,128)}', space=vmem, size = 0x9000, scoped, tag = 'internal scratch']
  %s0 = inlined_call_operand.vmem [shape: bf16[16,128], index: 0, kind: input, shape index: {}]
  %s1 = inlined_call_operand.vmem [shape: bf16[128,16], index: 1, kind: input, shape index: {}]
  %s2 = inlined_call_operand.vmem [shape: f32[1,16], index: 2, kind: input, shape index: {}]
  %s3 = inlined_call_operand.vmem [shape: bf16[16,16], index: 3, kind: output, shape index: {0}]
  %s4 = inlined_call_operand.vmem [shape: f32[1,2,16], index: 4, kind: output, shape index: {1}]
  %5 = xla_tuple %s3, %s4
  %s6 = sld [smem:[#allocation0]]
  $region30: #{fcn_forward.10} parent=0
    _
  %s8 = ssub.s32 1, %s6
  %s9 = scalar_select 0, %s8, %s6
  // Predicated region
  $region2: #{fcn_forward.10} parent=0 // pred_check
    _
  $region3: #{fcn_forward.10} parent=0 // pred_check_branch
    %11 = sbr.rel (0) target = $region5
  $region4: #{fcn_forward.10} parent=0 // pred_region
    _
  $region5: #{fcn_forward.10} parent=0 // pred_fallthru
    _
  // Predicated region
  $region6: #{fcn_forward.10} parent=0 // pred_check
    _
  $region7: #{fcn_forward.10} parent=0 // pred_check_branch
    %13 = sbr.rel (0) target = $region9
  $region8: #{fcn_forward.10} parent=0 // pred_region
    _
  $region9: #{fcn_forward.10} parent=0 // pred_fallthru
    _
  // Predicated region
  $region10: #{fcn_forward.10} parent=0 // pred_check
    _
  $region11: #{fcn_forward.10} parent=0 // pred_check_branch
    %15 = sbr.rel (0) target = $region13
  $region12: #{fcn_forward.10} parent=0 // pred_region
    _
  $region13: #{fcn_forward.10} parent=0 // pred_fallthru
    _
  %v16 = vld [vmem:[%s0] sm:$0xf]
  %v17 = vld [vmem:[%s0 + $0x4] sm:$0xf]
  %v18 = vld [vmem:[%s1] sm:$0xf]
  %v19 = vld [vmem:[%s1 + $0x4] sm:$0xf]
  %v20 = vld [vmem:[%s1 + $0x8] sm:$0xf]
  %v21 = vld [vmem:[%s1 + $0xc] sm:$0xf]
  %v22 = vld [vmem:[%s1 + $0x10] sm:$0xf]
  %v23 = vld [vmem:[%s1 + $0x14] sm:$0xf]
  %v24 = vld [vmem:[%s1 + $0x18] sm:$0xf]
  %v25 = vld [vmem:[%s1 + $0x1c] sm:$0xf]
  %v26 = vld [vmem:[%s1 + $0x20] sm:$0xf]
  %v27 = vld [vmem:[%s1 + $0x24] sm:$0xf]
  %v28 = vld [vmem:[%s1 + $0x28] sm:$0xf]
  %v29 = vld [vmem:[%s1 + $0x2c] sm:$0xf]
  %v30 = vld [vmem:[%s1 + $0x30] sm:$0xf]
  %v31 = vld [vmem:[%s1 + $0x34] sm:$0xf]
  %v32 = vld [vmem:[%s1 + $0x38] sm:$0xf]
  %v33 = vld [vmem:[%s1 + $0x3c] sm:$0xf]
  %v34 = vld [vmem:[%s2] sm:$0x1]
  %v36 = vperm.slane %v34, 0
  %v40 = vunpack.c.l.b16 %v16
  %v41 = vunpack.c.l.b16 %v17
  %v42 = vpack.c.b16 %v41, %v40
  %v60 = vunpack.c.l.b16 %v18
  %v61 = vunpack.c.l.b16 %v19
  %v62 = vunpack.c.l.b16 %v20
  %v63 = vunpack.c.l.b16 %v21
  %v64 = vunpack.c.l.b16 %v22
  %v65 = vunpack.c.l.b16 %v23
  %v66 = vunpack.c.l.b16 %v24
  %v67 = vunpack.c.l.b16 %v25
  %v68 = vunpack.c.l.b16 %v26
  %v69 = vunpack.c.l.b16 %v27
  %v70 = vunpack.c.l.b16 %v28
  %v71 = vunpack.c.l.b16 %v29
  %v72 = vunpack.c.l.b16 %v30
  %v73 = vunpack.c.l.b16 %v31
  %v74 = vunpack.c.l.b16 %v32
  %v75 = vunpack.c.l.b16 %v33
  %v76 = vpack.c.b16 %v61, %v60
  %v77 = vpack.c.b16 %v63, %v62
  %v78 = vpack.c.b16 %v65, %v64
  %v79 = vpack.c.b16 %v67, %v66
  %v80 = vpack.c.b16 %v69, %v68
  %v81 = vpack.c.b16 %v71, %v70
  %v82 = vpack.c.b16 %v73, %v72
  %v83 = vpack.c.b16 %v75, %v74
  %92 = vmatpush.bf16.msra.mxu0 %v83
  %93 = vmatpush.bf16.msra.mxu0 %v82
  %94 = vmatpush.bf16.msra.mxu0 %v81
  %95 = vmatpush.bf16.msra.mxu0 %v80
  %96 = vmatpush.bf16.msra.mxu0 %v79
  %97 = vmatpush.bf16.msra.mxu0 %v78
  %98 = vmatpush.bf16.msra.mxu0 %v77
  %99 = vmatpush.bf16.msra.mxu0 %v76
  %100 = vmatmul.bf16.gmra.mxu0 %v42
  %v101 = vpop.f32.mrf.mxu0
  %v102 = vadd.f32 %v36, %v101
  %v103 = vpop.f32.mrf.mxu0
  %v104 = vadd.f32 %v36, %v103
  %105 = vdwg.mxu0
  %v106 = vmul.f32 %v102, 0.2
  %v107 = vmul.f32 %v104, 0.2
  %v108 = vmax.f32 %v102, %v106
  %v109 = vmax.f32 %v104, %v107
  %v110 = vpack.c.bf16 %v108, %v108
  %v111 = vpack.c.bf16 %v109, %v109
  %vm112 = vcmask 125952
  %113 = vst.msk [vmem:[%s3] sm:$0xf] %vm112, %v110
  %114 = vst.msk [vmem:[%s3 + $0x4] sm:$0xf] %vm112, %v111
  %v115 = vlaneseq
  %v116 = vshrl.u32 %v115, 7
  %v117 = vadd.s32 %v116, 8
  %s118 = smul.u32 0, 16
  %v119 = vstv %s118
  %v120 = vadd.s32 %v116, %v119
  %v121 = vadd.s32 %v117, %v119
  %vm122 = vcmp.lt.s32.totalorder %v120, 8
  %vm123 = vcmp.lt.s32.totalorder %v121, 8
  %v124 = vsel %vm122, 1, 0
  %v125 = vsel %vm123, 1, 0
  %vm126 = vcmp.eq.s32.totalorder %v124, 1
  %vm127 = vcmp.eq.s32.totalorder %v125, 1
  %v128 = vsel %vm126, %v108, 0.0
  %v129 = vsel %vm127, %v109, 0.0
  %vm130 = vcmask 130048
  %v131 = vsel %vm130, %v128, 0.0
  %v132 = vsel %vm130, %v129, 0.0
  %v133 = vadd.f32 %v131, %v132
  %v134 = vrot.slane %v133, 4
  %v135 = vadd.f32 %v133, %v134
  %v136 = vrot.slane %v135, 2
  %v137 = vadd.f32 %v135, %v136
  %v138 = vrot.slane %v137, 1
  %v139 = vadd.f32 %v137, %v138
  %v140 = vmul.f32 %v128, %v128
  %v141 = vmul.f32 %v129, %v129
  %v142 = vsel %vm130, %v140, 0.0
  %v143 = vsel %vm130, %v141, 0.0
  %v144 = vadd.f32 %v142, %v143
  %v145 = vrot.slane %v144, 4
  %v146 = vadd.f32 %v144, %v145
  %v147 = vrot.slane %v146, 2
  %v148 = vadd.f32 %v146, %v147
  %v149 = vrot.slane %v148, 1
  %v150 = vadd.f32 %v148, %v149
  %vm151 = vcmask 1040384
  %v152 = vsel %vm151, %v139, %v150
  %vm153 = vcmask 123904
  %154 = vst.msk [vmem:[%s4] sm:$0x3] %vm153, %v152
  // Predicated region
  $region14: #{fcn_forward.10} parent=0 // pred_check
    _
  $region15: #{fcn_forward.10} parent=0 // pred_check_branch
    %156 = sbr.rel (0) target = $region17
  $region16: #{fcn_forward.10} parent=0 // pred_region
    _
  $region17: #{fcn_forward.10} parent=0 // pred_fallthru
    _
  // Predicated region
  $region18: #{fcn_forward.10} parent=0 // pred_check
    _
  $region19: #{fcn_forward.10} parent=0 // pred_check_branch
    %158 = sbr.rel (0) target = $region21
  $region20: #{fcn_forward.10} parent=0 // pred_region
    _
  $region21: #{fcn_forward.10} parent=0 // pred_fallthru
    _
  // Predicated region
  $region22: #{fcn_forward.10} parent=0 // pred_check
    _
  $region23: #{fcn_forward.10} parent=0 // pred_check_branch
    %160 = sbr.rel (0) target = $region25
  $region24: #{fcn_forward.10} parent=0 // pred_region
    _
  $region25: #{fcn_forward.10} parent=0 // pred_fallthru
    _
  // Predicated region
  $region26: #{fcn_forward.10} parent=0 // pred_check
    _
  $region27: #{fcn_forward.10} parent=0 // pred_check_branch
    %162 = sbr.rel (0) target = $region29
  $region28: #{fcn_forward.10} parent=0 // pred_region
    _
  $region29: #{fcn_forward.10} parent=0 // pred_fallthru
    _

// kernel: fcn_forward.11
$region0: #{fcn_forward.11}
  #allocation0 [shape = 'u32[]', space=smem, size = 0x4, offset = 0x4, fixed_abs, tag = 'smem constant byte address 0x4 - core index']
  #allocation1 [shape = 'u32[72,128]{1,0:T(1,128)}', space=vmem, size = 0x9000, scoped, tag = 'internal scratch']
  %s0 = inlined_call_operand.vmem [shape: bf16[16,256], index: 0, kind: input, shape index: {}]
  %s1 = inlined_call_operand.vmem [shape: bf16[256,32], index: 1, kind: input, shape index: {}]
  %s2 = inlined_call_operand.vmem [shape: f32[1,32], index: 2, kind: input, shape index: {}]
  %s3 = inlined_call_operand.vmem [shape: bf16[16,32], index: 3, kind: output, shape index: {0}]
  %s4 = inlined_call_operand.vmem [shape: f32[1,2,32], index: 4, kind: output, shape index: {1}]
  %5 = xla_tuple %s3, %s4
  %s6 = sld [smem:[#allocation0]]
  $region30: #{fcn_forward.11} parent=0
    _
  %s8 = ssub.s32 1, %s6
  %s9 = scalar_select 0, %s8, %s6
  // Predicated region
  $region2: #{fcn_forward.11} parent=0 // pred_check
    _
  $region3: #{fcn_forward.11} parent=0 // pred_check_branch
    %11 = sbr.rel (0) target = $region5
  $region4: #{fcn_forward.11} parent=0 // pred_region
    _
  $region5: #{fcn_forward.11} parent=0 // pred_fallthru
    _
  // Predicated region
  $region6: #{fcn_forward.11} parent=0 // pred_check
    _
  $region7: #{fcn_forward.11} parent=0 // pred_check_branch
    %13 = sbr.rel (0) target = $region9
  $region8: #{fcn_forward.11} parent=0 // pred_region
    _
  $region9: #{fcn_forward.11} parent=0 // pred_fallthru
    _
  // Predicated region
  $region10: #{fcn_forward.11} parent=0 // pred_check
    _
  $region11: #{fcn_forward.11} parent=0 // pred_check_branch
    %15 = sbr.rel (0) target = $region13
  $region12: #{fcn_forward.11} parent=0 // pred_region
    _
  $region13: #{fcn_forward.11} parent=0 // pred_fallthru
    _
  %v16 = vld [vmem:[%s0] sm:$0xff]
  %v17 = vld [vmem:[%s0 + $0x8] sm:$0xff]
  %v18 = vld [vmem:[%s1] sm:$0xf]
  %v19 = vld [vmem:[%s1 + $0x4] sm:$0xf]
  %v20 = vld [vmem:[%s1 + $0x8] sm:$0xf]
  %v21 = vld [vmem:[%s1 + $0xc] sm:$0xf]
  %v22 = vld [vmem:[%s1 + $0x10] sm:$0xf]
  %v23 = vld [vmem:[%s1 + $0x14] sm:$0xf]
  %v24 = vld [vmem:[%s1 + $0x18] sm:$0xf]
  %v25 = vld [vmem:[%s1 + $0x1c] sm:$0xf]
  %v26 = vld [vmem:[%s1 + $0x20] sm:$0xf]
  %v27 = vld [vmem:[%s1 + $0x24] sm:$0xf]
  %v28 = vld [vmem:[%s1 + $0x28] sm:$0xf]
  %v29 = vld [vmem:[%s1 + $0x2c] sm:$0xf]
  %v30 = vld [vmem:[%s1 + $0x30] sm:$0xf]
  %v31 = vld [vmem:[%s1 + $0x34] sm:$0xf]
  %v32 = vld [vmem:[%s1 + $0x38] sm:$0xf]
  %v33 = vld [vmem:[%s1 + $0x3c] sm:$0xf]
  %v34 = vld [vmem:[%s1 + $0x40] sm:$0xf]
  %v35 = vld [vmem:[%s1 + $0x44] sm:$0xf]
  %v36 = vld [vmem:[%s1 + $0x48] sm:$0xf]
  %v37 = vld [vmem:[%s1 + $0x4c] sm:$0xf]
  %v38 = vld [vmem:[%s1 + $0x50] sm:$0xf]
  %v39 = vld [vmem:[%s1 + $0x54] sm:$0xf]
  %v40 = vld [vmem:[%s1 + $0x58] sm:$0xf]
  %v41 = vld [vmem:[%s1 + $0x5c] sm:$0xf]
  %v42 = vld [vmem:[%s1 + $0x60] sm:$0xf]
  %v43 = vld [vmem:[%s1 + $0x64] sm:$0xf]
  %v44 = vld [vmem:[%s1 + $0x68] sm:$0xf]
  %v45 = vld [vmem:[%s1 + $0x6c] sm:$0xf]
  %v46 = vld [vmem:[%s1 + $0x70] sm:$0xf]
  %v47 = vld [vmem:[%s1 + $0x74] sm:$0xf]
  %v48 = vld [vmem:[%s1 + $0x78] sm:$0xf]
  %v49 = vld [vmem:[%s1 + $0x7c] sm:$0xf]
  %v50 = vld [vmem:[%s2] sm:$0x1]
  %v52 = vperm.slane %v50, 0
  %v56 = vunpack.c.l.b16 %v16
  %v57 = vunpack.c.h.b16 %v16
  %v58 = vunpack.c.l.b16 %v17
  %v59 = vunpack.c.h.b16 %v17
  %v60 = vpack.c.b16 %v58, %v56
  %v61 = vpack.c.b16 %v59, %v57
  %v96 = vunpack.c.l.b16 %v18
  %v97 = vunpack.c.l.b16 %v19
  %v98 = vunpack.c.l.b16 %v20
  %v99 = vunpack.c.l.b16 %v21
  %v100 = vunpack.c.l.b16 %v22
  %v101 = vunpack.c.l.b16 %v23
  %v102 = vunpack.c.l.b16 %v24
  %v103 = vunpack.c.l.b16 %v25
  %v104 = vunpack.c.l.b16 %v26
  %v105 = vunpack.c.l.b16 %v27
  %v106 = vunpack.c.l.b16 %v28
  %v107 = vunpack.c.l.b16 %v29
  %v108 = vunpack.c.l.b16 %v30
  %v109 = vunpack.c.l.b16 %v31
  %v110 = vunpack.c.l.b16 %v32
  %v111 = vunpack.c.l.b16 %v33
  %v112 = vunpack.c.l.b16 %v34
  %v113 = vunpack.c.l.b16 %v35
  %v114 = vunpack.c.l.b16 %v36
  %v115 = vunpack.c.l.b16 %v37
  %v116 = vunpack.c.l.b16 %v38
  %v117 = vunpack.c.l.b16 %v39
  %v118 = vunpack.c.l.b16 %v40
  %v119 = vunpack.c.l.b16 %v41
  %v120 = vunpack.c.l.b16 %v42
  %v121 = vunpack.c.l.b16 %v43
  %v122 = vunpack.c.l.b16 %v44
  %v123 = vunpack.c.l.b16 %v45
  %v124 = vunpack.c.l.b16 %v46
  %v125 = vunpack.c.l.b16 %v47
  %v126 = vunpack.c.l.b16 %v48
  %v127 = vunpack.c.l.b16 %v49
  %v128 = vpack.c.b16 %v97, %v96
  %v129 = vpack.c.b16 %v99, %v98
  %v130 = vpack.c.b16 %v101, %v100
  %v131 = vpack.c.b16 %v103, %v102
  %v132 = vpack.c.b16 %v105, %v104
  %v133 = vpack.c.b16 %v107, %v106
  %v134 = vpack.c.b16 %v109, %v108
  %v135 = vpack.c.b16 %v111, %v110
  %v136 = vpack.c.b16 %v113, %v112
  %v137 = vpack.c.b16 %v115, %v114
  %v138 = vpack.c.b16 %v117, %v116
  %v139 = vpack.c.b16 %v119, %v118
  %v140 = vpack.c.b16 %v121, %v120
  %v141 = vpack.c.b16 %v123, %v122
  %v142 = vpack.c.b16 %v125, %v124
  %v143 = vpack.c.b16 %v127, %v126
  %160 = vmatpush.bf16.msra.mxu0 %v135
  %161 = vmatpush.bf16.msra.mxu0 %v134
  %162 = vmatpush.bf16.msra.mxu0 %v133
  %163 = vmatpush.bf16.msra.mxu0 %v132
  %164 = vmatpush.bf16.msra.mxu0 %v131
  %165 = vmatpush.bf16.msra.mxu0 %v130
  %166 = vmatpush.bf16.msra.mxu0 %v129
  %167 = vmatpush.bf16.msra.mxu0 %v128
  %168 = vmatmul.bf16.gmra.mxu0 %v60
  %v169 = vpop.f32.mrf.mxu0
  %v170 = vadd.f32 %v52, %v169
  %v171 = vpop.f32.mrf.mxu0
  %v172 = vadd.f32 %v52, %v171
  %173 = vdwg.mxu0
  %174 = vmatpush.bf16.msra.mxu0 %v143
  %175 = vmatpush.bf16.msra.mxu0 %v142
  %176 = vmatpush.bf16.msra.mxu0 %v141
  %177 = vmatpush.bf16.msra.mxu0 %v140
  %178 = vmatpush.bf16.msra.mxu0 %v139
  %179 = vmatpush.bf16.msra.mxu0 %v138
  %180 = vmatpush.bf16.msra.mxu0 %v137
  %181 = vmatpush.bf16.msra.mxu0 %v136
  %182 = vmatmul.bf16.gmra.mxu0 %v61
  %v183 = vpop.f32.mrf.mxu0
  %v184 = vadd.f32 %v170, %v183
  %v185 = vpop.f32.mrf.mxu0
  %v186 = vadd.f32 %v172, %v185
  %187 = vdwg.mxu0
  %v188 = vmul.f32 %v184, 0.2
  %v189 = vmul.f32 %v186, 0.2
  %v190 = vmax.f32 %v184, %v188
  %v191 = vmax.f32 %v186, %v189
  %v192 = vpack.c.bf16 %v190, %v190
  %v193 = vpack.c.bf16 %v191, %v191
  %vm194 = vcmask 257024
  %195 = vst.msk [vmem:[%s3] sm:$0xf] %vm194, %v192
  %196 = vst.msk [vmem:[%s3 + $0x4] sm:$0xf] %vm194, %v193
  %v197 = vlaneseq
  %v198 = vshrl.u32 %v197, 7
  %v199 = vadd.s32 %v198, 8
  %s200 = smul.u32 0, 16
  %v201 = vstv %s200
  %v202 = vadd.s32 %v198, %v201
  %v203 = vadd.s32 %v199, %v201
  %vm204 = vcmp.lt.s32.totalorder %v202, 2
  %vm205 = vcmp.lt.s32.totalorder %v203, 2
  %v206 = vsel %vm204, 1, 0
  %v207 = vsel %vm205, 1, 0
  %vm208 = vcmp.eq.s32.totalorder %v206, 1
  %vm209 = vcmp.eq.s32.totalorder %v207, 1
  %v210 = vsel %vm208, %v190, 0.0
  %v211 = vsel %vm209, %v191, 0.0
  %vm212 = vcmask 261120
  %v213 = vsel %vm212, %v210, 0.0
  %v214 = vsel %vm212, %v211, 0.0
  %v215 = vadd.f32 %v213, %v214
  %v216 = vrot.slane %v215, 4
  %v217 = vadd.f32 %v215, %v216
  %v218 = vrot.slane %v217, 2
  %v219 = vadd.f32 %v217, %v218
  %v220 = vrot.slane %v219, 1
  %v221 = vadd.f32 %v219, %v220
  %v222 = vmul.f32 %v210, %v210
  %v223 = vmul.f32 %v211, %v211
  %v224 = vsel %vm212, %v222, 0.0
  %v225 = vsel %vm212, %v223, 0.0
  %v226 = vadd.f32 %v224, %v225
  %v227 = vrot.slane %v226, 4
  %v228 = vadd.f32 %v226, %v227
  %v229 = vrot.slane %v228, 2
  %v230 = vadd.f32 %v228, %v229
  %v231 = vrot.slane %v230, 1
  %v232 = vadd.f32 %v230, %v231
  %vm233 = vcmask 1040384
  %v234 = vsel %vm233, %v221, %v232
  %vm235 = vcmask 254976
  %236 = vst.msk [vmem:[%s4] sm:$0x3] %vm235, %v234
  // Predicated region
  $region14: #{fcn_forward.11} parent=0 // pred_check
    _
  $region15: #{fcn_forward.11} parent=0 // pred_check_branch
    %238 = sbr.rel (0) target = $region17
  $region16: #{fcn_forward.11} parent=0 // pred_region
    _
  $region17: #{fcn_forward.11} parent=0 // pred_fallthru
    _
  // Predicated region
  $region18: #{fcn_forward.11} parent=0 // pred_check
    _
  $region19: #{fcn_forward.11} parent=0 // pred_check_branch
    %240 = sbr.rel (0) target = $region21
  $region20: #{fcn_forward.11} parent=0 // pred_region
    _
  $region21: #{fcn_forward.11} parent=0 // pred_fallthru
    _
  // Predicated region
  $region22: #{fcn_forward.11} parent=0 // pred_check
    _
  $region23: #{fcn_forward.11} parent=0 // pred_check_branch
    %242 = sbr.rel (0) target = $region25
  $region24: #{fcn_forward.11} parent=0 // pred_region
    _
  $region25: #{fcn_forward.11} parent=0 // pred_fallthru
    _
  // Predicated region
  $region26: #{fcn_forward.11} parent=0 // pred_check
    _
  $region27: #{fcn_forward.11} parent=0 // pred_check_branch
    %244 = sbr.rel (0) target = $region29
  $region28: #{fcn_forward.11} parent=0 // pred_region
    _
  $region29: #{fcn_forward.11} parent=0 // pred_fallthru
    _

// kernel: tile.113
$region0: #{tile.113}
  #allocation0 [shape = 's32[1]{0}', space=sflag, size = 0x4, scoped, tag = 'scoped memory for tile.113']
  %s0 = inlined_call_operand.vmem [shape: f32[16], index: 0, kind: input, shape index: {}]
  %s1 = inlined_call_operand.vmem [shape: f32[9,16], index: 1, kind: output, shape index: {}]
  // Predicated region
  $region2: #{tile.113} parent=0 // pred_check
    _
  $region3: #{tile.113} parent=0 // pred_check_branch
    %3 = sbr.rel (0) target = $region5
  $region4: #{tile.113} parent=0 // pred_region
    _
  $region5: #{tile.113} parent=0 // pred_fallthru
    _
  %v4 = vld [vmem:[%s0] ss:$0 sm:$0xff]
  %5 = vst [vmem:[%s1] sm:$0xff] %v4
  %s6 = scalar_lea.vmem %s1, 8
  %7 = vst [vmem:[%s6] sm:$0xff] %v4

// kernel: mul.81
$region0: #{mul.81}
  %s0 = inlined_call_operand.vmem [shape: f32[9,16], index: 0, kind: input, shape index: {}]
  %s1 = inlined_call_operand.vmem [shape: f32[144], index: 1, kind: output, shape index: {}]
  $region1: #{mul.81} parent=0
    #allocation0 [shape = 'u8[4096]{0}', space=vmem, size = 0x1000, scoped, tag = 'scoped mem for output reshape']
    %s2 = smov 3
    %v3 = vld [vmem:[%s0] ss:$8 sm:%s2]
    %vm4 = vcmask 130048
    %5 = vst.msk [vmem:[#allocation0] sm:$0x3] %vm4, %v3
    %s6 = scalar_lea.vmem %s0, 7
    %v7 = vld [vmem:[%s6] sm:$0x1]
    %8 = vrot.lane.b32.xlu0 %v7, 112
    %v9 = vpop.permute.xlu0 %8
    %vm10 = vcmask 1048448
    %11 = vst.msk [vmem:[#allocation0] sm:$0x1] %vm10, %v9
    %s12 = scalar_lea.vmem %s0, 6
    %v13 = vld [vmem:[%s12] sm:$0x1]
    %14 = vrot.lane.b32.xlu0 %v13, 96
    %v15 = vpop.permute.xlu0 %14
    %vm16 = vcmask 917248
    %17 = vst.msk [vmem:[#allocation0] sm:$0x1] %vm16, %v15
    %s18 = scalar_lea.vmem %s0, 5
    %v19 = vld [vmem:[%s18] sm:$0x1]
    %20 = vrot.lane.b32.xlu0 %v19, 80
    %v21 = vpop.permute.xlu0 %20
    %vm22 = vcmask 786048
    %23 = vst.msk [vmem:[#allocation0] sm:$0x1] %vm22, %v21
    %s24 = scalar_lea.vmem %s0, 4
    %v25 = vld [vmem:[%s24] sm:$0x1]
    %26 = vrot.lane.b32.xlu0 %v25, 64
    %v27 = vpop.permute.xlu0 %26
    %vm28 = vcmask 654848
    %29 = vst.msk [vmem:[#allocation0] sm:$0x1] %vm28, %v27
    %s30 = scalar_lea.vmem %s0, 3
    %v31 = vld [vmem:[%s30] sm:$0x1]
    %32 = vrot.lane.b32.xlu0 %v31, 48
    %v33 = vpop.permute.xlu0 %32
    %vm34 = vcmask 523648
    %35 = vst.msk [vmem:[#allocation0] sm:$0x1] %vm34, %v33
    %s36 = scalar_lea.vmem %s0, 2
    %v37 = vld [vmem:[%s36] sm:$0x1]
    %38 = vrot.lane.b32.xlu0 %v37, 32
    %v39 = vpop.permute.xlu0 %38
    %vm40 = vcmask 392448
    %41 = vst.msk [vmem:[#allocation0] sm:$0x1] %vm40, %v39
    %s42 = scalar_lea.vmem %s0, 1
    %v43 = vld [vmem:[%s42] sm:$0x1]
    %44 = vrot.lane.b32.xlu0 %v43, 16
    %v45 = vpop.permute.xlu0 %44
    %vm46 = vcmask 261248
    %47 = vst.msk [vmem:[#allocation0] sm:$0x1] %vm46, %v45
    %s49 = ssub.s32 4, 1
    %v50 = vld [vmem:[#allocation0] sm:%s49]
    %s52 = ssub.s32 4, 1
    %53 = vst [vmem:[%s1] sm:%s52] %v50

// kernel: fcn_forward.12
$region0: #{fcn_forward.12}
  #allocation0 [shape = 'u32[]', space=smem, size = 0x4, offset = 0x4, fixed_abs, tag = 'smem constant byte address 0x4 - core index']
  #allocation1 [shape = 'u32[72,128]{1,0:T(1,128)}', space=vmem, size = 0x9000, scoped, tag = 'internal scratch']
  %s0 = inlined_call_operand.vmem [shape: bf16[16,288], index: 0, kind: input, shape index: {}]
  %s1 = inlined_call_operand.vmem [shape: bf16[288,64], index: 1, kind: input, shape index: {}]
  %s2 = inlined_call_operand.vmem [shape: f32[1,64], index: 2, kind: input, shape index: {}]
  %s3 = inlined_call_operand.vmem [shape: bf16[16,64], index: 3, kind: output, shape index: {0}]
  %s4 = inlined_call_operand.vmem [shape: f32[1,2,64], index: 4, kind: output, shape index: {1}]
  %5 = xla_tuple %s3, %s4
  %s6 = sld [smem:[#allocation0]]
  $region30: #{fcn_forward.12} parent=0
    _
  %s8 = ssub.s32 1, %s6
  %s9 = scalar_select 0, %s8, %s6
  // Predicated region
  $region2: #{fcn_forward.12} parent=0 // pred_check
    _
  $region3: #{fcn_forward.12} parent=0 // pred_check_branch
    %11 = sbr.rel (0) target = $region5
  $region4: #{fcn_forward.12} parent=0 // pred_region
    _
  $region5: #{fcn_forward.12} parent=0 // pred_fallthru
    _
  // Predicated region
  $region6: #{fcn_forward.12} parent=0 // pred_check
    _
  $region7: #{fcn_forward.12} parent=0 // pred_check_branch
    %13 = sbr.rel (0) target = $region9
  $region8: #{fcn_forward.12} parent=0 // pred_region
    _
  $region9: #{fcn_forward.12} parent=0 // pred_fallthru
    _
  // Predicated region
  $region10: #{fcn_forward.12} parent=0 // pred_check
    _
  $region11: #{fcn_forward.12} parent=0 // pred_check_branch
    %15 = sbr.rel (0) target = $region13
  $region12: #{fcn_forward.12} parent=0 // pred_region
    _
  $region13: #{fcn_forward.12} parent=0 // pred_fallthru
    _
  %v17 = vld [vmem:[%s0] sm:$0xff]
  %v18 = vld [vmem:[%s0 + $0x8] sm:$0xf]
  %v19 = vld [vmem:[%s0 + $0xc] sm:$0xff]
  %v20 = vld [vmem:[%s0 + $0x14] sm:$0xf]
  %v21 = vld [vmem:[%s1] sm:$0xf]
  %v22 = vld [vmem:[%s1 + $0x4] sm:$0xf]
  %v23 = vld [vmem:[%s1 + $0x8] sm:$0xf]
  %v24 = vld [vmem:[%s1 + $0xc] sm:$0xf]
  %v25 = vld [vmem:[%s1 + $0x10] sm:$0xf]
  %v26 = vld [vmem:[%s1 + $0x14] sm:$0xf]
  %v27 = vld [vmem:[%s1 + $0x18] sm:$0xf]
  %v28 = vld [vmem:[%s1 + $0x1c] sm:$0xf]
  %v29 = vld [vmem:[%s1 + $0x20] sm:$0xf]
  %v30 = vld [vmem:[%s1 + $0x24] sm:$0xf]
  %v31 = vld [vmem:[%s1 + $0x28] sm:$0xf]
  %v32 = vld [vmem:[%s1 + $0x2c] sm:$0xf]
  %v33 = vld [vmem:[%s1 + $0x30] sm:$0xf]
  %v34 = vld [vmem:[%s1 + $0x34] sm:$0xf]
  %v35 = vld [vmem:[%s1 + $0x38] sm:$0xf]
  %v36 = vld [vmem:[%s1 + $0x3c] sm:$0xf]
  %v37 = vld [vmem:[%s1 + $0x40] sm:$0xf]
  %v38 = vld [vmem:[%s1 + $0x44] sm:$0xf]
  %v39 = vld [vmem:[%s1 + $0x48] sm:$0xf]
  %v40 = vld [vmem:[%s1 + $0x4c] sm:$0xf]
  %v41 = vld [vmem:[%s1 + $0x50] sm:$0xf]
  %v42 = vld [vmem:[%s1 + $0x54] sm:$0xf]
  %v43 = vld [vmem:[%s1 + $0x58] sm:$0xf]
  %v44 = vld [vmem:[%s1 + $0x5c] sm:$0xf]
  %v45 = vld [vmem:[%s1 + $0x60] sm:$0xf]
  %v46 = vld [vmem:[%s1 + $0x64] sm:$0xf]
  %v47 = vld [vmem:[%s1 + $0x68] sm:$0xf]
  %v48 = vld [vmem:[%s1 + $0x6c] sm:$0xf]
  %v49 = vld [vmem:[%s1 + $0x70] sm:$0xf]
  %v50 = vld [vmem:[%s1 + $0x74] sm:$0xf]
  %v51 = vld [vmem:[%s1 + $0x78] sm:$0xf]
  %v52 = vld [vmem:[%s1 + $0x7c] sm:$0xf]
  %v53 = vld [vmem:[%s1 + $0x80] sm:$0xf]
  %v54 = vld [vmem:[%s1 + $0x84] sm:$0xf]
  %v55 = vld [vmem:[%s1 + $0x88] sm:$0xf]
  %v56 = vld [vmem:[%s1 + $0x8c] sm:$0xf]
  %v57 = vld [vmem:[%s2] sm:$0x1]
  %v59 = vperm.slane %v57, 0
  %v65 = vunpack.c.l.b16 %v17
  %v66 = vunpack.c.h.b16 %v17
  %v67 = vunpack.c.l.b16 %v18
  %v68 = vunpack.c.l.b16 %v19
  %v69 = vunpack.c.h.b16 %v19
  %v70 = vunpack.c.l.b16 %v20
  %v71 = vpack.c.b16 %v68, %v65
  %v72 = vpack.c.b16 %v69, %v66
  %v73 = vpack.c.b16 %v70, %v67
  %v112 = vunpack.c.l.b16 %v21
  %v113 = vunpack.c.l.b16 %v22
  %v114 = vunpack.c.l.b16 %v23
  %v115 = vunpack.c.l.b16 %v24
  %v116 = vunpack.c.l.b16 %v25
  %v117 = vunpack.c.l.b16 %v26
  %v118 = vunpack.c.l.b16 %v27
  %v119 = vunpack.c.l.b16 %v28
  %v120 = vunpack.c.l.b16 %v29
  %v121 = vunpack.c.l.b16 %v30
  %v122 = vunpack.c.l.b16 %v31
  %v123 = vunpack.c.l.b16 %v32
  %v124 = vunpack.c.l.b16 %v33
  %v125 = vunpack.c.l.b16 %v34
  %v126 = vunpack.c.l.b16 %v35
  %v127 = vunpack.c.l.b16 %v36
  %v128 = vunpack.c.l.b16 %v37
  %v129 = vunpack.c.l.b16 %v38
  %v130 = vunpack.c.l.b16 %v39
  %v131 = vunpack.c.l.b16 %v40
  %v132 = vunpack.c.l.b16 %v41
  %v133 = vunpack.c.l.b16 %v42
  %v134 = vunpack.c.l.b16 %v43
  %v135 = vunpack.c.l.b16 %v44
  %v136 = vunpack.c.l.b16 %v45
  %v137 = vunpack.c.l.b16 %v46
  %v138 = vunpack.c.l.b16 %v47
  %v139 = vunpack.c.l.b16 %v48
  %v140 = vunpack.c.l.b16 %v49
  %v141 = vunpack.c.l.b16 %v50
  %v142 = vunpack.c.l.b16 %v51
  %v143 = vunpack.c.l.b16 %v52
  %v144 = vunpack.c.l.b16 %v53
  %v145 = vunpack.c.l.b16 %v54
  %v146 = vunpack.c.l.b16 %v55
  %v147 = vunpack.c.l.b16 %v56
  %v148 = vpack.c.b16 %v113, %v112
  %v149 = vpack.c.b16 %v115, %v114
  %v150 = vpack.c.b16 %v117, %v116
  %v151 = vpack.c.b16 %v119, %v118
  %v152 = vpack.c.b16 %v121, %v120
  %v153 = vpack.c.b16 %v123, %v122
  %v154 = vpack.c.b16 %v125, %v124
  %v155 = vpack.c.b16 %v127, %v126
  %v156 = vpack.c.b16 %v129, %v128
  %v157 = vpack.c.b16 %v131, %v130
  %v158 = vpack.c.b16 %v133, %v132
  %v159 = vpack.c.b16 %v135, %v134
  %v160 = vpack.c.b16 %v137, %v136
  %v161 = vpack.c.b16 %v139, %v138
  %v162 = vpack.c.b16 %v141, %v140
  %v163 = vpack.c.b16 %v143, %v142
  %v164 = vpack.c.b16 %v145, %v144
  %v165 = vpack.c.b16 %v147, %v146
  %vm184 = vcmask 261120
  %v186 = vsel %vm184, %v73, 0
  %188 = vmatpush.bf16.msra.mxu0 %v155
  %189 = vmatpush.bf16.msra.mxu0 %v154
  %190 = vmatpush.bf16.msra.mxu0 %v153
  %191 = vmatpush.bf16.msra.mxu0 %v152
  %192 = vmatpush.bf16.msra.mxu0 %v151
  %193 = vmatpush.bf16.msra.mxu0 %v150
  %194 = vmatpush.bf16.msra.mxu0 %v149
  %195 = vmatpush.bf16.msra.mxu0 %v148
  %196 = vmatmul.bf16.gmra.mxu0 %v71
  %v197 = vpop.f32.mrf.mxu0
  %v198 = vadd.f32 %v59, %v197
  %v199 = vpop.f32.mrf.mxu0
  %v200 = vadd.f32 %v59, %v199
  %201 = vdwg.mxu0
  %202 = vmatpush.bf16.msra.mxu0 %v163
  %203 = vmatpush.bf16.msra.mxu0 %v162
  %204 = vmatpush.bf16.msra.mxu0 %v161
  %205 = vmatpush.bf16.msra.mxu0 %v160
  %206 = vmatpush.bf16.msra.mxu0 %v159
  %207 = vmatpush.bf16.msra.mxu0 %v158
  %208 = vmatpush.bf16.msra.mxu0 %v157
  %209 = vmatpush.bf16.msra.mxu0 %v156
  %210 = vmatmul.bf16.gmra.mxu0 %v72
  %v211 = vpop.f32.mrf.mxu0
  %v212 = vadd.f32 %v198, %v211
  %v213 = vpop.f32.mrf.mxu0
  %v214 = vadd.f32 %v200, %v213
  %215 = vdwg.mxu0
  %216 = vmatpush.bf16.msra.mxu0 0
  %217 = vmatpush.bf16.msra.mxu0 0
  %218 = vmatpush.bf16.msra.mxu0 0
  %219 = vmatpush.bf16.msra.mxu0 0
  %220 = vmatpush.bf16.msra.mxu0 0
  %221 = vmatpush.bf16.msra.mxu0 0
  %222 = vmatpush.bf16.msra.mxu0 %v165
  %223 = vmatpush.bf16.msra.mxu0 %v164
  %224 = vmatmul.bf16.gmra.mxu0 %v186
  %v225 = vpop.f32.mrf.mxu0
  %v226 = vadd.f32 %v212, %v225
  %v227 = vpop.f32.mrf.mxu0
  %v228 = vadd.f32 %v214, %v227
  %229 = vdwg.mxu0
  %v230 = vmul.f32 %v226, 0.2
  %v231 = vmul.f32 %v228, 0.2
  %v232 = vmax.f32 %v226, %v230
  %v233 = vmax.f32 %v228, %v231
  %v234 = vpack.c.bf16 %v232, %v232
  %v235 = vpack.c.bf16 %v233, %v233
  %vm236 = vcmask 519168
  %237 = vst.msk [vmem:[%s3] sm:$0xf] %vm236, %v234
  %238 = vst.msk [vmem:[%s3 + $0x4] sm:$0xf] %vm236, %v235
  %v239 = vlaneseq
  %v240 = vshrl.u32 %v239, 7
  %v241 = vadd.s32 %v240, 8
  %s242 = smul.u32 0, 16
  %v243 = vstv %s242
  %v244 = vadd.s32 %v240, %v243
  %v245 = vadd.s32 %v241, %v243
  %vm246 = vcmp.lt.s32.totalorder %v244, 2
  %vm247 = vcmp.lt.s32.totalorder %v245, 2
  %v248 = vsel %vm246, 1, 0
  %v249 = vsel %vm247, 1, 0
  %vm250 = vcmp.eq.s32.totalorder %v248, 1
  %vm251 = vcmp.eq.s32.totalorder %v249, 1
  %v252 = vsel %vm250, %v232, 0.0
  %v253 = vsel %vm251, %v233, 0.0
  %vm254 = vcmask 523264
  %v255 = vsel %vm254, %v252, 0.0
  %v256 = vsel %vm254, %v253, 0.0
  %v257 = vadd.f32 %v255, %v256
  %v258 = vrot.slane %v257, 4
  %v259 = vadd.f32 %v257, %v258
  %v260 = vrot.slane %v259, 2
  %v261 = vadd.f32 %v259, %v260
  %v262 = vrot.slane %v261, 1
  %v263 = vadd.f32 %v261, %v262
  %v264 = vmul.f32 %v252, %v252
  %v265 = vmul.f32 %v253, %v253
  %v266 = vsel %vm254, %v264, 0.0
  %v267 = vsel %vm254, %v265, 0.0
  %v268 = vadd.f32 %v266, %v267
  %v269 = vrot.slane %v268, 4
  %v270 = vadd.f32 %v268, %v269
  %v271 = vrot.slane %v270, 2
  %v272 = vadd.f32 %v270, %v271
  %v273 = vrot.slane %v272, 1
  %v274 = vadd.f32 %v272, %v273
  %vm275 = vcmask 1040384
  %v276 = vsel %vm275, %v263, %v274
  %vm277 = vcmask 517120
  %278 = vst.msk [vmem:[%s4] sm:$0x3] %vm277, %v276
  // Predicated region
  $region14: #{fcn_forward.12} parent=0 // pred_check
    _
  $region15: #{fcn_forward.12} parent=0 // pred_check_branch
    %280 = sbr.rel (0) target = $region17
  $region16: #{fcn_forward.12} parent=0 // pred_region
    _
  $region17: #{fcn_forward.12} parent=0 // pred_fallthru
    _
  // Predicated region
  $region18: #{fcn_forward.12} parent=0 // pred_check
    _
  $region19: #{fcn_forward.12} parent=0 // pred_check_branch
    %282 = sbr.rel (0) target = $region21
  $region20: #{fcn_forward.12} parent=0 // pred_region
    _
  $region21: #{fcn_forward.12} parent=0 // pred_fallthru
    _
  // Predicated region
  $region22: #{fcn_forward.12} parent=0 // pred_check
    _
  $region23: #{fcn_forward.12} parent=0 // pred_check_branch
    %284 = sbr.rel (0) target = $region25
  $region24: #{fcn_forward.12} parent=0 // pred_region
    _
  $region25: #{fcn_forward.12} parent=0 // pred_fallthru
    _
  // Predicated region
  $region26: #{fcn_forward.12} parent=0 // pred_check
    _
  $region27: #{fcn_forward.12} parent=0 // pred_check_branch
    %286 = sbr.rel (0) target = $region29
  $region28: #{fcn_forward.12} parent=0 // pred_region
    _
  $region29: #{fcn_forward.12} parent=0 // pred_fallthru
    _

// kernel: tile.123
$region0: #{tile.123}
  #allocation0 [shape = 's32[1]{0}', space=sflag, size = 0x4, scoped, tag = 'scoped memory for tile.123']
  %s0 = inlined_call_operand.vmem [shape: f32[8], index: 0, kind: input, shape index: {}]
  %s1 = inlined_call_operand.vmem [shape: f32[9,8], index: 1, kind: output, shape index: {}]
  // Predicated region
  $region2: #{tile.123} parent=0 // pred_check
    _
  $region3: #{tile.123} parent=0 // pred_check_branch
    %3 = sbr.rel (0) target = $region5
  $region4: #{tile.123} parent=0 // pred_region
    _
  $region5: #{tile.123} parent=0 // pred_fallthru
    _
  %v4 = vld [vmem:[%s0] ss:$0 sm:$0xff]
  %5 = vst [vmem:[%s1] sm:$0xff] %v4
  %s6 = scalar_lea.vmem %s1, 8
  %7 = vst [vmem:[%s6] sm:$0xff] %v4

// kernel: mul.88
$region0: #{mul.88}
  %s0 = inlined_call_operand.vmem [shape: f32[9,8], index: 0, kind: input, shape index: {}]
  %s1 = inlined_call_operand.vmem [shape: f32[72], index: 1, kind: output, shape index: {}]
  $region1: #{mul.88} parent=0
    #allocation0 [shape = 'u8[4096]{0}', space=vmem, size = 0x1000, scoped, tag = 'scoped mem for output reshape']
    %v2 = vld [vmem:[%s0] sm:$0x1]
    %vm3 = vcmask 64512
    %4 = vst.msk [vmem:[#allocation0] sm:$0x1] %vm3, %v2
    %s5 = scalar_lea.vmem %s0, 8
    %v6 = vld [vmem:[%s5] sm:$0x1]
    %7 = vrot.lane.b32.xlu0 %v6, 64
    %v8 = vpop.permute.xlu0 %7
    %vm9 = vcmask 589312
    %10 = vst.msk [vmem:[#allocation0] sm:$0x1] %vm9, %v8
    %s11 = scalar_lea.vmem %s0, 7
    %v12 = vld [vmem:[%s11] sm:$0x1]
    %13 = vrot.lane.b32.xlu0 %v12, 56
    %v14 = vpop.permute.xlu0 %13
    %vm15 = vcmask 523712
    %16 = vst.msk [vmem:[#allocation0] sm:$0x1] %vm15, %v14
    %s17 = scalar_lea.vmem %s0, 6
    %v18 = vld [vmem:[%s17] sm:$0x1]
    %19 = vrot.lane.b32.xlu0 %v18, 48
    %v20 = vpop.permute.xlu0 %19
    %vm21 = vcmask 458112
    %22 = vst.msk [vmem:[#allocation0] sm:$0x1] %vm21, %v20
    %s23 = scalar_lea.vmem %s0, 5
    %v24 = vld [vmem:[%s23] sm:$0x1]
    %25 = vrot.lane.b32.xlu0 %v24, 40
    %v26 = vpop.permute.xlu0 %25
    %vm27 = vcmask 392512
    %28 = vst.msk [vmem:[#allocation0] sm:$0x1] %vm27, %v26
    %s29 = scalar_lea.vmem %s0, 4
    %v30 = vld [vmem:[%s29] sm:$0x1]
    %31 = vrot.lane.b32.xlu0 %v30, 32
    %v32 = vpop.permute.xlu0 %31
    %vm33 = vcmask 326912
    %34 = vst.msk [vmem:[#allocation0] sm:$0x1] %vm33, %v32
    %s35 = scalar_lea.vmem %s0, 3
    %v36 = vld [vmem:[%s35] sm:$0x1]
    %37 = vrot.lane.b32.xlu0 %v36, 24
    %v38 = vpop.permute.xlu0 %37
    %vm39 = vcmask 261312
    %40 = vst.msk [vmem:[#allocation0] sm:$0x1] %vm39, %v38
    %s41 = scalar_lea.vmem %s0, 2
    %v42 = vld [vmem:[%s41] sm:$0x1]
    %43 = vrot.lane.b32.xlu0 %v42, 16
    %v44 = vpop.permute.xlu0 %43
    %vm45 = vcmask 195712
    %46 = vst.msk [vmem:[#allocation0] sm:$0x1] %vm45, %v44
    %s47 = scalar_lea.vmem %s0, 1
    %v48 = vld [vmem:[%s47] sm:$0x1]
    %49 = vrot.lane.b32.xlu0 %v48, 8
    %v50 = vpop.permute.xlu0 %49
    %vm51 = vcmask 130112
    %52 = vst.msk [vmem:[#allocation0] sm:$0x1] %vm51, %v50
    %s54 = ssub.s32 2, 1
    %v55 = vld [vmem:[#allocation0] sm:%s54]
    %s57 = ssub.s32 2, 1
    %58 = vst [vmem:[%s1] sm:%s57] %v55

// kernel: fcn_forward.13
$region0: #{fcn_forward.13}
  #allocation0 [shape = 'u32[]', space=smem, size = 0x4, offset = 0x4, fixed_abs, tag = 'smem constant byte address 0x4 - core index']
  #allocation1 [shape = 'u32[72,128]{1,0:T(1,128)}', space=vmem, size = 0x9000, scoped, tag = 'internal scratch']
  %s0 = inlined_call_operand.vmem [shape: bf16[16,144], index: 0, kind: input, shape index: {}]
  %s1 = inlined_call_operand.vmem [shape: bf16[144,32], index: 1, kind: input, shape index: {}]
  %s2 = inlined_call_operand.vmem [shape: f32[1,32], index: 2, kind: input, shape index: {}]
  %s3 = inlined_call_operand.vmem [shape: bf16[16,32], index: 3, kind: output, shape index: {0}]
  %s4 = inlined_call_operand.vmem [shape: f32[1,2,32], index: 4, kind: output, shape index: {1}]
  %5 = xla_tuple %s3, %s4
  %s6 = sld [smem:[#allocation0]]
  $region30: #{fcn_forward.13} parent=0
    _
  %s8 = ssub.s32 1, %s6
  %s9 = scalar_select 0, %s8, %s6
  // Predicated region
  $region2: #{fcn_forward.13} parent=0 // pred_check
    _
  $region3: #{fcn_forward.13} parent=0 // pred_check_branch
    %11 = sbr.rel (0) target = $region5
  $region4: #{fcn_forward.13} parent=0 // pred_region
    _
  $region5: #{fcn_forward.13} parent=0 // pred_fallthru
    _
  // Predicated region
  $region6: #{fcn_forward.13} parent=0 // pred_check
    _
  $region7: #{fcn_forward.13} parent=0 // pred_check_branch
    %13 = sbr.rel (0) target = $region9
  $region8: #{fcn_forward.13} parent=0 // pred_region
    _
  $region9: #{fcn_forward.13} parent=0 // pred_fallthru
    _
  // Predicated region
  $region10: #{fcn_forward.13} parent=0 // pred_check
    _
  $region11: #{fcn_forward.13} parent=0 // pred_check_branch
    %15 = sbr.rel (0) target = $region13
  $region12: #{fcn_forward.13} parent=0 // pred_region
    _
  $region13: #{fcn_forward.13} parent=0 // pred_fallthru
    _
  %v17 = vld [vmem:[%s0] sm:$0xff]
  %v18 = vld [vmem:[%s0 + $0x8] sm:$0xff]
  %v19 = vld [vmem:[%s1] sm:$0xf]
  %v20 = vld [vmem:[%s1 + $0x4] sm:$0xf]
  %v21 = vld [vmem:[%s1 + $0x8] sm:$0xf]
  %v22 = vld [vmem:[%s1 + $0xc] sm:$0xf]
  %v23 = vld [vmem:[%s1 + $0x10] sm:$0xf]
  %v24 = vld [vmem:[%s1 + $0x14] sm:$0xf]
  %v25 = vld [vmem:[%s1 + $0x18] sm:$0xf]
  %v26 = vld [vmem:[%s1 + $0x1c] sm:$0xf]
  %v27 = vld [vmem:[%s1 + $0x20] sm:$0xf]
  %v28 = vld [vmem:[%s1 + $0x24] sm:$0xf]
  %v29 = vld [vmem:[%s1 + $0x28] sm:$0xf]
  %v30 = vld [vmem:[%s1 + $0x2c] sm:$0xf]
  %v31 = vld [vmem:[%s1 + $0x30] sm:$0xf]
  %v32 = vld [vmem:[%s1 + $0x34] sm:$0xf]
  %v33 = vld [vmem:[%s1 + $0x38] sm:$0xf]
  %v34 = vld [vmem:[%s1 + $0x3c] sm:$0xf]
  %v35 = vld [vmem:[%s1 + $0x40] sm:$0xf]
  %v36 = vld [vmem:[%s1 + $0x44] sm:$0xf]
  %v37 = vld [vmem:[%s2] sm:$0x1]
  %v39 = vperm.slane %v37, 0
  %v43 = vunpack.c.l.b16 %v17
  %v44 = vunpack.c.h.b16 %v17
  %v45 = vunpack.c.l.b16 %v18
  %v46 = vunpack.c.h.b16 %v18
  %v47 = vpack.c.b16 %v45, %v43
  %v48 = vpack.c.b16 %v46, %v44
  %v68 = vunpack.c.l.b16 %v19
  %v69 = vunpack.c.l.b16 %v20
  %v70 = vunpack.c.l.b16 %v21
  %v71 = vunpack.c.l.b16 %v22
  %v72 = vunpack.c.l.b16 %v23
  %v73 = vunpack.c.l.b16 %v24
  %v74 = vunpack.c.l.b16 %v25
  %v75 = vunpack.c.l.b16 %v26
  %v76 = vunpack.c.l.b16 %v27
  %v77 = vunpack.c.l.b16 %v28
  %v78 = vunpack.c.l.b16 %v29
  %v79 = vunpack.c.l.b16 %v30
  %v80 = vunpack.c.l.b16 %v31
  %v81 = vunpack.c.l.b16 %v32
  %v82 = vunpack.c.l.b16 %v33
  %v83 = vunpack.c.l.b16 %v34
  %v84 = vunpack.c.l.b16 %v35
  %v85 = vunpack.c.l.b16 %v36
  %v86 = vpack.c.b16 %v69, %v68
  %v87 = vpack.c.b16 %v71, %v70
  %v88 = vpack.c.b16 %v73, %v72
  %v89 = vpack.c.b16 %v75, %v74
  %v90 = vpack.c.b16 %v77, %v76
  %v91 = vpack.c.b16 %v79, %v78
  %v92 = vpack.c.b16 %v81, %v80
  %v93 = vpack.c.b16 %v83, %v82
  %v94 = vpack.c.b16 %v85, %v84
  %vm104 = vcmask 130048
  %v106 = vsel %vm104, %v48, 0
  %108 = vmatpush.bf16.msra.mxu0 %v93
  %109 = vmatpush.bf16.msra.mxu0 %v92
  %110 = vmatpush.bf16.msra.mxu0 %v91
  %111 = vmatpush.bf16.msra.mxu0 %v90
  %112 = vmatpush.bf16.msra.mxu0 %v89
  %113 = vmatpush.bf16.msra.mxu0 %v88
  %114 = vmatpush.bf16.msra.mxu0 %v87
  %115 = vmatpush.bf16.msra.mxu0 %v86
  %116 = vmatmul.bf16.gmra.mxu0 %v47
  %v117 = vpop.f32.mrf.mxu0
  %v118 = vadd.f32 %v39, %v117
  %v119 = vpop.f32.mrf.mxu0
  %v120 = vadd.f32 %v39, %v119
  %121 = vdwg.mxu0
  %122 = vmatpush.bf16.msra.mxu0 0
  %123 = vmatpush.bf16.msra.mxu0 0
  %124 = vmatpush.bf16.msra.mxu0 0
  %125 = vmatpush.bf16.msra.mxu0 0
  %126 = vmatpush.bf16.msra.mxu0 0
  %127 = vmatpush.bf16.msra.mxu0 0
  %128 = vmatpush.bf16.msra.mxu0 0
  %129 = vmatpush.bf16.msra.mxu0 %v94
  %130 = vmatmul.bf16.gmra.mxu0 %v106
  %v131 = vpop.f32.mrf.mxu0
  %v132 = vadd.f32 %v118, %v131
  %v133 = vpop.f32.mrf.mxu0
  %v134 = vadd.f32 %v120, %v133
  %135 = vdwg.mxu0
  %v136 = vmul.f32 %v132, 0.2
  %v137 = vmul.f32 %v134, 0.2
  %v138 = vmax.f32 %v132, %v136
  %v139 = vmax.f32 %v134, %v137
  %v140 = vpack.c.bf16 %v138, %v138
  %v141 = vpack.c.bf16 %v139, %v139
  %vm142 = vcmask 257024
  %143 = vst.msk [vmem:[%s3] sm:$0xf] %vm142, %v140
  %144 = vst.msk [vmem:[%s3 + $0x4] sm:$0xf] %vm142, %v141
  %v145 = vlaneseq
  %v146 = vshrl.u32 %v145, 7
  %v147 = vadd.s32 %v146, 8
  %s148 = smul.u32 0, 16
  %v149 = vstv %s148
  %v150 = vadd.s32 %v146, %v149
  %v151 = vadd.s32 %v147, %v149
  %vm152 = vcmp.lt.s32.totalorder %v150, 8
  %vm153 = vcmp.lt.s32.totalorder %v151, 8
  %v154 = vsel %vm152, 1, 0
  %v155 = vsel %vm153, 1, 0
  %vm156 = vcmp.eq.s32.totalorder %v154, 1
  %vm157 = vcmp.eq.s32.totalorder %v155, 1
  %v158 = vsel %vm156, %v138, 0.0
  %v159 = vsel %vm157, %v139, 0.0
  %vm160 = vcmask 261120
  %v161 = vsel %vm160, %v158, 0.0
  %v162 = vsel %vm160, %v159, 0.0
  %v163 = vadd.f32 %v161, %v162
  %v164 = vrot.slane %v163, 4
  %v165 = vadd.f32 %v163, %v164
  %v166 = vrot.slane %v165, 2
  %v167 = vadd.f32 %v165, %v166
  %v168 = vrot.slane %v167, 1
  %v169 = vadd.f32 %v167, %v168
  %v170 = vmul.f32 %v158, %v158
  %v171 = vmul.f32 %v159, %v159
  %v172 = vsel %vm160, %v170, 0.0
  %v173 = vsel %vm160, %v171, 0.0
  %v174 = vadd.f32 %v172, %v173
  %v175 = vrot.slane %v174, 4
  %v176 = vadd.f32 %v174, %v175
  %v177 = vrot.slane %v176, 2
  %v178 = vadd.f32 %v176, %v177
  %v179 = vrot.slane %v178, 1
  %v180 = vadd.f32 %v178, %v179
  %vm181 = vcmask 1040384
  %v182 = vsel %vm181, %v169, %v180
  %vm183 = vcmask 254976
  %184 = vst.msk [vmem:[%s4] sm:$0x3] %vm183, %v182
  // Predicated region
  $region14: #{fcn_forward.13} parent=0 // pred_check
    _
  $region15: #{fcn_forward.13} parent=0 // pred_check_branch
    %186 = sbr.rel (0) target = $region17
  $region16: #{fcn_forward.13} parent=0 // pred_region
    _
  $region17: #{fcn_forward.13} parent=0 // pred_fallthru
    _
  // Predicated region
  $region18: #{fcn_forward.13} parent=0 // pred_check
    _
  $region19: #{fcn_forward.13} parent=0 // pred_check_branch
    %188 = sbr.rel (0) target = $region21
  $region20: #{fcn_forward.13} parent=0 // pred_region
    _
  $region21: #{fcn_forward.13} parent=0 // pred_fallthru
    _
  // Predicated region
  $region22: #{fcn_forward.13} parent=0 // pred_check
    _
  $region23: #{fcn_forward.13} parent=0 // pred_check_branch
    %190 = sbr.rel (0) target = $region25
  $region24: #{fcn_forward.13} parent=0 // pred_region
    _
  $region25: #{fcn_forward.13} parent=0 // pred_fallthru
    _
  // Predicated region
  $region26: #{fcn_forward.13} parent=0 // pred_check
    _
  $region27: #{fcn_forward.13} parent=0 // pred_check_branch
    %192 = sbr.rel (0) target = $region29
  $region28: #{fcn_forward.13} parent=0 // pred_region
    _
  $region29: #{fcn_forward.13} parent=0 // pred_fallthru
    _

// kernel: tile.133
$region0: #{tile.133}
  #allocation0 [shape = 's32[1]{0}', space=sflag, size = 0x4, scoped, tag = 'scoped memory for tile.133']
  %s0 = inlined_call_operand.vmem [shape: f32[4], index: 0, kind: input, shape index: {}]
  %s1 = inlined_call_operand.vmem [shape: f32[9,4], index: 1, kind: output, shape index: {}]
  // Predicated region
  $region2: #{tile.133} parent=0 // pred_check
    _
  $region3: #{tile.133} parent=0 // pred_check_branch
    %3 = sbr.rel (0) target = $region5
  $region4: #{tile.133} parent=0 // pred_region
    _
  $region5: #{tile.133} parent=0 // pred_fallthru
    _
  %v4 = vld [vmem:[%s0] ss:$0 sm:$0xff]
  %5 = vst [vmem:[%s1] sm:$0xff] %v4
  %s6 = scalar_lea.vmem %s1, 8
  %7 = vst [vmem:[%s6] sm:$0xff] %v4

// kernel: mul.95
$region0: #{mul.95}
  %s0 = inlined_call_operand.vmem [shape: f32[9,4], index: 0, kind: input, shape index: {}]
  %s1 = inlined_call_operand.vmem [shape: f32[36], index: 1, kind: output, shape index: {}]
  $region1: #{mul.95} parent=0
    #allocation0 [shape = 'u8[4096]{0}', space=vmem, size = 0x1000, scoped, tag = 'scoped mem for output reshape']
    %v2 = vld [vmem:[%s0] sm:$0x1]
    %vm3 = vcmask 31744
    %4 = vst.msk [vmem:[#allocation0] sm:$0x1] %vm3, %v2
    %s5 = scalar_lea.vmem %s0, 8
    %v6 = vld [vmem:[%s5] sm:$0x1]
    %7 = vrot.lane.b32.xlu0 %v6, 32
    %v8 = vpop.permute.xlu0 %7
    %vm9 = vcmask 294144
    %10 = vst.msk [vmem:[#allocation0] sm:$0x1] %vm9, %v8
    %s11 = scalar_lea.vmem %s0, 7
    %v12 = vld [vmem:[%s11] sm:$0x1]
    %13 = vrot.lane.b32.xlu0 %v12, 28
    %v14 = vpop.permute.xlu0 %13
    %vm15 = vcmask 261344
    %16 = vst.msk [vmem:[#allocation0] sm:$0x1] %vm15, %v14
    %s17 = scalar_lea.vmem %s0, 6
    %v18 = vld [vmem:[%s17] sm:$0x1]
    %19 = vrot.lane.b32.xlu0 %v18, 24
    %v20 = vpop.permute.xlu0 %19
    %vm21 = vcmask 228544
    %22 = vst.msk [vmem:[#allocation0] sm:$0x1] %vm21, %v20
    %s23 = scalar_lea.vmem %s0, 5
    %v24 = vld [vmem:[%s23] sm:$0x1]
    %25 = vrot.lane.b32.xlu0 %v24, 20
    %v26 = vpop.permute.xlu0 %25
    %vm27 = vcmask 195744
    %28 = vst.msk [vmem:[#allocation0] sm:$0x1] %vm27, %v26
    %s29 = scalar_lea.vmem %s0, 4
    %v30 = vld [vmem:[%s29] sm:$0x1]
    %31 = vrot.lane.b32.xlu0 %v30, 16
    %v32 = vpop.permute.xlu0 %31
    %vm33 = vcmask 162944
    %34 = vst.msk [vmem:[#allocation0] sm:$0x1] %vm33, %v32
    %s35 = scalar_lea.vmem %s0, 3
    %v36 = vld [vmem:[%s35] sm:$0x1]
    %37 = vrot.lane.b32.xlu0 %v36, 12
    %v38 = vpop.permute.xlu0 %37
    %vm39 = vcmask 130144
    %40 = vst.msk [vmem:[#allocation0] sm:$0x1] %vm39, %v38
    %s41 = scalar_lea.vmem %s0, 2
    %v42 = vld [vmem:[%s41] sm:$0x1]
    %43 = vrot.lane.b32.xlu0 %v42, 8
    %v44 = vpop.permute.xlu0 %43
    %vm45 = vcmask 97344
    %46 = vst.msk [vmem:[#allocation0] sm:$0x1] %vm45, %v44
    %s47 = scalar_lea.vmem %s0, 1
    %v48 = vld [vmem:[%s47] sm:$0x1]
    %49 = vrot.lane.b32.xlu0 %v48, 4
    %v50 = vpop.permute.xlu0 %49
    %vm51 = vcmask 64544
    %52 = vst.msk [vmem:[#allocation0] sm:$0x1] %vm51, %v50
    %s54 = ssub.s32 2, 1
    %v55 = vld [vmem:[#allocation0] sm:%s54]
    %s57 = ssub.s32 2, 1
    %58 = vst [vmem:[%s1] sm:%s57] %v55

// kernel: fcn_forward.14
$region0: #{fcn_forward.14}
  #allocation0 [shape = 'u32[]', space=smem, size = 0x4, offset = 0x4, fixed_abs, tag = 'smem constant byte address 0x4 - core index']
  #allocation1 [shape = 'u32[72,128]{1,0:T(1,128)}', space=vmem, size = 0x9000, scoped, tag = 'internal scratch']
  %s0 = inlined_call_operand.vmem [shape: bf16[32,72], index: 0, kind: input, shape index: {}]
  %s1 = inlined_call_operand.vmem [shape: bf16[72,16], index: 1, kind: input, shape index: {}]
  %s2 = inlined_call_operand.vmem [shape: f32[1,16], index: 2, kind: input, shape index: {}]
  %s3 = inlined_call_operand.vmem [shape: bf16[32,16], index: 3, kind: output, shape index: {0}]
  %s4 = inlined_call_operand.vmem [shape: f32[2,2,16], index: 4, kind: output, shape index: {1}]
  %5 = xla_tuple %s3, %s4
  %s6 = sld [smem:[#allocation0]]
  $region53: #{fcn_forward.14} parent=0
    _
  %s8 = ssub.s32 1, %s6
  %s9 = scalar_select 0, %s8, %s6
  loop: start=0, step=1, limit=4
  $region2: #{fcn_forward.14} parent=0 // loop_pre_header
    _
  $region3: #{fcn_forward.14} parent=0 // loop_header
    %s11 = sphi 0, %s15
    %p12 = scmp.ge.s32.totalorder %s11, 4
    %s21 = sphi 0, %s23
    %s24 = sphi 0, %s21
    %s25 = sphi 0, %s24
    %s41 = sphi 0, %s25
    %s45 = sphi 0, %s45
    %s47 = sphi 0, %s45
    %s48 = sphi 0, %s47
    %s62 = sphi 0, %s48
    %s66 = sphi 0, %s66
    %s68 = sphi 0, %s66
    %s69 = sphi 0, %s68
    %s83 = sphi 0, %s69
    %s89 = sphi 0, %s91
    %s92 = sphi 0, %s89
    %s93 = sphi 0, %s92
    %s109 = sphi 0, %s93
    %s115 = sphi 0, %s117
    %s118 = sphi 0, %s115
    %s119 = sphi 0, %s118
    %s135 = sphi 0, %s119
  $region4: #{fcn_forward.14} parent=0 // loop_header_branch
    %14 = sbr.rel (%p12) target = $region8
  $region5: #{fcn_forward.14} parent=0 // loop_body
    %s16 = ssub.s32 %s11, 1
    %s17 = ssub.s32 %s11, 2
    %s18 = sadd.s32 %s11, 1
    %s19 = ssub.s32 %s11, %s18
    %p20 = scmp.eq.s32.totalorder %s19, 0
    %s22 = sadd.s32 %s21, 1
    %s23 = scalar_select %p20, %s21, %s22
    %p26 = pneg %p20
    %p27 = scmp.eq.s32.totalorder %s11, 1
    %p28 = por %p26, %p27
    %p29 = scmp.ne.s32.totalorder %s21, %s24
    %p30 = scmp.eq.s32.totalorder %s11, 0
    %p31 = por %p29, %p30
    %p32 = scmp.ne.s32.totalorder %s21, %s24
    %p33 = scmp.eq.s32.totalorder %s16, 1
    %p34 = por %p32, %p33
    %p35 = scmp.ne.s32.totalorder %s24, %s25
    %p36 = scmp.eq.s32.totalorder %s16, 0
    %p37 = por %p35, %p36
    %p38 = scmp.ne.s32.totalorder %s24, %s25
    %p39 = scmp.eq.s32.totalorder %s17, 1
    %p40 = por %p38, %p39
    %p42 = scmp.ne.s32.totalorder %s25, %s41
    %p43 = scmp.eq.s32.totalorder %s17, 0
    %p44 = por %p42, %p43
    %s46 = sadd.s32 %s45, 1
    %p49 = scmp.eq.s32.totalorder %s11, 1
    %p50 = scmp.ne.s32.totalorder %s45, %s47
    %p51 = scmp.eq.s32.totalorder %s11, 0
    %p52 = por %p50, %p51
    %p53 = scmp.ne.s32.totalorder %s45, %s47
    %p54 = scmp.eq.s32.totalorder %s16, 1
    %p55 = por %p53, %p54
    %p56 = scmp.ne.s32.totalorder %s47, %s48
    %p57 = scmp.eq.s32.totalorder %s16, 0
    %p58 = por %p56, %p57
    %p59 = scmp.ne.s32.totalorder %s47, %s48
    %p60 = scmp.eq.s32.totalorder %s17, 1
    %p61 = por %p59, %p60
    %p63 = scmp.ne.s32.totalorder %s48, %s62
    %p64 = scmp.eq.s32.totalorder %s17, 0
    %p65 = por %p63, %p64
    %s67 = sadd.s32 %s66, 1
    %p70 = scmp.eq.s32.totalorder %s11, 1
    %p71 = scmp.ne.s32.totalorder %s66, %s68
    %p72 = scmp.eq.s32.totalorder %s11, 0
    %p73 = por %p71, %p72
    %p74 = scmp.ne.s32.totalorder %s66, %s68
    %p75 = scmp.eq.s32.totalorder %s16, 1
    %p76 = por %p74, %p75
    %p77 = scmp.ne.s32.totalorder %s68, %s69
    %p78 = scmp.eq.s32.totalorder %s16, 0
    %p79 = por %p77, %p78
    %p80 = scmp.ne.s32.totalorder %s68, %s69
    %p81 = scmp.eq.s32.totalorder %s17, 1
    %p82 = por %p80, %p81
    %p84 = scmp.ne.s32.totalorder %s69, %s83
    %p85 = scmp.eq.s32.totalorder %s17, 0
    %p86 = por %p84, %p85
    %s87 = ssub.s32 %s11, %s18
    %p88 = scmp.eq.s32.totalorder %s87, 0
    %s90 = sadd.s32 %s89, 1
    %s91 = scalar_select %p88, %s89, %s90
    %p94 = pneg %p88
    %p95 = scmp.eq.s32.totalorder %s11, 1
    %p96 = por %p94, %p95
    %p97 = scmp.ne.s32.totalorder %s89, %s92
    %p98 = scmp.eq.s32.totalorder %s11, 0
    %p99 = por %p97, %p98
    %p100 = scmp.ne.s32.totalorder %s89, %s92
    %p101 = scmp.eq.s32.totalorder %s16, 1
    %p102 = por %p100, %p101
    %p103 = scmp.ne.s32.totalorder %s92, %s93
    %p104 = scmp.eq.s32.totalorder %s16, 0
    %p105 = por %p103, %p104
    %p106 = scmp.ne.s32.totalorder %s92, %s93
    %p107 = scmp.eq.s32.totalorder %s17, 1
    %p108 = por %p106, %p107
    %p110 = scmp.ne.s32.totalorder %s93, %s109
    %p111 = scmp.eq.s32.totalorder %s17, 0
    %p112 = por %p110, %p111
    %s113 = ssub.s32 %s11, %s18
    %p114 = scmp.eq.s32.totalorder %s113, 0
    %s116 = sadd.s32 %s115, 1
    %s117 = scalar_select %p114, %s115, %s116
    %p120 = pneg %p114
    %p121 = scmp.eq.s32.totalorder %s11, 1
    %p122 = por %p120, %p121
    %p123 = scmp.ne.s32.totalorder %s115, %s118
    %p124 = scmp.eq.s32.totalorder %s11, 0
    %p125 = por %p123, %p124
    %p126 = scmp.ne.s32.totalorder %s115, %s118
    %p127 = scmp.eq.s32.totalorder %s16, 1
    %p128 = por %p126, %p127
    %p129 = scmp.ne.s32.totalorder %s118, %s119
    %p130 = scmp.eq.s32.totalorder %s16, 0
    %p131 = por %p129, %p130
    %p132 = scmp.ne.s32.totalorder %s118, %s119
    %p133 = scmp.eq.s32.totalorder %s17, 1
    %p134 = por %p132, %p133
    %p136 = scmp.ne.s32.totalorder %s119, %s135
    %p137 = scmp.eq.s32.totalorder %s17, 0
    %p138 = por %p136, %p137
    %p139 = scmp.le.s32.totalorder 1, %s11
    %p140 = scmp.lt.s32.totalorder %s11, 3
    %p141 = pnand %p139, %p140
    %p142 = pneg %p141
    // Predicated region
    $region9: #{fcn_forward.14} parent=5 // pred_check
      _
    $region10: #{fcn_forward.14} parent=5 // pred_check_branch
      %144 = sbr.rel (%p141) target = $region12
    $region11: #{fcn_forward.14} parent=5 // pred_region
      %s145 = ssub.s32 %s11, 1
      // Predicated region
      $region13: #{fcn_forward.14} parent=11 // pred_check
        %p146 = pneg %p58
      $region14: #{fcn_forward.14} parent=11 // pred_check_branch
        %148 = sbr.rel (%p146) target = $region16
      $region15: #{fcn_forward.14} parent=11 // pred_region
        _
      $region16: #{fcn_forward.14} parent=11 // pred_fallthru
        _
      // Predicated region
      $region17: #{fcn_forward.14} parent=11 // pred_check
        %p149 = pneg %p79
      $region18: #{fcn_forward.14} parent=11 // pred_check_branch
        %151 = sbr.rel (%p149) target = $region20
      $region19: #{fcn_forward.14} parent=11 // pred_region
        _
      $region20: #{fcn_forward.14} parent=11 // pred_fallthru
        _
    $region12: #{fcn_forward.14} parent=5 // pred_fallthru
      _
    %p152 = scmp.lt.s32.totalorder %s11, 2
    // Predicated region
    $region21: #{fcn_forward.14} parent=5 // pred_check
      %p153 = pneg %p152
    $region22: #{fcn_forward.14} parent=5 // pred_check_branch
      %155 = sbr.rel (%p153) target = $region24
    $region23: #{fcn_forward.14} parent=5 // pred_region
      // Predicated region
      $region25: #{fcn_forward.14} parent=23 // pred_check
        %p156 = pneg %p31
      $region26: #{fcn_forward.14} parent=23 // pred_check_branch
        %158 = sbr.rel (%p156) target = $region28
      $region27: #{fcn_forward.14} parent=23 // pred_region
        %s159 = smul.u32 2, %s11
        %p160 = scmp.lt.s32.totalorder %s159, 3
        %s161 = scalar_select %p160, %s159, 3
        %s162 = smul.addr %s161, 4
        %s163 = scalar_lea.vmem %s0, %s162
        %s164 = smul.u32 2, %s11
      $region28: #{fcn_forward.14} parent=23 // pred_fallthru
        _
    $region24: #{fcn_forward.14} parent=5 // pred_fallthru
      _
    %p165 = scmp.le.s32.totalorder 1, %s11
    %p166 = scmp.lt.s32.totalorder %s11, 3
    %p167 = pnand %p165, %p166
    %p168 = pneg %p167
    // Predicated region
    $region29: #{fcn_forward.14} parent=5 // pred_check
      _
    $region30: #{fcn_forward.14} parent=5 // pred_check_branch
      %170 = sbr.rel (%p167) target = $region32
    $region31: #{fcn_forward.14} parent=5 // pred_region
      %s171 = ssub.s32 %s11, 1
      %s172 = smul.u32 2, %s16
      %p173 = scmp.lt.s32.totalorder %s172, 3
      %s174 = scalar_select %p173, %s172, 3
      %s175 = smul.addr %s174, 4
      %s176 = scalar_lea.vmem %s0, %s175
      %p177 = pneg %p37
      %p178 = pneg %p34
      %p179 = pneg %p58
      %p180 = pneg %p55
      %p181 = pneg %p79
      %p182 = pneg %p76
      %p183 = pneg %p105
      %p184 = pneg %p102
      %s185 = smul.u32 2, %s16
      %p186 = scmp.lt.s32.totalorder %s185, 3
      %s187 = scalar_select %p186, %s185, 3
      %s188 = smul.addr %s187, 4
      %s189 = scalar_lea.vmem %s3, %s188
      %p190 = pneg %p131
      %p191 = pneg %p128
      %p192 = scmp.lt.s32.totalorder %s16, 1
      %s193 = scalar_select %p192, %s16, 1
      %s194 = smul.addr %s193, 2
      %s195 = scalar_lea.vmem %s4, %s194
      %s196 = smul.u32 2, %s16
      %p197 = scmp.lt.s32.totalorder %s196, 3
      %s198 = scalar_select %p197, %s196, 3
      %s199 = smul.addr %s198, 4
      %s200 = scalar_lea.vmem %s0, %s199
      %s201 = smul.u32 2, %s16
      %s202 = smul.u32 2, %s16
      %p203 = scmp.lt.s32.totalorder %s202, 3
      %s204 = scalar_select %p203, %s202, 3
      %s205 = smul.addr %s204, 4
      %s206 = scalar_lea.vmem %s3, %s205
      %s207 = smul.u32 2, %s16
      %p208 = scmp.lt.s32.totalorder %s16, 1
      %s209 = scalar_select %p208, %s16, 1
      %s210 = smul.addr %s209, 2
      %s211 = scalar_lea.vmem %s4, %s210
      %v213 = vld [vmem:[%s200] sm:$0xf]
      %v214 = vld [vmem:[%s200 + $0x4] sm:$0xf]
      %v215 = vld [vmem:[%s1] sm:$0xf]
      %v216 = vld [vmem:[%s1 + $0x4] sm:$0xf]
      %v217 = vld [vmem:[%s1 + $0x8] sm:$0xf]
      %v218 = vld [vmem:[%s1 + $0xc] sm:$0xf]
      %v219 = vld [vmem:[%s1 + $0x10] sm:$0xf]
      %v220 = vld [vmem:[%s1 + $0x14] sm:$0xf]
      %v221 = vld [vmem:[%s1 + $0x18] sm:$0xf]
      %v222 = vld [vmem:[%s1 + $0x1c] sm:$0xf]
      %v223 = vld [vmem:[%s1 + $0x20] sm:$0xf]
      %v224 = vld [vmem:[%s2] sm:$0x1]
      %v226 = vperm.slane %v224, 0
      %v230 = vunpack.c.l.b16 %v213
      %v231 = vunpack.c.l.b16 %v214
      %v232 = vpack.c.b16 %v231, %v230
      %v242 = vunpack.c.l.b16 %v215
      %v243 = vunpack.c.l.b16 %v216
      %v244 = vunpack.c.l.b16 %v217
      %v245 = vunpack.c.l.b16 %v218
      %v246 = vunpack.c.l.b16 %v219
      %v247 = vunpack.c.l.b16 %v220
      %v248 = vunpack.c.l.b16 %v221
      %v249 = vunpack.c.l.b16 %v222
      %v250 = vunpack.c.l.b16 %v223
      %v251 = vpack.c.b16 %v243, %v242
      %v252 = vpack.c.b16 %v245, %v244
      %v253 = vpack.c.b16 %v247, %v246
      %v254 = vpack.c.b16 %v249, %v248
      %v255 = vpack.c.b16 %v250, %v250
      %vm260 = vcmask 588800
      %v262 = vsel %vm260, %v232, 0
      %vm264 = vcmask 1043456
      %v266 = vsel %vm264, %v255, 0
      %268 = vmatpush.bf16.msra.mxu0 0
      %269 = vmatpush.bf16.msra.mxu0 0
      %270 = vmatpush.bf16.msra.mxu0 0
      %271 = vmatpush.bf16.msra.mxu0 %v266
      %272 = vmatpush.bf16.msra.mxu0 %v254
      %273 = vmatpush.bf16.msra.mxu0 %v253
      %274 = vmatpush.bf16.msra.mxu0 %v252
      %275 = vmatpush.bf16.msra.mxu0 %v251
      %276 = vmatmul.bf16.gmra.mxu0 %v262
      %v277 = vpop.f32.mrf.mxu0
      %v278 = vadd.f32 %v226, %v277
      %v279 = vpop.f32.mrf.mxu0
      %v280 = vadd.f32 %v226, %v279
      %281 = vdwg.mxu0
      %v282 = vmul.f32 %v278, 0.2
      %v283 = vmul.f32 %v280, 0.2
      %v284 = vmax.f32 %v278, %v282
      %v285 = vmax.f32 %v280, %v283
      %v286 = vpack.c.bf16 %v284, %v284
      %v287 = vpack.c.bf16 %v285, %v285
      %vm288 = vcmask 125952
      %289 = vst.msk [vmem:[%s206] sm:$0xf] %vm288, %v286
      %290 = vst.msk [vmem:[%s206 + $0x4] sm:$0xf] %vm288, %v287
      %vm291 = vcmask 130048
      %v292 = vsel %vm291, %v284, 0.0
      %v293 = vsel %vm291, %v285, 0.0
      %v294 = vadd.f32 %v292, %v293
      %v295 = vrot.slane %v294, 4
      %v296 = vadd.f32 %v294, %v295
      %v297 = vrot.slane %v296, 2
      %v298 = vadd.f32 %v296, %v297
      %v299 = vrot.slane %v298, 1
      %v300 = vadd.f32 %v298, %v299
      %v301 = vmul.f32 %v284, %v284
      %v302 = vmul.f32 %v285, %v285
      %v303 = vsel %vm291, %v301, 0.0
      %v304 = vsel %vm291, %v302, 0.0
      %v305 = vadd.f32 %v303, %v304
      %v306 = vrot.slane %v305, 4
      %v307 = vadd.f32 %v305, %v306
      %v308 = vrot.slane %v307, 2
      %v309 = vadd.f32 %v307, %v308
      %v310 = vrot.slane %v309, 1
      %v311 = vadd.f32 %v309, %v310
      %vm312 = vcmask 1040384
      %v313 = vsel %vm312, %v300, %v311
      %vm314 = vcmask 123904
      %315 = vst.msk [vmem:[%s211] sm:$0x3] %vm314, %v313
      %s316 = smul.u32 2, %s16
      %p317 = scmp.lt.s32.totalorder %s316, 3
      %s318 = scalar_select %p317, %s316, 3
      %s319 = smul.addr %s318, 4
      %s320 = scalar_lea.vmem %s3, %s319
      %p321 = scmp.lt.s32.totalorder %s16, 1
      %s322 = scalar_select %p321, %s16, 1
      %s323 = smul.addr %s322, 2
      %s324 = scalar_lea.vmem %s4, %s323
      // Predicated region
      $region33: #{fcn_forward.14} parent=31 // pred_check
        %p325 = pneg %p102
      $region34: #{fcn_forward.14} parent=31 // pred_check_branch
        %327 = sbr.rel (%p325) target = $region36
      $region35: #{fcn_forward.14} parent=31 // pred_region
        %s328 = smul.u32 2, %s16
      $region36: #{fcn_forward.14} parent=31 // pred_fallthru
        _
      // Predicated region
      $region37: #{fcn_forward.14} parent=31 // pred_check
        %p329 = pneg %p128
      $region38: #{fcn_forward.14} parent=31 // pred_check_branch
        %331 = sbr.rel (%p329) target = $region40
      $region39: #{fcn_forward.14} parent=31 // pred_region
        _
      $region40: #{fcn_forward.14} parent=31 // pred_fallthru
        _
    $region32: #{fcn_forward.14} parent=5 // pred_fallthru
      _
    %p332 = scmp.le.s32.totalorder 2, %s11
    // Predicated region
    $region41: #{fcn_forward.14} parent=5 // pred_check
      %p333 = pneg %p332
    $region42: #{fcn_forward.14} parent=5 // pred_check_branch
      %335 = sbr.rel (%p333) target = $region44
    $region43: #{fcn_forward.14} parent=5 // pred_region
      %s336 = ssub.s32 %s11, 2
      // Predicated region
      $region45: #{fcn_forward.14} parent=43 // pred_check
        %p337 = pneg %p108
      $region46: #{fcn_forward.14} parent=43 // pred_check_branch
        %339 = sbr.rel (%p337) target = $region48
      $region47: #{fcn_forward.14} parent=43 // pred_region
        %s340 = smul.u32 2, %s17
        %p341 = scmp.lt.s32.totalorder %s340, 3
        %s342 = scalar_select %p341, %s340, 3
        %s343 = smul.addr %s342, 4
        %s344 = scalar_lea.vmem %s3, %s343
      $region48: #{fcn_forward.14} parent=43 // pred_fallthru
        _
      // Predicated region
      $region49: #{fcn_forward.14} parent=43 // pred_check
        %p345 = pneg %p134
      $region50: #{fcn_forward.14} parent=43 // pred_check_branch
        %347 = sbr.rel (%p345) target = $region52
      $region51: #{fcn_forward.14} parent=43 // pred_region
        %p348 = scmp.lt.s32.totalorder %s17, 1
        %s349 = scalar_select %p348, %s17, 1
        %s350 = smul.addr %s349, 2
        %s351 = scalar_lea.vmem %s4, %s350
      $region52: #{fcn_forward.14} parent=43 // pred_fallthru
        _
    $region44: #{fcn_forward.14} parent=5 // pred_fallthru
      _
  $region6: #{fcn_forward.14} parent=0 // loop_footer
    %s15 = sadd.s32 1, %s11
  $region7: #{fcn_forward.14} parent=0 // loop_footer_branch
    %10 = sbr.rel target = $region3
  $region8: #{fcn_forward.14} parent=0 // loop_exit
    _

// kernel: fcn_forward.15
$region0: #{fcn_forward.15}
  #allocation0 [shape = 'u32[]', space=smem, size = 0x4, offset = 0x4, fixed_abs, tag = 'smem constant byte address 0x4 - core index']
  #allocation1 [shape = 'u32[72,128]{1,0:T(1,128)}', space=vmem, size = 0x9000, scoped, tag = 'internal scratch']
  %s0 = inlined_call_operand.vmem [shape: bf16[128,36], index: 0, kind: input, shape index: {}]
  %s1 = inlined_call_operand.vmem [shape: bf16[36,4], index: 1, kind: input, shape index: {}]
  %s2 = inlined_call_operand.vmem [shape: f32[1,4], index: 2, kind: input, shape index: {}]
  %s3 = inlined_call_operand.vmem [shape: f32[128,4], index: 3, kind: output, shape index: {0}]
  %s4 = inlined_call_operand.hbm [shape: f32[2,2,4], index: 4, kind: output, shape index: {1}]
  %5 = xla_tuple %s3, %s4
  %s6 = sld [smem:[#allocation0]]
  $region53: #{fcn_forward.15} parent=0
    _
  %s8 = ssub.s32 1, %s6
  %s9 = scalar_select 0, %s8, %s6
  $region1: #{fcn_forward.15} parent=0
    #allocation2 [shape = 'u8[2048]{0}', space=vmem, size = 0x800, scoped, tag = 'output window, operand 1']
    #allocation3 [shape = 's32[2]{0}', space=sflag, size = 0x8, scoped, tag = 'scoped memory for fcn_forward.15']
    %10 = vsyncpa [#allocation3], 0
    %s11 = scalar_lea.sflag [#allocation3], 1
    %12 = vsyncpa %s11, 0
    loop: start=0, step=1, limit=4
    $region2: #{fcn_forward.15} parent=1 // loop_pre_header
      _
    $region3: #{fcn_forward.15} parent=1 // loop_header
      %s14 = sphi 0, %s18
      %p15 = scmp.ge.s32.totalorder %s14, 4
      %s24 = sphi 0, %s26
      %s27 = sphi 0, %s24
      %s28 = sphi 0, %s27
      %s44 = sphi 0, %s28
      %s48 = sphi 0, %s48
      %s50 = sphi 0, %s48
      %s51 = sphi 0, %s50
      %s65 = sphi 0, %s51
      %s69 = sphi 0, %s69
      %s71 = sphi 0, %s69
      %s72 = sphi 0, %s71
      %s86 = sphi 0, %s72
      %s92 = sphi 0, %s94
      %s95 = sphi 0, %s92
      %s96 = sphi 0, %s95
      %s112 = sphi 0, %s96
      %s118 = sphi 0, %s120
      %s121 = sphi 0, %s118
      %s122 = sphi 0, %s121
      %s138 = sphi 0, %s122
    $region4: #{fcn_forward.15} parent=1 // loop_header_branch
      %17 = sbr.rel (%p15) target = $region8
    $region5: #{fcn_forward.15} parent=1 // loop_body
      %s19 = ssub.s32 %s14, 1
      %s20 = ssub.s32 %s14, 2
      %s21 = sadd.s32 %s14, 1
      %s22 = ssub.s32 %s14, %s21
      %p23 = scmp.eq.s32.totalorder %s22, 0
      %s25 = sadd.s32 %s24, 1
      %s26 = scalar_select %p23, %s24, %s25
      %p29 = pneg %p23
      %p30 = scmp.eq.s32.totalorder %s14, 1
      %p31 = por %p29, %p30
      %p32 = scmp.ne.s32.totalorder %s24, %s27
      %p33 = scmp.eq.s32.totalorder %s14, 0
      %p34 = por %p32, %p33
      %p35 = scmp.ne.s32.totalorder %s24, %s27
      %p36 = scmp.eq.s32.totalorder %s19, 1
      %p37 = por %p35, %p36
      %p38 = scmp.ne.s32.totalorder %s27, %s28
      %p39 = scmp.eq.s32.totalorder %s19, 0
      %p40 = por %p38, %p39
      %p41 = scmp.ne.s32.totalorder %s27, %s28
      %p42 = scmp.eq.s32.totalorder %s20, 1
      %p43 = por %p41, %p42
      %p45 = scmp.ne.s32.totalorder %s28, %s44
      %p46 = scmp.eq.s32.totalorder %s20, 0
      %p47 = por %p45, %p46
      %s49 = sadd.s32 %s48, 1
      %p52 = scmp.eq.s32.totalorder %s14, 1
      %p53 = scmp.ne.s32.totalorder %s48, %s50
      %p54 = scmp.eq.s32.totalorder %s14, 0
      %p55 = por %p53, %p54
      %p56 = scmp.ne.s32.totalorder %s48, %s50
      %p57 = scmp.eq.s32.totalorder %s19, 1
      %p58 = por %p56, %p57
      %p59 = scmp.ne.s32.totalorder %s50, %s51
      %p60 = scmp.eq.s32.totalorder %s19, 0
      %p61 = por %p59, %p60
      %p62 = scmp.ne.s32.totalorder %s50, %s51
      %p63 = scmp.eq.s32.totalorder %s20, 1
      %p64 = por %p62, %p63
      %p66 = scmp.ne.s32.totalorder %s51, %s65
      %p67 = scmp.eq.s32.totalorder %s20, 0
      %p68 = por %p66, %p67
      %s70 = sadd.s32 %s69, 1
      %p73 = scmp.eq.s32.totalorder %s14, 1
      %p74 = scmp.ne.s32.totalorder %s69, %s71
      %p75 = scmp.eq.s32.totalorder %s14, 0
      %p76 = por %p74, %p75
      %p77 = scmp.ne.s32.totalorder %s69, %s71
      %p78 = scmp.eq.s32.totalorder %s19, 1
      %p79 = por %p77, %p78
      %p80 = scmp.ne.s32.totalorder %s71, %s72
      %p81 = scmp.eq.s32.totalorder %s19, 0
      %p82 = por %p80, %p81
      %p83 = scmp.ne.s32.totalorder %s71, %s72
      %p84 = scmp.eq.s32.totalorder %s20, 1
      %p85 = por %p83, %p84
      %p87 = scmp.ne.s32.totalorder %s72, %s86
      %p88 = scmp.eq.s32.totalorder %s20, 0
      %p89 = por %p87, %p88
      %s90 = ssub.s32 %s14, %s21
      %p91 = scmp.eq.s32.totalorder %s90, 0
      %s93 = sadd.s32 %s92, 1
      %s94 = scalar_select %p91, %s92, %s93
      %p97 = pneg %p91
      %p98 = scmp.eq.s32.totalorder %s14, 1
      %p99 = por %p97, %p98
      %p100 = scmp.ne.s32.totalorder %s92, %s95
      %p101 = scmp.eq.s32.totalorder %s14, 0
      %p102 = por %p100, %p101
      %p103 = scmp.ne.s32.totalorder %s92, %s95
      %p104 = scmp.eq.s32.totalorder %s19, 1
      %p105 = por %p103, %p104
      %p106 = scmp.ne.s32.totalorder %s95, %s96
      %p107 = scmp.eq.s32.totalorder %s19, 0
      %p108 = por %p106, %p107
      %p109 = scmp.ne.s32.totalorder %s95, %s96
      %p110 = scmp.eq.s32.totalorder %s20, 1
      %p111 = por %p109, %p110
      %p113 = scmp.ne.s32.totalorder %s96, %s112
      %p114 = scmp.eq.s32.totalorder %s20, 0
      %p115 = por %p113, %p114
      %s116 = ssub.s32 %s14, %s21
      %p117 = scmp.eq.s32.totalorder %s116, 0
      %s119 = sadd.s32 %s118, 1
      %s120 = scalar_select %p117, %s118, %s119
      %p123 = pneg %p117
      %p124 = scmp.eq.s32.totalorder %s14, 1
      %p125 = por %p123, %p124
      %p126 = scmp.ne.s32.totalorder %s118, %s121
      %p127 = scmp.eq.s32.totalorder %s14, 0
      %p128 = por %p126, %p127
      %p129 = scmp.ne.s32.totalorder %s118, %s121
      %p130 = scmp.eq.s32.totalorder %s19, 1
      %p131 = por %p129, %p130
      %p132 = scmp.ne.s32.totalorder %s121, %s122
      %p133 = scmp.eq.s32.totalorder %s19, 0
      %p134 = por %p132, %p133
      %p135 = scmp.ne.s32.totalorder %s121, %s122
      %p136 = scmp.eq.s32.totalorder %s20, 1
      %p137 = por %p135, %p136
      %p139 = scmp.ne.s32.totalorder %s122, %s138
      %p140 = scmp.eq.s32.totalorder %s20, 0
      %p141 = por %p139, %p140
      %p142 = scmp.le.s32.totalorder 1, %s14
      %p143 = scmp.lt.s32.totalorder %s14, 3
      %p144 = pnand %p142, %p143
      %p145 = pneg %p144
      // Predicated region
      $region9: #{fcn_forward.15} parent=5 // pred_check
        _
      $region10: #{fcn_forward.15} parent=5 // pred_check_branch
        %147 = sbr.rel (%p144) target = $region12
      $region11: #{fcn_forward.15} parent=5 // pred_region
        %s148 = ssub.s32 %s14, 1
        // Predicated region
        $region13: #{fcn_forward.15} parent=11 // pred_check
          %p149 = pneg %p61
        $region14: #{fcn_forward.15} parent=11 // pred_check_branch
          %151 = sbr.rel (%p149) target = $region16
        $region15: #{fcn_forward.15} parent=11 // pred_region
          _
        $region16: #{fcn_forward.15} parent=11 // pred_fallthru
          _
        // Predicated region
        $region17: #{fcn_forward.15} parent=11 // pred_check
          %p152 = pneg %p82
        $region18: #{fcn_forward.15} parent=11 // pred_check_branch
          %154 = sbr.rel (%p152) target = $region20
        $region19: #{fcn_forward.15} parent=11 // pred_region
          _
        $region20: #{fcn_forward.15} parent=11 // pred_fallthru
          _
      $region12: #{fcn_forward.15} parent=5 // pred_fallthru
        _
      %p155 = scmp.lt.s32.totalorder %s14, 2
      // Predicated region
      $region21: #{fcn_forward.15} parent=5 // pred_check
        %p156 = pneg %p155
      $region22: #{fcn_forward.15} parent=5 // pred_check_branch
        %158 = sbr.rel (%p156) target = $region24
      $region23: #{fcn_forward.15} parent=5 // pred_region
        // Predicated region
        $region25: #{fcn_forward.15} parent=23 // pred_check
          %p159 = pneg %p34
        $region26: #{fcn_forward.15} parent=23 // pred_check_branch
          %161 = sbr.rel (%p159) target = $region28
        $region27: #{fcn_forward.15} parent=23 // pred_region
          %s162 = smul.u32 8, %s14
          %p163 = scmp.lt.s32.totalorder %s162, 15
          %s164 = scalar_select %p163, %s162, 15
          %s165 = smul.addr %s164, 4
          %s166 = scalar_lea.vmem %s0, %s165
          %s167 = smul.u32 8, %s14
        $region28: #{fcn_forward.15} parent=23 // pred_fallthru
          _
      $region24: #{fcn_forward.15} parent=5 // pred_fallthru
        _
      %p168 = scmp.le.s32.totalorder 1, %s14
      %p169 = scmp.lt.s32.totalorder %s14, 3
      %p170 = pnand %p168, %p169
      %p171 = pneg %p170
      // Predicated region
      $region29: #{fcn_forward.15} parent=5 // pred_check
        _
      $region30: #{fcn_forward.15} parent=5 // pred_check_branch
        %173 = sbr.rel (%p170) target = $region32
      $region31: #{fcn_forward.15} parent=5 // pred_region
        %s174 = ssub.s32 %s14, 1
        %s175 = smul.u32 8, %s19
        %p176 = scmp.lt.s32.totalorder %s175, 15
        %s177 = scalar_select %p176, %s175, 15
        %s178 = smul.addr %s177, 4
        %s179 = scalar_lea.vmem %s0, %s178
        %p180 = pneg %p40
        %p181 = pneg %p37
        %p182 = pneg %p61
        %p183 = pneg %p58
        %p184 = pneg %p82
        %p185 = pneg %p79
        %p186 = pneg %p108
        %p187 = pneg %p105
        %s188 = smul.u32 8, %s19
        %p189 = scmp.lt.s32.totalorder %s188, 15
        %s190 = scalar_select %p189, %s188, 15
        %s191 = smul.addr %s190, 8
        %s192 = scalar_lea.vmem %s3, %s191
        %p193 = pneg %p134
        %p194 = pneg %p131
        %s195 = sand.u32 %s121, 1
        %s196 = scalar_lea.sflag [#allocation3], %s195
        %s197 = sand.u32 %s121, 1
        %s198 = smul.addr %s197, 2
        %s199 = scalar_lea.vmem [#allocation2], %s198
        %s200 = smul.u32 8, %s19
        %p201 = scmp.lt.s32.totalorder %s200, 15
        %s202 = scalar_select %p201, %s200, 15
        %s203 = smul.addr %s202, 4
        %s204 = scalar_lea.vmem %s0, %s203
        %s205 = smul.u32 8, %s19
        %s206 = smul.u32 8, %s19
        %p207 = scmp.lt.s32.totalorder %s206, 15
        %s208 = scalar_select %p207, %s206, 15
        %s209 = smul.addr %s208, 8
        %s210 = scalar_lea.vmem %s3, %s209
        %s211 = smul.u32 8, %s19
        %v213 = vld [vmem:[%s204] sm:$0xf]
        %v214 = vld [vmem:[%s204 + $0x4] sm:$0xf]
        %v215 = vld [vmem:[%s204 + $0x8] sm:$0xf]
        %v216 = vld [vmem:[%s204 + $0xc] sm:$0xf]
        %v217 = vld [vmem:[%s204 + $0x10] sm:$0xf]
        %v218 = vld [vmem:[%s204 + $0x14] sm:$0xf]
        %v219 = vld [vmem:[%s204 + $0x18] sm:$0xf]
        %v220 = vld [vmem:[%s204 + $0x1c] sm:$0xf]
        %v221 = vld [vmem:[%s1] sm:$0xf]
        %v222 = vld [vmem:[%s1 + $0x4] sm:$0xf]
        %v223 = vld [vmem:[%s1 + $0x8] sm:$0xf]
        %v224 = vld [vmem:[%s1 + $0xc] sm:$0xf]
        %v225 = vld [vmem:[%s1 + $0x10] sm:$0x3]
        %v226 = vld [vmem:[%s2] sm:$0x1]
        %v228 = vperm.slane %v226, 0
        %v238 = vunpack.c.l.b16 %v213
        %v239 = vunpack.c.l.b16 %v214
        %v240 = vunpack.c.l.b16 %v215
        %v241 = vunpack.c.l.b16 %v216
        %v242 = vunpack.c.l.b16 %v217
        %v243 = vunpack.c.l.b16 %v218
        %v244 = vunpack.c.l.b16 %v219
        %v245 = vunpack.c.l.b16 %v220
        %v246 = vpack.c.b16 %v239, %v238
        %v247 = vpack.c.b16 %v241, %v240
        %v248 = vpack.c.b16 %v243, %v242
        %v249 = vpack.c.b16 %v245, %v244
        %v255 = vunpack.c.l.b16 %v221
        %v256 = vunpack.c.l.b16 %v222
        %v257 = vunpack.c.l.b16 %v223
        %v258 = vunpack.c.l.b16 %v224
        %v259 = vunpack.c.l.b16 %v225
        %v260 = vpack.c.b16 %v256, %v255
        %v261 = vpack.c.b16 %v258, %v257
        %v262 = vpack.c.b16 %v259, %v259
        %vm265 = vcmask 293888
        %v267 = vsel %vm265, %v246, 0
        %v270 = vsel %vm265, %v247, 0
        %v273 = vsel %vm265, %v248, 0
        %v276 = vsel %vm265, %v249, 0
        %vm278 = vcmask 1041408
        %v280 = vsel %vm278, %v262, 0
        %282 = vmatpush.bf16.msra.mxu0 0
        %283 = vmatpush.bf16.msra.mxu0 0
        %284 = vmatpush.bf16.msra.mxu0 0
        %285 = vmatpush.bf16.msra.mxu0 0
        %286 = vmatpush.bf16.msra.mxu0 0
        %287 = vmatpush.bf16.msra.mxu0 %v280
        %288 = vmatpush.bf16.msra.mxu0 %v261
        %289 = vmatpush.bf16.msra.mxu0 %v260
        %290 = vmatmul.bf16.gmra.mxu0 %v267
        %v291 = vpop.f32.mrf.mxu0
        %v292 = vadd.f32 %v228, %v291
        %v293 = vpop.f32.mrf.mxu0
        %v294 = vadd.f32 %v228, %v293
        %295 = vmatmul.bf16.gmra.mxu0 %v270
        %v296 = vpop.f32.mrf.mxu0
        %v297 = vadd.f32 %v228, %v296
        %v298 = vpop.f32.mrf.mxu0
        %v299 = vadd.f32 %v228, %v298
        %300 = vmatmul.bf16.gmra.mxu0 %v273
        %v301 = vpop.f32.mrf.mxu0
        %v302 = vadd.f32 %v228, %v301
        %v303 = vpop.f32.mrf.mxu0
        %v304 = vadd.f32 %v228, %v303
        %305 = vmatmul.bf16.gmra.mxu0 %v276
        %v306 = vpop.f32.mrf.mxu0
        %v307 = vadd.f32 %v228, %v306
        %v308 = vpop.f32.mrf.mxu0
        %v309 = vadd.f32 %v228, %v308
        %310 = vdwg.mxu0
        %v311 = vmul.f32 %v292, 0.2
        %v312 = vmul.f32 %v294, 0.2
        %v313 = vmul.f32 %v297, 0.2
        %v314 = vmul.f32 %v299, 0.2
        %v315 = vmul.f32 %v302, 0.2
        %v316 = vmul.f32 %v304, 0.2
        %v317 = vmul.f32 %v307, 0.2
        %v318 = vmul.f32 %v309, 0.2
        %v319 = vmax.f32 %v292, %v311
        %v320 = vmax.f32 %v294, %v312
        %v321 = vmax.f32 %v297, %v313
        %v322 = vmax.f32 %v299, %v314
        %v323 = vmax.f32 %v302, %v315
        %v324 = vmax.f32 %v304, %v316
        %v325 = vmax.f32 %v307, %v317
        %v326 = vmax.f32 %v309, %v318
        %vm327 = vcmask 31744
        %328 = vst.msk [vmem:[%s210] sm:$0xff] %vm327, %v319
        %329 = vst.msk [vmem:[%s210 + $0x8] sm:$0xff] %vm327, %v320
        %330 = vst.msk [vmem:[%s210 + $0x10] sm:$0xff] %vm327, %v321
        %331 = vst.msk [vmem:[%s210 + $0x18] sm:$0xff] %vm327, %v322
        %332 = vst.msk [vmem:[%s210 + $0x20] sm:$0xff] %vm327, %v323
        %333 = vst.msk [vmem:[%s210 + $0x28] sm:$0xff] %vm327, %v324
        %334 = vst.msk [vmem:[%s210 + $0x30] sm:$0xff] %vm327, %v325
        %335 = vst.msk [vmem:[%s210 + $0x38] sm:$0xff] %vm327, %v326
        %v336 = vsel %vm327, %v319, 0.0
        %v337 = vsel %vm327, %v320, 0.0
        %v338 = vadd.f32 %v336, %v337
        %v339 = vsel %vm327, %v321, 0.0
        %v340 = vadd.f32 %v338, %v339
        %v341 = vsel %vm327, %v322, 0.0
        %v342 = vadd.f32 %v340, %v341
        %v343 = vsel %vm327, %v323, 0.0
        %v344 = vadd.f32 %v342, %v343
        %v345 = vsel %vm327, %v324, 0.0
        %v346 = vadd.f32 %v344, %v345
        %v347 = vsel %vm327, %v325, 0.0
        %v348 = vadd.f32 %v346, %v347
        %v349 = vsel %vm327, %v326, 0.0
        %v350 = vadd.f32 %v348, %v349
        %v351 = vrot.slane %v350, 4
        %v352 = vadd.f32 %v350, %v351
        %v353 = vrot.slane %v352, 2
        %v354 = vadd.f32 %v352, %v353
        %v355 = vrot.slane %v354, 1
        %v356 = vadd.f32 %v354, %v355
        %v357 = vmul.f32 %v319, %v319
        %v358 = vmul.f32 %v320, %v320
        %v359 = vmul.f32 %v321, %v321
        %v360 = vmul.f32 %v322, %v322
        %v361 = vmul.f32 %v323, %v323
        %v362 = vmul.f32 %v324, %v324
        %v363 = vmul.f32 %v325, %v325
        %v364 = vmul.f32 %v326, %v326
        %v365 = vsel %vm327, %v357, 0.0
        %v366 = vsel %vm327, %v358, 0.0
        %v367 = vadd.f32 %v365, %v366
        %v368 = vsel %vm327, %v359, 0.0
        %v369 = vadd.f32 %v367, %v368
        %v370 = vsel %vm327, %v360, 0.0
        %v371 = vadd.f32 %v369, %v370
        %v372 = vsel %vm327, %v361, 0.0
        %v373 = vadd.f32 %v371, %v372
        %v374 = vsel %vm327, %v362, 0.0
        %v375 = vadd.f32 %v373, %v374
        %v376 = vsel %vm327, %v363, 0.0
        %v377 = vadd.f32 %v375, %v376
        %v378 = vsel %vm327, %v364, 0.0
        %v379 = vadd.f32 %v377, %v378
        %v380 = vrot.slane %v379, 4
        %v381 = vadd.f32 %v379, %v380
        %v382 = vrot.slane %v381, 2
        %v383 = vadd.f32 %v381, %v382
        %v384 = vrot.slane %v383, 1
        %v385 = vadd.f32 %v383, %v384
        %vm386 = vcmask 1040384
        %v387 = vsel %vm386, %v356, %v385
        %vm388 = vcmask 25600
        %389 = vst.msk [vmem:[%s199] sm:$0x3] %vm388, %v387
        %s390 = smul.u32 8, %s19
        %p391 = scmp.lt.s32.totalorder %s390, 15
        %s392 = scalar_select %p391, %s390, 15
        %s393 = smul.addr %s392, 8
        %s394 = scalar_lea.vmem %s3, %s393
        %s395 = sand.u32 %s121, 1
        %s396 = scalar_lea.sflag [#allocation3], %s395
        %s397 = sand.u32 %s121, 1
        %s398 = smul.addr %s397, 2
        %s399 = scalar_lea.vmem [#allocation2], %s398
        // Predicated region
        $region33: #{fcn_forward.15} parent=31 // pred_check
          %p400 = pneg %p105
        $region34: #{fcn_forward.15} parent=31 // pred_check_branch
          %402 = sbr.rel (%p400) target = $region36
        $region35: #{fcn_forward.15} parent=31 // pred_region
          %s403 = smul.u32 8, %s19
        $region36: #{fcn_forward.15} parent=31 // pred_fallthru
          _
        // Predicated region
        $region37: #{fcn_forward.15} parent=31 // pred_check
          %p404 = pneg %p131
        $region38: #{fcn_forward.15} parent=31 // pred_check_branch
          %406 = sbr.rel (%p404) target = $region40
        $region39: #{fcn_forward.15} parent=31 // pred_region
          %408 = vsyncadd %s396, 0
          %s409 = smul.addr %s19, 2
          %s410 = scalar_lea.hbm %s4, %s409
          %s412 = sshll.u32 %s399, 4
          %s413 = int_to_ptr.vmem [resolvable:$true] %s412
          %s414 = sshll.u32 %s410, 4
          %s415 = int_to_ptr.hbm [resolvable:$true] %s414
          %417 = dma.vmem_to_hbm [thread:$0]  %s413, 32, %s415, %s396
        $region40: #{fcn_forward.15} parent=31 // pred_fallthru
          _
      $region32: #{fcn_forward.15} parent=5 // pred_fallthru
        _
      %p418 = scmp.le.s32.totalorder 2, %s14
      // Predicated region
      $region41: #{fcn_forward.15} parent=5 // pred_check
        %p419 = pneg %p418
      $region42: #{fcn_forward.15} parent=5 // pred_check_branch
        %421 = sbr.rel (%p419) target = $region44
      $region43: #{fcn_forward.15} parent=5 // pred_region
        %s422 = ssub.s32 %s14, 2
        // Predicated region
        $region45: #{fcn_forward.15} parent=43 // pred_check
          %p423 = pneg %p111
        $region46: #{fcn_forward.15} parent=43 // pred_check_branch
          %425 = sbr.rel (%p423) target = $region48
        $region47: #{fcn_forward.15} parent=43 // pred_region
          %s426 = smul.u32 8, %s20
          %p427 = scmp.lt.s32.totalorder %s426, 15
          %s428 = scalar_select %p427, %s426, 15
          %s429 = smul.addr %s428, 8
          %s430 = scalar_lea.vmem %s3, %s429
        $region48: #{fcn_forward.15} parent=43 // pred_fallthru
          _
        // Predicated region
        $region49: #{fcn_forward.15} parent=43 // pred_check
          %p431 = pneg %p137
        $region50: #{fcn_forward.15} parent=43 // pred_check_branch
          %433 = sbr.rel (%p431) target = $region52
        $region51: #{fcn_forward.15} parent=43 // pred_region
          %s434 = sand.u32 %s122, 1
          %s435 = scalar_lea.sflag [#allocation3], %s434
          %s436 = sand.u32 %s122, 1
          %s437 = smul.addr %s436, 2
          %s438 = scalar_lea.vmem [#allocation2], %s437
          %440 = dma.done %s435, 32
        $region52: #{fcn_forward.15} parent=43 // pred_fallthru
          _
      $region44: #{fcn_forward.15} parent=5 // pred_fallthru
        _
    $region6: #{fcn_forward.15} parent=1 // loop_footer
      %s18 = sadd.s32 1, %s14
    $region7: #{fcn_forward.15} parent=1 // loop_footer_branch
      %13 = sbr.rel target = $region3
    $region8: #{fcn_forward.15} parent=1 // loop_exit
      _
    %441 = vsyncpa [#allocation3], 1
    %s442 = scalar_lea.sflag [#allocation3], 1
    %443 = vsyncpa %s442, 1

</llo_original>
